<compile_context>
chip_gen: v6e
topology: v6e:2x2x1
jax: 0.10.0
libtpu: 0.0.40
codegen_flags: <defaults>
</compile_context>

<pallas_src>
import math

import jax
import jax.numpy as jnp
from jax import lax
from jax.experimental import pallas as pl
from jax.experimental.pallas import tpu as pltpu

# ----------------------------- configuration --------------------------------
B = 2          # batch
S = 8          # sequence length
D_MODEL = 32   # d_model
N_HEADS = 4
D_HEAD = D_MODEL // N_HEADS    # 8 == f32 sublane tile
D_INNER = 64   # FFN hidden size
N_LAYERS = 2
VOCAB = 128
EPS = 1e-6
NEG_INF = -1e9


# ----------------------------- kernel helpers --------------------------------
def _layernorm(v, g, b):
    mu = jnp.mean(v, axis=-1, keepdims=True)
    var = jnp.mean((v - mu) ** 2, axis=-1, keepdims=True)
    return (v - mu) * lax.rsqrt(var + EPS) * g + b


# ----------------------------- fused forward kernel --------------------------
def encoder_fused_kernel(tok_ref, mask_ref, emb_ref, pos_ref,
                         wqkvt_ref, bqkv_ref, wo_ref,
                         w1_ref, b1_ref, w2_ref,
                         pvec_ref, norm_gb_ref, o_ref):
    """Full encoder forward for ONE sequence (grid=(B,), "parallel").

    tok_ref   : (S, 1)       i32  token ids
    mask_ref  : (1, S)       i32  key-padding mask (1 = pad)
    emb_ref   : (V, D)       f32  embedding table (VMEM-resident)
    pos_ref   : (S, D)       f32  positional encodings
    wqkvt_ref : (L, 3D, D)   f32  fused Q|K|V projection, TRANSPOSED
    bqkv_ref  : (L, 3D, 1)   f32  fused Q|K|V bias (column)
    wo_ref    : (L, D, D)    f32  attention output projection
    w1_ref    : (L, D, DI)   f32  FFN expand
    b1_ref    : (L, 1, DI)   f32
    w2_ref    : (L, DI, D)   f32  FFN contract
    pvec_ref  : (L, 8, D)    f32  rows: ln1_g, ln1_b, ln2_g, ln2_b, bo, b2, pad, pad
    norm_gb   : (2, D)       f32  final LayerNorm gain / bias
    o_ref     : (S, D)       f32
    """
    # ---- in-kernel embedding gather (one-hot matmul, no HBM gather op) ----
    onehot = (lax.broadcasted_iota(jnp.int32, (S, VOCAB), 1)
              == tok_ref[...]).astype(jnp.float32)                      # (S, V)
    emb = jnp.dot(onehot, emb_ref[...], preferred_element_type=jnp.float32)
    # embedding scale + positional encoding (dropout = identity in eval mode)
    x = emb * jnp.float32(math.sqrt(D_MODEL)) + pos_ref[...]            # (S, D)

    # additive key-padding mask, built once, reused by every layer / head
    kmask = jnp.where(mask_ref[...] != 0,
                      jnp.float32(NEG_INF), jnp.float32(0.0))           # (1, S)

    scale = jnp.float32(1.0 / math.sqrt(D_HEAD))

    for l in range(N_LAYERS):                      # static unroll, weights resident
        pv = pvec_ref[l]                           # (8, D)
        ln1_g, ln1_b = pv[0:1, :], pv[1:2, :]
        ln2_g, ln2_b = pv[2:3, :], pv[3:4, :]
        bo, b2 = pv[4:5, :], pv[5:6, :]

        # ---- multi-head self-attention (pre-norm) ----
        xn = _layernorm(x, ln1_g, ln1_b)                                # (S, D)
        # transposed QKV: every head is a sublane-aligned 8-row slice
        qkv_t = lax.dot_general(wqkvt_ref[l], xn,
                                (((1,), (1,)), ((), ())),
                                preferred_element_type=jnp.float32)     # (3D, S)
        qkv_t = qkv_t + bqkv_ref[l]                                     # lane-broadcast bias
        q3 = qkv_t[0:D_MODEL].reshape(N_HEADS, D_HEAD, S)
        k3 = qkv_t[D_MODEL:2 * D_MODEL].reshape(N_HEADS, D_HEAD, S)
        v3 = qkv_t[2 * D_MODEL:3 * D_MODEL].reshape(N_HEADS, D_HEAD, S)

        # all heads batched: one score matmul + one softmax pass per layer
        s = jnp.einsum('hdq,hdk->hqk', q3, k3,
                       preferred_element_type=jnp.float32) * scale      # (H, S, S)
        s = s + kmask                                                   # pad keys -> -1e9
        s = s - jnp.max(s, axis=-1, keepdims=True)
        p = jnp.exp(s)
        p = p / jnp.sum(p, axis=-1, keepdims=True)                      # exact softmax

        ctx_t = jnp.einsum('hdk,hqk->hdq', v3, p,
                           preferred_element_type=jnp.float32)          # (H, DH, S)
        ctx_t = ctx_t.reshape(D_MODEL, S)
        # single fused Wo projection for all heads (contract over dim 0 of both)
        attn = lax.dot_general(ctx_t, wo_ref[l],
                               (((0,), (0,)), ((), ())),
                               preferred_element_type=jnp.float32)      # (S, D)
        x = x + attn + bo                          # Sum() residual (+ Wo bias)

        # ---- position-wise feed-forward (pre-norm, ReLU) ----
        yn = _layernorm(x, ln2_g, ln2_b)
        h1 = jnp.dot(yn, w1_ref[l], preferred_element_type=jnp.float32) + b1_ref[l]
        h1 = jnp.maximum(h1, 0.0)
        ffn = jnp.dot(h1, w2_ref[l], preferred_element_type=jnp.float32) + b2
        x = x + ffn                                # Sum() residual

    # final LayerNorm
    g = norm_gb_ref[0:1, :]
    b = norm_gb_ref[1:2, :]
    o_ref[...] = _layernorm(x, g, b).astype(o_ref.dtype)


# ----------------------------- wrapper ---------------------------------------
@jax.jit
def encoder_forward(tokens, key_padding_mask, params):
    """tokens: int32 [B, S]; key_padding_mask: bool [B, S] (True = pad)."""
    tok = tokens.reshape(B, S, 1).astype(jnp.int32)
    kpm = key_padding_mask.reshape(B, 1, S).astype(jnp.int32)
    w = params

    in_specs = [
        pl.BlockSpec((None, S, 1), lambda b: (b, 0, 0)),                 # tokens
        pl.BlockSpec((None, 1, S), lambda b: (b, 0, 0)),                 # pad mask
        pl.BlockSpec((VOCAB, D_MODEL), lambda b: (0, 0)),                # emb table
        pl.BlockSpec((S, D_MODEL), lambda b: (0, 0)),                    # pos enc
        pl.BlockSpec((N_LAYERS, 3 * D_MODEL, D_MODEL), lambda b: (0, 0, 0)),
        pl.BlockSpec((N_LAYERS, 3 * D_MODEL, 1), lambda b: (0, 0, 0)),
        pl.BlockSpec((N_LAYERS, D_MODEL, D_MODEL), lambda b: (0, 0, 0)),
        pl.BlockSpec((N_LAYERS, D_MODEL, D_INNER), lambda b: (0, 0, 0)),
        pl.BlockSpec((N_LAYERS, 1, D_INNER), lambda b: (0, 0, 0)),
        pl.BlockSpec((N_LAYERS, D_INNER, D_MODEL), lambda b: (0, 0, 0)),
        pl.BlockSpec((N_LAYERS, 8, D_MODEL), lambda b: (0, 0, 0)),
        pl.BlockSpec((2, D_MODEL), lambda b: (0, 0)),
    ]

    x = pl.pallas_call(
        encoder_fused_kernel,
        out_shape=jax.ShapeDtypeStruct((B, S, D_MODEL), jnp.float32),
        grid=(B,),
        in_specs=in_specs,
        out_specs=pl.BlockSpec((None, S, D_MODEL), lambda b: (b, 0, 0)),
        compiler_params=pltpu.CompilerParams(
            dimension_semantics=("parallel",)),
    )(tok, kpm, w["emb_table"], w["pos_enc"], w["wqkv_t"], w["bqkv"],
      w["wo"], w["w1"], w["b1"], w["w2"], w["pvec"], w["norm_gb"])

    # Match the PyTorch return signature:
    # (encoder_sequences, (t_mu, t_logvar), (q_mus, q_logvars),
    #  (k_mus, k_logvars), (v_mus, v_logvars), gating_variances)
    none_pair = (None, None)
    return x, none_pair, none_pair, none_pair, none_pair, []


# ----------------------------- param init ------------------------------------
def sinusoidal_positional_encoding(max_len, d_model):
    pos = jnp.arange(max_len, dtype=jnp.float32)[:, None]
    i = jnp.arange(d_model, dtype=jnp.float32)[None, :]
    angle = pos / jnp.power(10000.0, (2.0 * jnp.floor(i / 2.0)) / d_model)
    pe = jnp.where((jnp.arange(d_model) % 2) == 0, jnp.sin(angle), jnp.cos(angle))
    return pe.astype(jnp.float32)                                        # (S, D)


def init_params(key):
    keys = jax.random.split(key, 1 + N_LAYERS)
    wqkv_t, bqkv, wo, w1, b1, w2, pvec = [], [], [], [], [], [], []
    for li in range(N_LAYERS):
        lk = jax.random.split(keys[1 + li], 6)
        wq = 0.05 * jax.random.normal(lk[0], (D_MODEL, D_MODEL), jnp.float32)
        wk = 0.05 * jax.random.normal(lk[1], (D_MODEL, D_MODEL), jnp.float32)
        wv = 0.05 * jax.random.normal(lk[2], (D_MODEL, D_MODEL), jnp.float32)
        # fused & transposed so heads are sublane-aligned slices in-kernel
        wqkv_t.append(jnp.concatenate([wq, wk, wv], axis=1).T)          # (3D, D)
        bqkv.append(jnp.zeros((3 * D_MODEL, 1), jnp.float32))
        wo.append(0.05 * jax.random.normal(lk[3], (D_MODEL, D_MODEL), jnp.float32))
        w1.append(0.05 * jax.random.normal(lk[4], (D_MODEL, D_INNER), jnp.float32))
        b1.append(jnp.zeros((1, D_INNER), jnp.float32))
        w2.append(0.05 * jax.random.normal(lk[5], (D_INNER, D_MODEL), jnp.float32))
        # packed per-layer vectors: ln1_g, ln1_b, ln2_g, ln2_b, bo, b2, pad, pad
        pv = jnp.zeros((8, D_MODEL), jnp.float32)
        pv = pv.at[0].set(1.0).at[2].set(1.0)
        pvec.append(pv)

    return {
        "emb_table": 0.02 * jax.random.normal(keys[0], (VOCAB, D_MODEL), jnp.float32),
        "pos_enc": sinusoidal_positional_encoding(S, D_MODEL),
        "wqkv_t": jnp.stack(wqkv_t), "bqkv": jnp.stack(bqkv), "wo": jnp.stack(wo),
        "w1": jnp.stack(w1), "b1": jnp.stack(b1), "w2": jnp.stack(w2),
        "pvec": jnp.stack(pvec),
        "norm_gb": jnp.stack([jnp.ones((D_MODEL,), jnp.float32),
                              jnp.zeros((D_MODEL,), jnp.float32)], axis=0),
    }


# ----------------------------- main -------------------------------------------
if __name__ == "__main__":
    key = jax.random.PRNGKey(0)
    pkey, tkey = jax.random.split(key)
    params = init_params(pkey)

    tokens = jax.random.randint(tkey, (B, S), 0, VOCAB, dtype=jnp.int32)
    # last two positions of the second sequence are padding
    key_padding_mask = jnp.zeros((B, S), dtype=bool).at[1, -2:].set(True)

    out, t_pair, q_pair, k_pair, v_pair, gating = encoder_forward(
        tokens, key_padding_mask, params)
    jax.block_until_ready(out)

    assert out.shape == (B, S, D_MODEL)
    assert bool(jnp.all(jnp.isfinite(out)))
    print("KERNEL_OK")
</pallas_src>

<mosaic_0001>
module attributes {stable_mosaic.version = 11 : i64} {
  func.func @encoder_fused_kernel(%arg0: i32, %arg1: memref<1x8x1xi32, #tpu.memory_space<vmem>>, %arg2: memref<1x1x8xi32, #tpu.memory_space<vmem>>, %arg3: memref<128x32xf32, #tpu.memory_space<vmem>>, %arg4: memref<8x32xf32, #tpu.memory_space<vmem>>, %arg5: memref<2x96x32xf32, #tpu.memory_space<vmem>>, %arg6: memref<2x96x1xf32, #tpu.memory_space<vmem>>, %arg7: memref<2x32x32xf32, #tpu.memory_space<vmem>>, %arg8: memref<2x32x64xf32, #tpu.memory_space<vmem>>, %arg9: memref<2x1x64xf32, #tpu.memory_space<vmem>>, %arg10: memref<2x64x32xf32, #tpu.memory_space<vmem>>, %arg11: memref<2x8x32xf32, #tpu.memory_space<vmem>>, %arg12: memref<2x32xf32, #tpu.memory_space<vmem>>, %arg13: memref<1x8x32xf32, #tpu.memory_space<vmem>>) attributes {dimension_semantics = [#tpu.dimension_semantics<parallel>], iteration_bounds = array<i64: 2>, scalar_prefetch = 0 : i64, scratch_operands = 0 : i64, tpu.core_type = #tpu.core_type<tc>, window_params = [{transform_indices = @transform_0, window_bounds = array<i64: 1, 8, 1>}, {transform_indices = @transform_1, window_bounds = array<i64: 1, 1, 8>}, {pipeline_mode = #tpu.pipeline_mode<synchronous>, transform_indices = @transform_2, window_bounds = array<i64: 128, 32>}, {pipeline_mode = #tpu.pipeline_mode<synchronous>, transform_indices = @transform_3, window_bounds = array<i64: 8, 32>}, {pipeline_mode = #tpu.pipeline_mode<synchronous>, transform_indices = @transform_4, window_bounds = array<i64: 2, 96, 32>}, {pipeline_mode = #tpu.pipeline_mode<synchronous>, transform_indices = @transform_5, window_bounds = array<i64: 2, 96, 1>}, {pipeline_mode = #tpu.pipeline_mode<synchronous>, transform_indices = @transform_6, window_bounds = array<i64: 2, 32, 32>}, {pipeline_mode = #tpu.pipeline_mode<synchronous>, transform_indices = @transform_7, window_bounds = array<i64: 2, 32, 64>}, {pipeline_mode = #tpu.pipeline_mode<synchronous>, transform_indices = @transform_8, window_bounds = array<i64: 2, 1, 64>}, {pipeline_mode = #tpu.pipeline_mode<synchronous>, transform_indices = @transform_9, window_bounds = array<i64: 2, 64, 32>}, {pipeline_mode = #tpu.pipeline_mode<synchronous>, transform_indices = @transform_10, window_bounds = array<i64: 2, 8, 32>}, {pipeline_mode = #tpu.pipeline_mode<synchronous>, transform_indices = @transform_11, window_bounds = array<i64: 2, 32>}, {transform_indices = @transform_12, window_bounds = array<i64: 1, 8, 32>}]} {
    %0 = tpu.iota {dimensions = array<i32: 1>} : vector<8x128xi32>
    %c0 = arith.constant 0 : index
    %c0_0 = arith.constant 0 : index
    %c0_1 = arith.constant 0 : index
    %1 = vector.load %arg1[%c0, %c0_0, %c0_1] : memref<1x8x1xi32, #tpu.memory_space<vmem>>, vector<1x8x1xi32>
    %2 = vector.shape_cast %1 : vector<1x8x1xi32> to vector<8x1xi32>
    %3 = vector.broadcast %2 : vector<8x1xi32> to vector<8x128xi32>
    %4 = arith.cmpi eq, %0, %3 : vector<8x128xi32>
    %5 = arith.extui %4 : vector<8x128xi1> to vector<8x128xi32>
    %6 = arith.sitofp %5 : vector<8x128xi32> to vector<8x128xf32>
    %c0_2 = arith.constant 0 : index
    %c0_3 = arith.constant 0 : index
    %7 = vector.load %arg3[%c0_2, %c0_3] : memref<128x32xf32, #tpu.memory_space<vmem>>, vector<128x32xf32>
    %cst = arith.constant dense<0.000000e+00> : vector<8x32xf32>
    %8 = tpu.matmul %6, %7, %cst {dimension_numbers = #tpu.dot_dimension_numbers<[1], [0], [0], [1], [0, 0, 1, 1], [], []>} : vector<8x128xf32>, vector<128x32xf32>, vector<8x32xf32> -> vector<8x32xf32>
    %cst_4 = arith.constant 5.65685415 : f32
    %9 = vector.broadcast %cst_4 : f32 to vector<8x32xf32>
    %10 = arith.mulf %8, %9 : vector<8x32xf32>
    %c0_5 = arith.constant 0 : index
    %c0_6 = arith.constant 0 : index
    %11 = vector.load %arg4[%c0_5, %c0_6] : memref<8x32xf32, #tpu.memory_space<vmem>>, vector<8x32xf32>
    %12 = arith.addf %10, %11 : vector<8x32xf32>
    %c0_7 = arith.constant 0 : index
    %c0_8 = arith.constant 0 : index
    %c0_9 = arith.constant 0 : index
    %13 = vector.load %arg2[%c0_7, %c0_8, %c0_9] : memref<1x1x8xi32, #tpu.memory_space<vmem>>, vector<1x1x8xi32>
    %14 = vector.shape_cast %13 : vector<1x1x8xi32> to vector<1x8xi32>
    %c0_i32 = arith.constant 0 : i32
    %15 = vector.broadcast %c0_i32 : i32 to vector<1x8xi32>
    %16 = arith.cmpi ne, %14, %15 : vector<1x8xi32>
    %cst_10 = arith.constant -1.000000e+09 : f32
    %cst_11 = arith.constant 0.000000e+00 : f32
    %17 = vector.broadcast %cst_10 : f32 to vector<1x8xf32>
    %18 = vector.broadcast %cst_11 : f32 to vector<1x8xf32>
    %19 = arith.select %16, %17, %18 : vector<1x8xi1>, vector<1x8xf32>
    %c0_12 = arith.constant 0 : index
    %c0_13 = arith.constant 0 : index
    %c0_14 = arith.constant 0 : index
    %20 = vector.load %arg11[%c0_12, %c0_13, %c0_14] : memref<2x8x32xf32, #tpu.memory_space<vmem>>, vector<1x8x32xf32>
    %21 = vector.shape_cast %20 : vector<1x8x32xf32> to vector<8x32xf32>
    %22 = vector.extract_strided_slice %21 {offsets = [0, 0], sizes = [1, 32], strides = [1, 1]} : vector<8x32xf32> to vector<1x32xf32>
    %23 = vector.extract_strided_slice %21 {offsets = [1, 0], sizes = [1, 32], strides = [1, 1]} : vector<8x32xf32> to vector<1x32xf32>
    %24 = vector.extract_strided_slice %21 {offsets = [2, 0], sizes = [1, 32], strides = [1, 1]} : vector<8x32xf32> to vector<1x32xf32>
    %25 = vector.extract_strided_slice %21 {offsets = [3, 0], sizes = [1, 32], strides = [1, 1]} : vector<8x32xf32> to vector<1x32xf32>
    %26 = vector.extract_strided_slice %21 {offsets = [4, 0], sizes = [1, 32], strides = [1, 1]} : vector<8x32xf32> to vector<1x32xf32>
    %27 = vector.extract_strided_slice %21 {offsets = [5, 0], sizes = [1, 32], strides = [1, 1]} : vector<8x32xf32> to vector<1x32xf32>
    %cst_15 = arith.constant dense<0.000000e+00> : vector<8xf32>
    %28 = vector.multi_reduction <add>, %12, %cst_15 [1] : vector<8x32xf32> to vector<8xf32>
    %29 = vector.shape_cast %28 : vector<8xf32> to vector<8x1xf32>
    %cst_16 = arith.constant 3.200000e+01 : f32
    %30 = vector.broadcast %cst_16 : f32 to vector<8x1xf32>
    %31 = arith.divf %29, %30 : vector<8x1xf32>
    %32 = vector.broadcast %31 : vector<8x1xf32> to vector<8x32xf32>
    %33 = arith.subf %12, %32 : vector<8x32xf32>
    %34 = arith.mulf %33, %33 : vector<8x32xf32>
    %cst_17 = arith.constant dense<0.000000e+00> : vector<8xf32>
    %35 = vector.multi_reduction <add>, %34, %cst_17 [1] : vector<8x32xf32> to vector<8xf32>
    %36 = vector.shape_cast %35 : vector<8xf32> to vector<8x1xf32>
    %cst_18 = arith.constant 3.200000e+01 : f32
    %37 = vector.broadcast %cst_18 : f32 to vector<8x1xf32>
    %38 = arith.divf %36, %37 : vector<8x1xf32>
    %39 = vector.broadcast %31 : vector<8x1xf32> to vector<8x32xf32>
    %40 = arith.subf %12, %39 : vector<8x32xf32>
    %cst_19 = arith.constant 9.99999997E-7 : f32
    %41 = vector.broadcast %cst_19 : f32 to vector<8x1xf32>
    %42 = arith.addf %38, %41 : vector<8x1xf32>
    %43 = math.rsqrt %42 : vector<8x1xf32>
    %44 = vector.broadcast %43 : vector<8x1xf32> to vector<8x32xf32>
    %45 = arith.mulf %40, %44 : vector<8x32xf32>
    %46 = vector.broadcast %22 : vector<1x32xf32> to vector<8x32xf32>
    %47 = arith.mulf %45, %46 : vector<8x32xf32>
    %48 = vector.broadcast %23 : vector<1x32xf32> to vector<8x32xf32>
    %49 = arith.addf %47, %48 : vector<8x32xf32>
    %c0_20 = arith.constant 0 : index
    %c0_21 = arith.constant 0 : index
    %c0_22 = arith.constant 0 : index
    %50 = vector.load %arg5[%c0_20, %c0_21, %c0_22] : memref<2x96x32xf32, #tpu.memory_space<vmem>>, vector<1x96x32xf32>
    %51 = vector.shape_cast %50 : vector<1x96x32xf32> to vector<96x32xf32>
    %cst_23 = arith.constant dense<0.000000e+00> : vector<96x8xf32>
    %52 = tpu.matmul %51, %49, %cst_23 {dimension_numbers = #tpu.dot_dimension_numbers<[1], [1], [0], [0], [0, 0, 1, 0], [], []>} : vector<96x32xf32>, vector<8x32xf32>, vector<96x8xf32> -> vector<96x8xf32>
    %c0_24 = arith.constant 0 : index
    %c0_25 = arith.constant 0 : index
    %c0_26 = arith.constant 0 : index
    %53 = vector.load %arg6[%c0_24, %c0_25, %c0_26] : memref<2x96x1xf32, #tpu.memory_space<vmem>>, vector<1x96x1xf32>
    %54 = vector.shape_cast %53 : vector<1x96x1xf32> to vector<96x1xf32>
    %55 = vector.broadcast %54 : vector<96x1xf32> to vector<96x8xf32>
    %56 = arith.addf %52, %55 : vector<96x8xf32>
    %57 = vector.extract_strided_slice %56 {offsets = [0, 0], sizes = [32, 8], strides = [1, 1]} : vector<96x8xf32> to vector<32x8xf32>
    %58 = vector.shape_cast %57 : vector<32x8xf32> to vector<4x8x8xf32>
    %59 = vector.extract_strided_slice %56 {offsets = [32, 0], sizes = [32, 8], strides = [1, 1]} : vector<96x8xf32> to vector<32x8xf32>
    %60 = vector.shape_cast %59 : vector<32x8xf32> to vector<4x8x8xf32>
    %61 = vector.extract_strided_slice %56 {offsets = [64, 0], sizes = [32, 8], strides = [1, 1]} : vector<96x8xf32> to vector<32x8xf32>
    %62 = vector.shape_cast %61 : vector<32x8xf32> to vector<4x8x8xf32>
    "tpu.trace_start"() <{level = 10 : i32, message = "hdq,hdk->hqk"}> : () -> ()
    %cst_27 = arith.constant dense<0.000000e+00> : vector<4x8x8xf32>
    %63 = tpu.matmul %58, %60, %cst_27 {dimension_numbers = #tpu.dot_dimension_numbers<[1], [1], [2], [2], [0, 0, 0, 2, 1, 2], [0], [0]>} : vector<4x8x8xf32>, vector<4x8x8xf32>, vector<4x8x8xf32> -> vector<4x8x8xf32>
    "tpu.trace_stop"() : () -> ()
    %cst_28 = arith.constant 0.353553385 : f32
    %64 = vector.broadcast %cst_28 : f32 to vector<4x8x8xf32>
    %65 = arith.mulf %63, %64 : vector<4x8x8xf32>
    %66 = vector.shape_cast %19 : vector<1x8xf32> to vector<1x1x8xf32>
    %67 = vector.broadcast %66 : vector<1x1x8xf32> to vector<4x8x8xf32>
    %68 = arith.addf %65, %67 : vector<4x8x8xf32>
    %cst_29 = arith.constant dense<0xFF800000> : vector<4x8xf32>
    %69 = vector.multi_reduction <maximumf>, %68, %cst_29 [2] : vector<4x8x8xf32> to vector<4x8xf32>
    %70 = vector.shape_cast %69 : vector<4x8xf32> to vector<4x8x1xf32>
    %71 = vector.broadcast %70 : vector<4x8x1xf32> to vector<4x8x8xf32>
    %72 = arith.subf %68, %71 : vector<4x8x8xf32>
    %73 = math.exp %72 : vector<4x8x8xf32>
    %cst_30 = arith.constant dense<0.000000e+00> : vector<4x8xf32>
    %74 = vector.multi_reduction <add>, %73, %cst_30 [2] : vector<4x8x8xf32> to vector<4x8xf32>
    %75 = vector.shape_cast %74 : vector<4x8xf32> to vector<4x8x1xf32>
    %76 = vector.broadcast %75 : vector<4x8x1xf32> to vector<4x8x8xf32>
    %77 = arith.divf %73, %76 : vector<4x8x8xf32>
    "tpu.trace_start"() <{level = 10 : i32, message = "hdk,hqk->hdq"}> : () -> ()
    %cst_31 = arith.constant dense<0.000000e+00> : vector<4x8x8xf32>
    %78 = tpu.matmul %62, %77, %cst_31 {dimension_numbers = #tpu.dot_dimension_numbers<[2], [2], [1], [1], [0, 0, 0, 1, 1, 1], [0], [0]>} : vector<4x8x8xf32>, vector<4x8x8xf32>, vector<4x8x8xf32> -> vector<4x8x8xf32>
    "tpu.trace_stop"() : () -> ()
    %79 = vector.shape_cast %78 : vector<4x8x8xf32> to vector<32x8xf32>
    %c0_32 = arith.constant 0 : index
    %c0_33 = arith.constant 0 : index
    %c0_34 = arith.constant 0 : index
    %80 = vector.load %arg7[%c0_32, %c0_33, %c0_34] : memref<2x32x32xf32, #tpu.memory_space<vmem>>, vector<1x32x32xf32>
    %81 = vector.shape_cast %80 : vector<1x32x32xf32> to vector<32x32xf32>
    %cst_35 = arith.constant dense<0.000000e+00> : vector<8x32xf32>
    %82 = tpu.matmul %79, %81, %cst_35 {dimension_numbers = #tpu.dot_dimension_numbers<[0], [0], [1], [1], [0, 1, 1, 1], [], []>} : vector<32x8xf32>, vector<32x32xf32>, vector<8x32xf32> -> vector<8x32xf32>
    %83 = arith.addf %12, %82 : vector<8x32xf32>
    %84 = vector.broadcast %26 : vector<1x32xf32> to vector<8x32xf32>
    %85 = arith.addf %83, %84 : vector<8x32xf32>
    %cst_36 = arith.constant dense<0.000000e+00> : vector<8xf32>
    %86 = vector.multi_reduction <add>, %85, %cst_36 [1] : vector<8x32xf32> to vector<8xf32>
    %87 = vector.shape_cast %86 : vector<8xf32> to vector<8x1xf32>
    %cst_37 = arith.constant 3.200000e+01 : f32
    %88 = vector.broadcast %cst_37 : f32 to vector<8x1xf32>
    %89 = arith.divf %87, %88 : vector<8x1xf32>
    %90 = vector.broadcast %89 : vector<8x1xf32> to vector<8x32xf32>
    %91 = arith.subf %85, %90 : vector<8x32xf32>
    %92 = arith.mulf %91, %91 : vector<8x32xf32>
    %cst_38 = arith.constant dense<0.000000e+00> : vector<8xf32>
    %93 = vector.multi_reduction <add>, %92, %cst_38 [1] : vector<8x32xf32> to vector<8xf32>
    %94 = vector.shape_cast %93 : vector<8xf32> to vector<8x1xf32>
    %cst_39 = arith.constant 3.200000e+01 : f32
    %95 = vector.broadcast %cst_39 : f32 to vector<8x1xf32>
    %96 = arith.divf %94, %95 : vector<8x1xf32>
    %97 = vector.broadcast %89 : vector<8x1xf32> to vector<8x32xf32>
    %98 = arith.subf %85, %97 : vector<8x32xf32>
    %cst_40 = arith.constant 9.99999997E-7 : f32
    %99 = vector.broadcast %cst_40 : f32 to vector<8x1xf32>
    %100 = arith.addf %96, %99 : vector<8x1xf32>
    %101 = math.rsqrt %100 : vector<8x1xf32>
    %102 = vector.broadcast %101 : vector<8x1xf32> to vector<8x32xf32>
    %103 = arith.mulf %98, %102 : vector<8x32xf32>
    %104 = vector.broadcast %24 : vector<1x32xf32> to vector<8x32xf32>
    %105 = arith.mulf %103, %104 : vector<8x32xf32>
    %106 = vector.broadcast %25 : vector<1x32xf32> to vector<8x32xf32>
    %107 = arith.addf %105, %106 : vector<8x32xf32>
    %c0_41 = arith.constant 0 : index
    %c0_42 = arith.constant 0 : index
    %c0_43 = arith.constant 0 : index
    %108 = vector.load %arg8[%c0_41, %c0_42, %c0_43] : memref<2x32x64xf32, #tpu.memory_space<vmem>>, vector<1x32x64xf32>
    %109 = vector.shape_cast %108 : vector<1x32x64xf32> to vector<32x64xf32>
    %cst_44 = arith.constant dense<0.000000e+00> : vector<8x64xf32>
    %110 = tpu.matmul %107, %109, %cst_44 {dimension_numbers = #tpu.dot_dimension_numbers<[1], [0], [0], [1], [0, 0, 1, 1], [], []>} : vector<8x32xf32>, vector<32x64xf32>, vector<8x64xf32> -> vector<8x64xf32>
    %c0_45 = arith.constant 0 : index
    %c0_46 = arith.constant 0 : index
    %c0_47 = arith.constant 0 : index
    %111 = vector.load %arg9[%c0_45, %c0_46, %c0_47] : memref<2x1x64xf32, #tpu.memory_space<vmem>>, vector<1x1x64xf32>
    %112 = vector.shape_cast %111 : vector<1x1x64xf32> to vector<1x64xf32>
    %113 = vector.broadcast %112 : vector<1x64xf32> to vector<8x64xf32>
    %114 = arith.addf %110, %113 : vector<8x64xf32>
    %cst_48 = arith.constant 0.000000e+00 : f32
    %115 = vector.broadcast %cst_48 : f32 to vector<8x64xf32>
    %116 = arith.maximumf %114, %115 : vector<8x64xf32>
    %c0_49 = arith.constant 0 : index
    %c0_50 = arith.constant 0 : index
    %c0_51 = arith.constant 0 : index
    %117 = vector.load %arg10[%c0_49, %c0_50, %c0_51] : memref<2x64x32xf32, #tpu.memory_space<vmem>>, vector<1x64x32xf32>
    %118 = vector.shape_cast %117 : vector<1x64x32xf32> to vector<64x32xf32>
    %cst_52 = arith.constant dense<0.000000e+00> : vector<8x32xf32>
    %119 = tpu.matmul %116, %118, %cst_52 {dimension_numbers = #tpu.dot_dimension_numbers<[1], [0], [0], [1], [0, 0, 1, 1], [], []>} : vector<8x64xf32>, vector<64x32xf32>, vector<8x32xf32> -> vector<8x32xf32>
    %120 = vector.broadcast %27 : vector<1x32xf32> to vector<8x32xf32>
    %121 = arith.addf %119, %120 : vector<8x32xf32>
    %122 = arith.addf %85, %121 : vector<8x32xf32>
    %c1 = arith.constant 1 : index
    %c0_53 = arith.constant 0 : index
    %c0_54 = arith.constant 0 : index
    %123 = vector.load %arg11[%c1, %c0_53, %c0_54] : memref<2x8x32xf32, #tpu.memory_space<vmem>>, vector<1x8x32xf32>
    %124 = vector.shape_cast %123 : vector<1x8x32xf32> to vector<8x32xf32>
    %125 = vector.extract_strided_slice %124 {offsets = [0, 0], sizes = [1, 32], strides = [1, 1]} : vector<8x32xf32> to vector<1x32xf32>
    %126 = vector.extract_strided_slice %124 {offsets = [1, 0], sizes = [1, 32], strides = [1, 1]} : vector<8x32xf32> to vector<1x32xf32>
    %127 = vector.extract_strided_slice %124 {offsets = [2, 0], sizes = [1, 32], strides = [1, 1]} : vector<8x32xf32> to vector<1x32xf32>
    %128 = vector.extract_strided_slice %124 {offsets = [3, 0], sizes = [1, 32], strides = [1, 1]} : vector<8x32xf32> to vector<1x32xf32>
    %129 = vector.extract_strided_slice %124 {offsets = [4, 0], sizes = [1, 32], strides = [1, 1]} : vector<8x32xf32> to vector<1x32xf32>
    %130 = vector.extract_strided_slice %124 {offsets = [5, 0], sizes = [1, 32], strides = [1, 1]} : vector<8x32xf32> to vector<1x32xf32>
    %cst_55 = arith.constant dense<0.000000e+00> : vector<8xf32>
    %131 = vector.multi_reduction <add>, %122, %cst_55 [1] : vector<8x32xf32> to vector<8xf32>
    %132 = vector.shape_cast %131 : vector<8xf32> to vector<8x1xf32>
    %cst_56 = arith.constant 3.200000e+01 : f32
    %133 = vector.broadcast %cst_56 : f32 to vector<8x1xf32>
    %134 = arith.divf %132, %133 : vector<8x1xf32>
    %135 = vector.broadcast %134 : vector<8x1xf32> to vector<8x32xf32>
    %136 = arith.subf %122, %135 : vector<8x32xf32>
    %137 = arith.mulf %136, %136 : vector<8x32xf32>
    %cst_57 = arith.constant dense<0.000000e+00> : vector<8xf32>
    %138 = vector.multi_reduction <add>, %137, %cst_57 [1] : vector<8x32xf32> to vector<8xf32>
    %139 = vector.shape_cast %138 : vector<8xf32> to vector<8x1xf32>
    %cst_58 = arith.constant 3.200000e+01 : f32
    %140 = vector.broadcast %cst_58 : f32 to vector<8x1xf32>
    %141 = arith.divf %139, %140 : vector<8x1xf32>
    %142 = vector.broadcast %134 : vector<8x1xf32> to vector<8x32xf32>
    %143 = arith.subf %122, %142 : vector<8x32xf32>
    %cst_59 = arith.constant 9.99999997E-7 : f32
    %144 = vector.broadcast %cst_59 : f32 to vector<8x1xf32>
    %145 = arith.addf %141, %144 : vector<8x1xf32>
    %146 = math.rsqrt %145 : vector<8x1xf32>
    %147 = vector.broadcast %146 : vector<8x1xf32> to vector<8x32xf32>
    %148 = arith.mulf %143, %147 : vector<8x32xf32>
    %149 = vector.broadcast %125 : vector<1x32xf32> to vector<8x32xf32>
    %150 = arith.mulf %148, %149 : vector<8x32xf32>
    %151 = vector.broadcast %126 : vector<1x32xf32> to vector<8x32xf32>
    %152 = arith.addf %150, %151 : vector<8x32xf32>
    %c1_60 = arith.constant 1 : index
    %c0_61 = arith.constant 0 : index
    %c0_62 = arith.constant 0 : index
    %153 = vector.load %arg5[%c1_60, %c0_61, %c0_62] : memref<2x96x32xf32, #tpu.memory_space<vmem>>, vector<1x96x32xf32>
    %154 = vector.shape_cast %153 : vector<1x96x32xf32> to vector<96x32xf32>
    %cst_63 = arith.constant dense<0.000000e+00> : vector<96x8xf32>
    %155 = tpu.matmul %154, %152, %cst_63 {dimension_numbers = #tpu.dot_dimension_numbers<[1], [1], [0], [0], [0, 0, 1, 0], [], []>} : vector<96x32xf32>, vector<8x32xf32>, vector<96x8xf32> -> vector<96x8xf32>
    %c1_64 = arith.constant 1 : index
    %c0_65 = arith.constant 0 : index
    %c0_66 = arith.constant 0 : index
    %156 = vector.load %arg6[%c1_64, %c0_65, %c0_66] : memref<2x96x1xf32, #tpu.memory_space<vmem>>, vector<1x96x1xf32>
    %157 = vector.shape_cast %156 : vector<1x96x1xf32> to vector<96x1xf32>
    %158 = vector.broadcast %157 : vector<96x1xf32> to vector<96x8xf32>
    %159 = arith.addf %155, %158 : vector<96x8xf32>
    %160 = vector.extract_strided_slice %159 {offsets = [0, 0], sizes = [32, 8], strides = [1, 1]} : vector<96x8xf32> to vector<32x8xf32>
    %161 = vector.shape_cast %160 : vector<32x8xf32> to vector<4x8x8xf32>
    %162 = vector.extract_strided_slice %159 {offsets = [32, 0], sizes = [32, 8], strides = [1, 1]} : vector<96x8xf32> to vector<32x8xf32>
    %163 = vector.shape_cast %162 : vector<32x8xf32> to vector<4x8x8xf32>
    %164 = vector.extract_strided_slice %159 {offsets = [64, 0], sizes = [32, 8], strides = [1, 1]} : vector<96x8xf32> to vector<32x8xf32>
    %165 = vector.shape_cast %164 : vector<32x8xf32> to vector<4x8x8xf32>
    "tpu.trace_start"() <{level = 10 : i32, message = "hdq,hdk->hqk"}> : () -> ()
    %cst_67 = arith.constant dense<0.000000e+00> : vector<4x8x8xf32>
    %166 = tpu.matmul %161, %163, %cst_67 {dimension_numbers = #tpu.dot_dimension_numbers<[1], [1], [2], [2], [0, 0, 0, 2, 1, 2], [0], [0]>} : vector<4x8x8xf32>, vector<4x8x8xf32>, vector<4x8x8xf32> -> vector<4x8x8xf32>
    "tpu.trace_stop"() : () -> ()
    %cst_68 = arith.constant 0.353553385 : f32
    %167 = vector.broadcast %cst_68 : f32 to vector<4x8x8xf32>
    %168 = arith.mulf %166, %167 : vector<4x8x8xf32>
    %169 = vector.shape_cast %19 : vector<1x8xf32> to vector<1x1x8xf32>
    %170 = vector.broadcast %169 : vector<1x1x8xf32> to vector<4x8x8xf32>
    %171 = arith.addf %168, %170 : vector<4x8x8xf32>
    %cst_69 = arith.constant dense<0xFF800000> : vector<4x8xf32>
    %172 = vector.multi_reduction <maximumf>, %171, %cst_69 [2] : vector<4x8x8xf32> to vector<4x8xf32>
    %173 = vector.shape_cast %172 : vector<4x8xf32> to vector<4x8x1xf32>
    %174 = vector.broadcast %173 : vector<4x8x1xf32> to vector<4x8x8xf32>
    %175 = arith.subf %171, %174 : vector<4x8x8xf32>
    %176 = math.exp %175 : vector<4x8x8xf32>
    %cst_70 = arith.constant dense<0.000000e+00> : vector<4x8xf32>
    %177 = vector.multi_reduction <add>, %176, %cst_70 [2] : vector<4x8x8xf32> to vector<4x8xf32>
    %178 = vector.shape_cast %177 : vector<4x8xf32> to vector<4x8x1xf32>
    %179 = vector.broadcast %178 : vector<4x8x1xf32> to vector<4x8x8xf32>
    %180 = arith.divf %176, %179 : vector<4x8x8xf32>
    "tpu.trace_start"() <{level = 10 : i32, message = "hdk,hqk->hdq"}> : () -> ()
    %cst_71 = arith.constant dense<0.000000e+00> : vector<4x8x8xf32>
    %181 = tpu.matmul %165, %180, %cst_71 {dimension_numbers = #tpu.dot_dimension_numbers<[2], [2], [1], [1], [0, 0, 0, 1, 1, 1], [0], [0]>} : vector<4x8x8xf32>, vector<4x8x8xf32>, vector<4x8x8xf32> -> vector<4x8x8xf32>
    "tpu.trace_stop"() : () -> ()
    %182 = vector.shape_cast %181 : vector<4x8x8xf32> to vector<32x8xf32>
    %c1_72 = arith.constant 1 : index
    %c0_73 = arith.constant 0 : index
    %c0_74 = arith.constant 0 : index
    %183 = vector.load %arg7[%c1_72, %c0_73, %c0_74] : memref<2x32x32xf32, #tpu.memory_space<vmem>>, vector<1x32x32xf32>
    %184 = vector.shape_cast %183 : vector<1x32x32xf32> to vector<32x32xf32>
    %cst_75 = arith.constant dense<0.000000e+00> : vector<8x32xf32>
    %185 = tpu.matmul %182, %184, %cst_75 {dimension_numbers = #tpu.dot_dimension_numbers<[0], [0], [1], [1], [0, 1, 1, 1], [], []>} : vector<32x8xf32>, vector<32x32xf32>, vector<8x32xf32> -> vector<8x32xf32>
    %186 = arith.addf %122, %185 : vector<8x32xf32>
    %187 = vector.broadcast %129 : vector<1x32xf32> to vector<8x32xf32>
    %188 = arith.addf %186, %187 : vector<8x32xf32>
    %cst_76 = arith.constant dense<0.000000e+00> : vector<8xf32>
    %189 = vector.multi_reduction <add>, %188, %cst_76 [1] : vector<8x32xf32> to vector<8xf32>
    %190 = vector.shape_cast %189 : vector<8xf32> to vector<8x1xf32>
    %cst_77 = arith.constant 3.200000e+01 : f32
    %191 = vector.broadcast %cst_77 : f32 to vector<8x1xf32>
    %192 = arith.divf %190, %191 : vector<8x1xf32>
    %193 = vector.broadcast %192 : vector<8x1xf32> to vector<8x32xf32>
    %194 = arith.subf %188, %193 : vector<8x32xf32>
    %195 = arith.mulf %194, %194 : vector<8x32xf32>
    %cst_78 = arith.constant dense<0.000000e+00> : vector<8xf32>
    %196 = vector.multi_reduction <add>, %195, %cst_78 [1] : vector<8x32xf32> to vector<8xf32>
    %197 = vector.shape_cast %196 : vector<8xf32> to vector<8x1xf32>
    %cst_79 = arith.constant 3.200000e+01 : f32
    %198 = vector.broadcast %cst_79 : f32 to vector<8x1xf32>
    %199 = arith.divf %197, %198 : vector<8x1xf32>
    %200 = vector.broadcast %192 : vector<8x1xf32> to vector<8x32xf32>
    %201 = arith.subf %188, %200 : vector<8x32xf32>
    %cst_80 = arith.constant 9.99999997E-7 : f32
    %202 = vector.broadcast %cst_80 : f32 to vector<8x1xf32>
    %203 = arith.addf %199, %202 : vector<8x1xf32>
    %204 = math.rsqrt %203 : vector<8x1xf32>
    %205 = vector.broadcast %204 : vector<8x1xf32> to vector<8x32xf32>
    %206 = arith.mulf %201, %205 : vector<8x32xf32>
    %207 = vector.broadcast %127 : vector<1x32xf32> to vector<8x32xf32>
    %208 = arith.mulf %206, %207 : vector<8x32xf32>
    %209 = vector.broadcast %128 : vector<1x32xf32> to vector<8x32xf32>
    %210 = arith.addf %208, %209 : vector<8x32xf32>
    %c1_81 = arith.constant 1 : index
    %c0_82 = arith.constant 0 : index
    %c0_83 = arith.constant 0 : index
    %211 = vector.load %arg8[%c1_81, %c0_82, %c0_83] : memref<2x32x64xf32, #tpu.memory_space<vmem>>, vector<1x32x64xf32>
    %212 = vector.shape_cast %211 : vector<1x32x64xf32> to vector<32x64xf32>
    %cst_84 = arith.constant dense<0.000000e+00> : vector<8x64xf32>
    %213 = tpu.matmul %210, %212, %cst_84 {dimension_numbers = #tpu.dot_dimension_numbers<[1], [0], [0], [1], [0, 0, 1, 1], [], []>} : vector<8x32xf32>, vector<32x64xf32>, vector<8x64xf32> -> vector<8x64xf32>
    %c1_85 = arith.constant 1 : index
    %c0_86 = arith.constant 0 : index
    %c0_87 = arith.constant 0 : index
    %214 = vector.load %arg9[%c1_85, %c0_86, %c0_87] : memref<2x1x64xf32, #tpu.memory_space<vmem>>, vector<1x1x64xf32>
    %215 = vector.shape_cast %214 : vector<1x1x64xf32> to vector<1x64xf32>
    %216 = vector.broadcast %215 : vector<1x64xf32> to vector<8x64xf32>
    %217 = arith.addf %213, %216 : vector<8x64xf32>
    %cst_88 = arith.constant 0.000000e+00 : f32
    %218 = vector.broadcast %cst_88 : f32 to vector<8x64xf32>
    %219 = arith.maximumf %217, %218 : vector<8x64xf32>
    %c1_89 = arith.constant 1 : index
    %c0_90 = arith.constant 0 : index
    %c0_91 = arith.constant 0 : index
    %220 = vector.load %arg10[%c1_89, %c0_90, %c0_91] : memref<2x64x32xf32, #tpu.memory_space<vmem>>, vector<1x64x32xf32>
    %221 = vector.shape_cast %220 : vector<1x64x32xf32> to vector<64x32xf32>
    %cst_92 = arith.constant dense<0.000000e+00> : vector<8x32xf32>
    %222 = tpu.matmul %219, %221, %cst_92 {dimension_numbers = #tpu.dot_dimension_numbers<[1], [0], [0], [1], [0, 0, 1, 1], [], []>} : vector<8x64xf32>, vector<64x32xf32>, vector<8x32xf32> -> vector<8x32xf32>
    %223 = vector.broadcast %130 : vector<1x32xf32> to vector<8x32xf32>
    %224 = arith.addf %222, %223 : vector<8x32xf32>
    %225 = arith.addf %188, %224 : vector<8x32xf32>
    %c0_93 = arith.constant 0 : index
    %c0_94 = arith.constant 0 : index
    %226 = vector.load %arg12[%c0_93, %c0_94] : memref<2x32xf32, #tpu.memory_space<vmem>>, vector<1x32xf32>
    %c1_95 = arith.constant 1 : index
    %c0_96 = arith.constant 0 : index
    %227 = vector.load %arg12[%c1_95, %c0_96] : memref<2x32xf32, #tpu.memory_space<vmem>>, vector<1x32xf32>
    %cst_97 = arith.constant dense<0.000000e+00> : vector<8xf32>
    %228 = vector.multi_reduction <add>, %225, %cst_97 [1] : vector<8x32xf32> to vector<8xf32>
    %229 = vector.shape_cast %228 : vector<8xf32> to vector<8x1xf32>
    %cst_98 = arith.constant 3.200000e+01 : f32
    %230 = vector.broadcast %cst_98 : f32 to vector<8x1xf32>
    %231 = arith.divf %229, %230 : vector<8x1xf32>
    %232 = vector.broadcast %231 : vector<8x1xf32> to vector<8x32xf32>
    %233 = arith.subf %225, %232 : vector<8x32xf32>
    %234 = arith.mulf %233, %233 : vector<8x32xf32>
    %cst_99 = arith.constant dense<0.000000e+00> : vector<8xf32>
    %235 = vector.multi_reduction <add>, %234, %cst_99 [1] : vector<8x32xf32> to vector<8xf32>
    %236 = vector.shape_cast %235 : vector<8xf32> to vector<8x1xf32>
    %cst_100 = arith.constant 3.200000e+01 : f32
    %237 = vector.broadcast %cst_100 : f32 to vector<8x1xf32>
    %238 = arith.divf %236, %237 : vector<8x1xf32>
    %239 = vector.broadcast %231 : vector<8x1xf32> to vector<8x32xf32>
    %240 = arith.subf %225, %239 : vector<8x32xf32>
    %cst_101 = arith.constant 9.99999997E-7 : f32
    %241 = vector.broadcast %cst_101 : f32 to vector<8x1xf32>
    %242 = arith.addf %238, %241 : vector<8x1xf32>
    %243 = math.rsqrt %242 : vector<8x1xf32>
    %244 = vector.broadcast %243 : vector<8x1xf32> to vector<8x32xf32>
    %245 = arith.mulf %240, %244 : vector<8x32xf32>
    %246 = vector.broadcast %226 : vector<1x32xf32> to vector<8x32xf32>
    %247 = arith.mulf %245, %246 : vector<8x32xf32>
    %248 = vector.broadcast %227 : vector<1x32xf32> to vector<8x32xf32>
    %249 = arith.addf %247, %248 : vector<8x32xf32>
    %c0_102 = arith.constant 0 : index
    %c0_103 = arith.constant 0 : index
    %c0_104 = arith.constant 0 : index
    %250 = vector.load %arg13[%c0_102, %c0_103, %c0_104] : memref<1x8x32xf32, #tpu.memory_space<vmem>>, vector<1x8x32xf32>
    %251 = vector.shape_cast %250 : vector<1x8x32xf32> to vector<8x32xf32>
    %252 = vector.shape_cast %249 : vector<8x32xf32> to vector<1x8x32xf32>
    tpu.vector_store %arg13[%c0_102, %c0_103, %c0_104], %252 {strides = array<i32>} : memref<1x8x32xf32, #tpu.memory_space<vmem>>, vector<1x8x32xf32>,
    return
  }
  func.func @transform_0(%arg0: i32) -> (i32, i32, i32) {
    %c0_i32 = arith.constant 0 : i32
    %c0_i32_0 = arith.constant 0 : i32
    %c0_i32_1 = arith.constant 0 : i32
    return %arg0, %c0_i32, %c0_i32_0 : i32, i32, i32
  }
  func.func @transform_1(%arg0: i32) -> (i32, i32, i32) {
    %c0_i32 = arith.constant 0 : i32
    %c0_i32_0 = arith.constant 0 : i32
    %c0_i32_1 = arith.constant 0 : i32
    return %arg0, %c0_i32, %c0_i32_0 : i32, i32, i32
  }
  func.func @transform_2(%arg0: i32) -> (i32, i32) {
    %c0_i32 = arith.constant 0 : i32
    %c0_i32_0 = arith.constant 0 : i32
    %c0_i32_1 = arith.constant 0 : i32
    return %c0_i32, %c0_i32_0 : i32, i32
  }
  func.func @transform_3(%arg0: i32) -> (i32, i32) {
    %c0_i32 = arith.constant 0 : i32
    %c0_i32_0 = arith.constant 0 : i32
    %c0_i32_1 = arith.constant 0 : i32
    return %c0_i32, %c0_i32_0 : i32, i32
  }
  func.func @transform_4(%arg0: i32) -> (i32, i32, i32) {
    %c0_i32 = arith.constant 0 : i32
    %c0_i32_0 = arith.constant 0 : i32
    %c0_i32_1 = arith.constant 0 : i32
    %c0_i32_2 = arith.constant 0 : i32
    return %c0_i32, %c0_i32_0, %c0_i32_1 : i32, i32, i32
  }
  func.func @transform_5(%arg0: i32) -> (i32, i32, i32) {
    %c0_i32 = arith.constant 0 : i32
    %c0_i32_0 = arith.constant 0 : i32
    %c0_i32_1 = arith.constant 0 : i32
    %c0_i32_2 = arith.constant 0 : i32
    return %c0_i32, %c0_i32_0, %c0_i32_1 : i32, i32, i32
  }
  func.func @transform_6(%arg0: i32) -> (i32, i32, i32) {
    %c0_i32 = arith.constant 0 : i32
    %c0_i32_0 = arith.constant 0 : i32
    %c0_i32_1 = arith.constant 0 : i32
    %c0_i32_2 = arith.constant 0 : i32
    return %c0_i32, %c0_i32_0, %c0_i32_1 : i32, i32, i32
  }
  func.func @transform_7(%arg0: i32) -> (i32, i32, i32) {
    %c0_i32 = arith.constant 0 : i32
    %c0_i32_0 = arith.constant 0 : i32
    %c0_i32_1 = arith.constant 0 : i32
    %c0_i32_2 = arith.constant 0 : i32
    return %c0_i32, %c0_i32_0, %c0_i32_1 : i32, i32, i32
  }
  func.func @transform_8(%arg0: i32) -> (i32, i32, i32) {
    %c0_i32 = arith.constant 0 : i32
    %c0_i32_0 = arith.constant 0 : i32
    %c0_i32_1 = arith.constant 0 : i32
    %c0_i32_2 = arith.constant 0 : i32
    return %c0_i32, %c0_i32_0, %c0_i32_1 : i32, i32, i32
  }
  func.func @transform_9(%arg0: i32) -> (i32, i32, i32) {
    %c0_i32 = arith.constant 0 : i32
    %c0_i32_0 = arith.constant 0 : i32
    %c0_i32_1 = arith.constant 0 : i32
    %c0_i32_2 = arith.constant 0 : i32
    return %c0_i32, %c0_i32_0, %c0_i32_1 : i32, i32, i32
  }
  func.func @transform_10(%arg0: i32) -> (i32, i32, i32) {
    %c0_i32 = arith.constant 0 : i32
    %c0_i32_0 = arith.constant 0 : i32
    %c0_i32_1 = arith.constant 0 : i32
    %c0_i32_2 = arith.constant 0 : i32
    return %c0_i32, %c0_i32_0, %c0_i32_1 : i32, i32, i32
  }
  func.func @transform_11(%arg0: i32) -> (i32, i32) {
    %c0_i32 = arith.constant 0 : i32
    %c0_i32_0 = arith.constant 0 : i32
    %c0_i32_1 = arith.constant 0 : i32
    return %c0_i32, %c0_i32_0 : i32, i32
  }
  func.func @transform_12(%arg0: i32) -> (i32, i32, i32) {
    %c0_i32 = arith.constant 0 : i32
    %c0_i32_0 = arith.constant 0 : i32
    %c0_i32_1 = arith.constant 0 : i32
    return %arg0, %c0_i32, %c0_i32_0 : i32, i32, i32
  }
}

</mosaic_0001>

<llo_original>
// kernel: encoder_forward.1
$region0: #{encoder_forward.1}
  #allocation0 [shape = 'u32[]', space=smem, size = 0x4, offset = 0x4, fixed_abs, tag = 'smem constant byte address 0x4 - core index']
  #allocation1 [shape = 'u32[144,128]{1,0:T(1,128)}', space=vmem, size = 0x12000, scoped, tag = 'internal scratch']
  %s0 = inlined_call_operand.vmem [shape: s32[2,8,1], index: 0, kind: input, shape index: {}]
  %s1 = inlined_call_operand.vmem [shape: s32[2,1,8], index: 1, kind: input, shape index: {}]
  %s2 = inlined_call_operand.vmem [shape: f32[128,32], index: 2, kind: input, shape index: {}]
  %s3 = inlined_call_operand.vmem [shape: f32[8,32], index: 3, kind: input, shape index: {}]
  %s4 = inlined_call_operand.vmem [shape: f32[2,96,32], index: 4, kind: input, shape index: {}]
  %s5 = inlined_call_operand.vmem [shape: f32[2,96,1], index: 5, kind: input, shape index: {}]
  %s6 = inlined_call_operand.vmem [shape: f32[2,32,32], index: 6, kind: input, shape index: {}]
  %s7 = inlined_call_operand.vmem [shape: f32[2,32,64], index: 7, kind: input, shape index: {}]
  %s8 = inlined_call_operand.vmem [shape: f32[2,1,64], index: 8, kind: input, shape index: {}]
  %s9 = inlined_call_operand.vmem [shape: f32[2,64,32], index: 9, kind: input, shape index: {}]
  %s10 = inlined_call_operand.vmem [shape: f32[2,8,32], index: 10, kind: input, shape index: {}]
  %s11 = inlined_call_operand.vmem [shape: f32[2,32], index: 11, kind: input, shape index: {}]
  %s12 = inlined_call_operand.hbm [shape: f32[2,8,32], index: 12, kind: output, shape index: {}]
  %s13 = sld [smem:[#allocation0]]
  $region81: #{encoder_forward.1} parent=0
    _
  %s15 = ssub.s32 1, %s13
  %s16 = scalar_select 0, %s15, %s13
  $region1: #{encoder_forward.1} parent=0
    #allocation2 [shape = 'u8[8192]{0}', space=vmem, size = 0x2000, scoped, tag = 'output window, operand 0']
    #allocation3 [shape = 's32[2]{0}', space=sflag, size = 0x8, scoped, tag = 'scoped memory for encoder_forward.1']
    %17 = vsyncpa [#allocation3], 0
    %s18 = scalar_lea.sflag [#allocation3], 1
    %19 = vsyncpa %s18, 0
    loop: start=0, step=1, limit=4
    $region2: #{encoder_forward.1} parent=1 // loop_pre_header
      _
    $region3: #{encoder_forward.1} parent=1 // loop_header
      %s21 = sphi 0, %s25
      %p22 = scmp.ge.s32.totalorder %s21, 4
      %s31 = sphi 0, %s33
      %s34 = sphi 0, %s31
      %s35 = sphi 0, %s34
      %s51 = sphi 0, %s35
      %s57 = sphi 0, %s59
      %s60 = sphi 0, %s57
      %s61 = sphi 0, %s60
      %s77 = sphi 0, %s61
      %s81 = sphi 0, %s81
      %s83 = sphi 0, %s81
      %s84 = sphi 0, %s83
      %s98 = sphi 0, %s84
      %s102 = sphi 0, %s102
      %s104 = sphi 0, %s102
      %s105 = sphi 0, %s104
      %s119 = sphi 0, %s105
      %s123 = sphi 0, %s123
      %s125 = sphi 0, %s123
      %s126 = sphi 0, %s125
      %s140 = sphi 0, %s126
      %s144 = sphi 0, %s144
      %s146 = sphi 0, %s144
      %s147 = sphi 0, %s146
      %s161 = sphi 0, %s147
      %s165 = sphi 0, %s165
      %s167 = sphi 0, %s165
      %s168 = sphi 0, %s167
      %s182 = sphi 0, %s168
      %s186 = sphi 0, %s186
      %s188 = sphi 0, %s186
      %s189 = sphi 0, %s188
      %s203 = sphi 0, %s189
      %s207 = sphi 0, %s207
      %s209 = sphi 0, %s207
      %s210 = sphi 0, %s209
      %s224 = sphi 0, %s210
      %s228 = sphi 0, %s228
      %s230 = sphi 0, %s228
      %s231 = sphi 0, %s230
      %s245 = sphi 0, %s231
      %s249 = sphi 0, %s249
      %s251 = sphi 0, %s249
      %s252 = sphi 0, %s251
      %s266 = sphi 0, %s252
      %s270 = sphi 0, %s270
      %s272 = sphi 0, %s270
      %s273 = sphi 0, %s272
      %s287 = sphi 0, %s273
      %s293 = sphi 0, %s295
      %s296 = sphi 0, %s293
      %s297 = sphi 0, %s296
      %s313 = sphi 0, %s297
    $region4: #{encoder_forward.1} parent=1 // loop_header_branch
      %24 = sbr.rel (%p22) target = $region8
    $region5: #{encoder_forward.1} parent=1 // loop_body
      %s26 = ssub.s32 %s21, 1
      %s27 = ssub.s32 %s21, 2
      %s28 = sadd.s32 %s21, 1
      %s29 = ssub.s32 %s21, %s28
      %p30 = scmp.eq.s32.totalorder %s29, 0
      %s32 = sadd.s32 %s31, 1
      %s33 = scalar_select %p30, %s31, %s32
      %p36 = pneg %p30
      %p37 = scmp.eq.s32.totalorder %s21, 1
      %p38 = por %p36, %p37
      %p39 = scmp.ne.s32.totalorder %s31, %s34
      %p40 = scmp.eq.s32.totalorder %s21, 0
      %p41 = por %p39, %p40
      %p42 = scmp.ne.s32.totalorder %s31, %s34
      %p43 = scmp.eq.s32.totalorder %s26, 1
      %p44 = por %p42, %p43
      %p45 = scmp.ne.s32.totalorder %s34, %s35
      %p46 = scmp.eq.s32.totalorder %s26, 0
      %p47 = por %p45, %p46
      %p48 = scmp.ne.s32.totalorder %s34, %s35
      %p49 = scmp.eq.s32.totalorder %s27, 1
      %p50 = por %p48, %p49
      %p52 = scmp.ne.s32.totalorder %s35, %s51
      %p53 = scmp.eq.s32.totalorder %s27, 0
      %p54 = por %p52, %p53
      %s55 = ssub.s32 %s21, %s28
      %p56 = scmp.eq.s32.totalorder %s55, 0
      %s58 = sadd.s32 %s57, 1
      %s59 = scalar_select %p56, %s57, %s58
      %p62 = pneg %p56
      %p63 = scmp.eq.s32.totalorder %s21, 1
      %p64 = por %p62, %p63
      %p65 = scmp.ne.s32.totalorder %s57, %s60
      %p66 = scmp.eq.s32.totalorder %s21, 0
      %p67 = por %p65, %p66
      %p68 = scmp.ne.s32.totalorder %s57, %s60
      %p69 = scmp.eq.s32.totalorder %s26, 1
      %p70 = por %p68, %p69
      %p71 = scmp.ne.s32.totalorder %s60, %s61
      %p72 = scmp.eq.s32.totalorder %s26, 0
      %p73 = por %p71, %p72
      %p74 = scmp.ne.s32.totalorder %s60, %s61
      %p75 = scmp.eq.s32.totalorder %s27, 1
      %p76 = por %p74, %p75
      %p78 = scmp.ne.s32.totalorder %s61, %s77
      %p79 = scmp.eq.s32.totalorder %s27, 0
      %p80 = por %p78, %p79
      %s82 = sadd.s32 %s81, 1
      %p85 = scmp.eq.s32.totalorder %s21, 1
      %p86 = scmp.ne.s32.totalorder %s81, %s83
      %p87 = scmp.eq.s32.totalorder %s21, 0
      %p88 = por %p86, %p87
      %p89 = scmp.ne.s32.totalorder %s81, %s83
      %p90 = scmp.eq.s32.totalorder %s26, 1
      %p91 = por %p89, %p90
      %p92 = scmp.ne.s32.totalorder %s83, %s84
      %p93 = scmp.eq.s32.totalorder %s26, 0
      %p94 = por %p92, %p93
      %p95 = scmp.ne.s32.totalorder %s83, %s84
      %p96 = scmp.eq.s32.totalorder %s27, 1
      %p97 = por %p95, %p96
      %p99 = scmp.ne.s32.totalorder %s84, %s98
      %p100 = scmp.eq.s32.totalorder %s27, 0
      %p101 = por %p99, %p100
      %s103 = sadd.s32 %s102, 1
      %p106 = scmp.eq.s32.totalorder %s21, 1
      %p107 = scmp.ne.s32.totalorder %s102, %s104
      %p108 = scmp.eq.s32.totalorder %s21, 0
      %p109 = por %p107, %p108
      %p110 = scmp.ne.s32.totalorder %s102, %s104
      %p111 = scmp.eq.s32.totalorder %s26, 1
      %p112 = por %p110, %p111
      %p113 = scmp.ne.s32.totalorder %s104, %s105
      %p114 = scmp.eq.s32.totalorder %s26, 0
      %p115 = por %p113, %p114
      %p116 = scmp.ne.s32.totalorder %s104, %s105
      %p117 = scmp.eq.s32.totalorder %s27, 1
      %p118 = por %p116, %p117
      %p120 = scmp.ne.s32.totalorder %s105, %s119
      %p121 = scmp.eq.s32.totalorder %s27, 0
      %p122 = por %p120, %p121
      %s124 = sadd.s32 %s123, 1
      %p127 = scmp.eq.s32.totalorder %s21, 1
      %p128 = scmp.ne.s32.totalorder %s123, %s125
      %p129 = scmp.eq.s32.totalorder %s21, 0
      %p130 = por %p128, %p129
      %p131 = scmp.ne.s32.totalorder %s123, %s125
      %p132 = scmp.eq.s32.totalorder %s26, 1
      %p133 = por %p131, %p132
      %p134 = scmp.ne.s32.totalorder %s125, %s126
      %p135 = scmp.eq.s32.totalorder %s26, 0
      %p136 = por %p134, %p135
      %p137 = scmp.ne.s32.totalorder %s125, %s126
      %p138 = scmp.eq.s32.totalorder %s27, 1
      %p139 = por %p137, %p138
      %p141 = scmp.ne.s32.totalorder %s126, %s140
      %p142 = scmp.eq.s32.totalorder %s27, 0
      %p143 = por %p141, %p142
      %s145 = sadd.s32 %s144, 1
      %p148 = scmp.eq.s32.totalorder %s21, 1
      %p149 = scmp.ne.s32.totalorder %s144, %s146
      %p150 = scmp.eq.s32.totalorder %s21, 0
      %p151 = por %p149, %p150
      %p152 = scmp.ne.s32.totalorder %s144, %s146
      %p153 = scmp.eq.s32.totalorder %s26, 1
      %p154 = por %p152, %p153
      %p155 = scmp.ne.s32.totalorder %s146, %s147
      %p156 = scmp.eq.s32.totalorder %s26, 0
      %p157 = por %p155, %p156
      %p158 = scmp.ne.s32.totalorder %s146, %s147
      %p159 = scmp.eq.s32.totalorder %s27, 1
      %p160 = por %p158, %p159
      %p162 = scmp.ne.s32.totalorder %s147, %s161
      %p163 = scmp.eq.s32.totalorder %s27, 0
      %p164 = por %p162, %p163
      %s166 = sadd.s32 %s165, 1
      %p169 = scmp.eq.s32.totalorder %s21, 1
      %p170 = scmp.ne.s32.totalorder %s165, %s167
      %p171 = scmp.eq.s32.totalorder %s21, 0
      %p172 = por %p170, %p171
      %p173 = scmp.ne.s32.totalorder %s165, %s167
      %p174 = scmp.eq.s32.totalorder %s26, 1
      %p175 = por %p173, %p174
      %p176 = scmp.ne.s32.totalorder %s167, %s168
      %p177 = scmp.eq.s32.totalorder %s26, 0
      %p178 = por %p176, %p177
      %p179 = scmp.ne.s32.totalorder %s167, %s168
      %p180 = scmp.eq.s32.totalorder %s27, 1
      %p181 = por %p179, %p180
      %p183 = scmp.ne.s32.totalorder %s168, %s182
      %p184 = scmp.eq.s32.totalorder %s27, 0
      %p185 = por %p183, %p184
      %s187 = sadd.s32 %s186, 1
      %p190 = scmp.eq.s32.totalorder %s21, 1
      %p191 = scmp.ne.s32.totalorder %s186, %s188
      %p192 = scmp.eq.s32.totalorder %s21, 0
      %p193 = por %p191, %p192
      %p194 = scmp.ne.s32.totalorder %s186, %s188
      %p195 = scmp.eq.s32.totalorder %s26, 1
      %p196 = por %p194, %p195
      %p197 = scmp.ne.s32.totalorder %s188, %s189
      %p198 = scmp.eq.s32.totalorder %s26, 0
      %p199 = por %p197, %p198
      %p200 = scmp.ne.s32.totalorder %s188, %s189
      %p201 = scmp.eq.s32.totalorder %s27, 1
      %p202 = por %p200, %p201
      %p204 = scmp.ne.s32.totalorder %s189, %s203
      %p205 = scmp.eq.s32.totalorder %s27, 0
      %p206 = por %p204, %p205
      %s208 = sadd.s32 %s207, 1
      %p211 = scmp.eq.s32.totalorder %s21, 1
      %p212 = scmp.ne.s32.totalorder %s207, %s209
      %p213 = scmp.eq.s32.totalorder %s21, 0
      %p214 = por %p212, %p213
      %p215 = scmp.ne.s32.totalorder %s207, %s209
      %p216 = scmp.eq.s32.totalorder %s26, 1
      %p217 = por %p215, %p216
      %p218 = scmp.ne.s32.totalorder %s209, %s210
      %p219 = scmp.eq.s32.totalorder %s26, 0
      %p220 = por %p218, %p219
      %p221 = scmp.ne.s32.totalorder %s209, %s210
      %p222 = scmp.eq.s32.totalorder %s27, 1
      %p223 = por %p221, %p222
      %p225 = scmp.ne.s32.totalorder %s210, %s224
      %p226 = scmp.eq.s32.totalorder %s27, 0
      %p227 = por %p225, %p226
      %s229 = sadd.s32 %s228, 1
      %p232 = scmp.eq.s32.totalorder %s21, 1
      %p233 = scmp.ne.s32.totalorder %s228, %s230
      %p234 = scmp.eq.s32.totalorder %s21, 0
      %p235 = por %p233, %p234
      %p236 = scmp.ne.s32.totalorder %s228, %s230
      %p237 = scmp.eq.s32.totalorder %s26, 1
      %p238 = por %p236, %p237
      %p239 = scmp.ne.s32.totalorder %s230, %s231
      %p240 = scmp.eq.s32.totalorder %s26, 0
      %p241 = por %p239, %p240
      %p242 = scmp.ne.s32.totalorder %s230, %s231
      %p243 = scmp.eq.s32.totalorder %s27, 1
      %p244 = por %p242, %p243
      %p246 = scmp.ne.s32.totalorder %s231, %s245
      %p247 = scmp.eq.s32.totalorder %s27, 0
      %p248 = por %p246, %p247
      %s250 = sadd.s32 %s249, 1
      %p253 = scmp.eq.s32.totalorder %s21, 1
      %p254 = scmp.ne.s32.totalorder %s249, %s251
      %p255 = scmp.eq.s32.totalorder %s21, 0
      %p256 = por %p254, %p255
      %p257 = scmp.ne.s32.totalorder %s249, %s251
      %p258 = scmp.eq.s32.totalorder %s26, 1
      %p259 = por %p257, %p258
      %p260 = scmp.ne.s32.totalorder %s251, %s252
      %p261 = scmp.eq.s32.totalorder %s26, 0
      %p262 = por %p260, %p261
      %p263 = scmp.ne.s32.totalorder %s251, %s252
      %p264 = scmp.eq.s32.totalorder %s27, 1
      %p265 = por %p263, %p264
      %p267 = scmp.ne.s32.totalorder %s252, %s266
      %p268 = scmp.eq.s32.totalorder %s27, 0
      %p269 = por %p267, %p268
      %s271 = sadd.s32 %s270, 1
      %p274 = scmp.eq.s32.totalorder %s21, 1
      %p275 = scmp.ne.s32.totalorder %s270, %s272
      %p276 = scmp.eq.s32.totalorder %s21, 0
      %p277 = por %p275, %p276
      %p278 = scmp.ne.s32.totalorder %s270, %s272
      %p279 = scmp.eq.s32.totalorder %s26, 1
      %p280 = por %p278, %p279
      %p281 = scmp.ne.s32.totalorder %s272, %s273
      %p282 = scmp.eq.s32.totalorder %s26, 0
      %p283 = por %p281, %p282
      %p284 = scmp.ne.s32.totalorder %s272, %s273
      %p285 = scmp.eq.s32.totalorder %s27, 1
      %p286 = por %p284, %p285
      %p288 = scmp.ne.s32.totalorder %s273, %s287
      %p289 = scmp.eq.s32.totalorder %s27, 0
      %p290 = por %p288, %p289
      %s291 = ssub.s32 %s21, %s28
      %p292 = scmp.eq.s32.totalorder %s291, 0
      %s294 = sadd.s32 %s293, 1
      %s295 = scalar_select %p292, %s293, %s294
      %p298 = pneg %p292
      %p299 = scmp.eq.s32.totalorder %s21, 1
      %p300 = por %p298, %p299
      %p301 = scmp.ne.s32.totalorder %s293, %s296
      %p302 = scmp.eq.s32.totalorder %s21, 0
      %p303 = por %p301, %p302
      %p304 = scmp.ne.s32.totalorder %s293, %s296
      %p305 = scmp.eq.s32.totalorder %s26, 1
      %p306 = por %p304, %p305
      %p307 = scmp.ne.s32.totalorder %s296, %s297
      %p308 = scmp.eq.s32.totalorder %s26, 0
      %p309 = por %p307, %p308
      %p310 = scmp.ne.s32.totalorder %s296, %s297
      %p311 = scmp.eq.s32.totalorder %s27, 1
      %p312 = por %p310, %p311
      %p314 = scmp.ne.s32.totalorder %s297, %s313
      %p315 = scmp.eq.s32.totalorder %s27, 0
      %p316 = por %p314, %p315
      %p317 = scmp.le.s32.totalorder 1, %s21
      %p318 = scmp.lt.s32.totalorder %s21, 3
      %p319 = pnand %p317, %p318
      %p320 = pneg %p319
      // Predicated region
      $region9: #{encoder_forward.1} parent=5 // pred_check
        _
      $region10: #{encoder_forward.1} parent=5 // pred_check_branch
        %322 = sbr.rel (%p319) target = $region12
      $region11: #{encoder_forward.1} parent=5 // pred_region
        %s323 = ssub.s32 %s21, 1
        // Predicated region
        $region13: #{encoder_forward.1} parent=11 // pred_check
          %p324 = pneg %p94
        $region14: #{encoder_forward.1} parent=11 // pred_check_branch
          %326 = sbr.rel (%p324) target = $region16
        $region15: #{encoder_forward.1} parent=11 // pred_region
          _
        $region16: #{encoder_forward.1} parent=11 // pred_fallthru
          _
        // Predicated region
        $region17: #{encoder_forward.1} parent=11 // pred_check
          %p327 = pneg %p115
        $region18: #{encoder_forward.1} parent=11 // pred_check_branch
          %329 = sbr.rel (%p327) target = $region20
        $region19: #{encoder_forward.1} parent=11 // pred_region
          _
        $region20: #{encoder_forward.1} parent=11 // pred_fallthru
          _
        // Predicated region
        $region21: #{encoder_forward.1} parent=11 // pred_check
          %p330 = pneg %p136
        $region22: #{encoder_forward.1} parent=11 // pred_check_branch
          %332 = sbr.rel (%p330) target = $region24
        $region23: #{encoder_forward.1} parent=11 // pred_region
          _
        $region24: #{encoder_forward.1} parent=11 // pred_fallthru
          _
        // Predicated region
        $region25: #{encoder_forward.1} parent=11 // pred_check
          %p333 = pneg %p157
        $region26: #{encoder_forward.1} parent=11 // pred_check_branch
          %335 = sbr.rel (%p333) target = $region28
        $region27: #{encoder_forward.1} parent=11 // pred_region
          _
        $region28: #{encoder_forward.1} parent=11 // pred_fallthru
          _
        // Predicated region
        $region29: #{encoder_forward.1} parent=11 // pred_check
          %p336 = pneg %p178
        $region30: #{encoder_forward.1} parent=11 // pred_check_branch
          %338 = sbr.rel (%p336) target = $region32
        $region31: #{encoder_forward.1} parent=11 // pred_region
          _
        $region32: #{encoder_forward.1} parent=11 // pred_fallthru
          _
        // Predicated region
        $region33: #{encoder_forward.1} parent=11 // pred_check
          %p339 = pneg %p199
        $region34: #{encoder_forward.1} parent=11 // pred_check_branch
          %341 = sbr.rel (%p339) target = $region36
        $region35: #{encoder_forward.1} parent=11 // pred_region
          _
        $region36: #{encoder_forward.1} parent=11 // pred_fallthru
          _
        // Predicated region
        $region37: #{encoder_forward.1} parent=11 // pred_check
          %p342 = pneg %p220
        $region38: #{encoder_forward.1} parent=11 // pred_check_branch
          %344 = sbr.rel (%p342) target = $region40
        $region39: #{encoder_forward.1} parent=11 // pred_region
          _
        $region40: #{encoder_forward.1} parent=11 // pred_fallthru
          _
        // Predicated region
        $region41: #{encoder_forward.1} parent=11 // pred_check
          %p345 = pneg %p241
        $region42: #{encoder_forward.1} parent=11 // pred_check_branch
          %347 = sbr.rel (%p345) target = $region44
        $region43: #{encoder_forward.1} parent=11 // pred_region
          _
        $region44: #{encoder_forward.1} parent=11 // pred_fallthru
          _
        // Predicated region
        $region45: #{encoder_forward.1} parent=11 // pred_check
          %p348 = pneg %p262
        $region46: #{encoder_forward.1} parent=11 // pred_check_branch
          %350 = sbr.rel (%p348) target = $region48
        $region47: #{encoder_forward.1} parent=11 // pred_region
          _
        $region48: #{encoder_forward.1} parent=11 // pred_fallthru
          _
        // Predicated region
        $region49: #{encoder_forward.1} parent=11 // pred_check
          %p351 = pneg %p283
        $region50: #{encoder_forward.1} parent=11 // pred_check_branch
          %353 = sbr.rel (%p351) target = $region52
        $region51: #{encoder_forward.1} parent=11 // pred_region
          _
        $region52: #{encoder_forward.1} parent=11 // pred_fallthru
          _
      $region12: #{encoder_forward.1} parent=5 // pred_fallthru
        _
      %p354 = scmp.lt.s32.totalorder %s21, 2
      // Predicated region
      $region53: #{encoder_forward.1} parent=5 // pred_check
        %p355 = pneg %p354
      $region54: #{encoder_forward.1} parent=5 // pred_check_branch
        %357 = sbr.rel (%p355) target = $region56
      $region55: #{encoder_forward.1} parent=5 // pred_region
        // Predicated region
        $region57: #{encoder_forward.1} parent=55 // pred_check
          %p358 = pneg %p41
        $region58: #{encoder_forward.1} parent=55 // pred_check_branch
          %360 = sbr.rel (%p358) target = $region60
        $region59: #{encoder_forward.1} parent=55 // pred_region
          %p361 = scmp.lt.s32.totalorder %s21, 1
          %s362 = scalar_select %p361, %s21, 1
          %s363 = smul.addr %s362, 8
          %s364 = scalar_lea.vmem %s0, %s363
        $region60: #{encoder_forward.1} parent=55 // pred_fallthru
          _
        // Predicated region
        $region61: #{encoder_forward.1} parent=55 // pred_check
          %p365 = pneg %p67
        $region62: #{encoder_forward.1} parent=55 // pred_check_branch
          %367 = sbr.rel (%p365) target = $region64
        $region63: #{encoder_forward.1} parent=55 // pred_region
          %p368 = scmp.lt.s32.totalorder %s21, 1
          %s369 = scalar_select %p368, %s21, 1
          %s370 = scalar_lea.vmem %s1, %s369
        $region64: #{encoder_forward.1} parent=55 // pred_fallthru
          _
      $region56: #{encoder_forward.1} parent=5 // pred_fallthru
        _
      %p371 = scmp.le.s32.totalorder 1, %s21
      %p372 = scmp.lt.s32.totalorder %s21, 3
      %p373 = pnand %p371, %p372
      %p374 = pneg %p373
      // Predicated region
      $region65: #{encoder_forward.1} parent=5 // pred_check
        _
      $region66: #{encoder_forward.1} parent=5 // pred_check_branch
        %376 = sbr.rel (%p373) target = $region68
      $region67: #{encoder_forward.1} parent=5 // pred_region
        %s377 = ssub.s32 %s21, 1
        %p378 = scmp.lt.s32.totalorder %s26, 1
        %s379 = scalar_select %p378, %s26, 1
        %s380 = smul.addr %s379, 8
        %s381 = scalar_lea.vmem %s0, %s380
        %p382 = pneg %p47
        %p383 = pneg %p44
        %p384 = scmp.lt.s32.totalorder %s26, 1
        %s385 = scalar_select %p384, %s26, 1
        %s386 = scalar_lea.vmem %s1, %s385
        %p387 = pneg %p73
        %p388 = pneg %p70
        %p389 = pneg %p94
        %p390 = pneg %p91
        %p391 = pneg %p115
        %p392 = pneg %p112
        %p393 = pneg %p136
        %p394 = pneg %p133
        %p395 = pneg %p157
        %p396 = pneg %p154
        %p397 = pneg %p178
        %p398 = pneg %p175
        %p399 = pneg %p199
        %p400 = pneg %p196
        %p401 = pneg %p220
        %p402 = pneg %p217
        %p403 = pneg %p241
        %p404 = pneg %p238
        %p405 = pneg %p262
        %p406 = pneg %p259
        %p407 = pneg %p283
        %p408 = pneg %p280
        %p409 = pneg %p309
        %p410 = pneg %p306
        %s411 = sand.u32 %s296, 1
        %s412 = scalar_lea.sflag [#allocation3], %s411
        %s413 = sand.u32 %s296, 1
        %s414 = smul.addr %s413, 8
        %s415 = scalar_lea.vmem [#allocation2], %s414
        %p416 = scmp.lt.s32.totalorder %s26, 1
        %s417 = scalar_select %p416, %s26, 1
        %s418 = smul.addr %s417, 8
        %s419 = scalar_lea.vmem %s0, %s418
        %p420 = scmp.lt.s32.totalorder %s26, 1
        %s421 = scalar_select %p420, %s26, 1
        %s422 = scalar_lea.vmem %s1, %s421
        %v423 = vlaneseq
        %v424 = vand.u32 %v423, 127
        %v425 = vld [vmem:[%s419] sm:$0xff]
        %426 = vset.pattern.permute.xlu0 0
        %427 = vperm.xlu0 %426, %v425
        %v428 = vpop.permute.xlu0 %427
        %vm429 = vcmp.eq.s32.totalorder %v424, %v428
        %v430 = vsel %vm429, 1, 0
        %v431 = vcvt.s32.f32 %v430
        %v432 = vld [vmem:[%s2] sm:$0xff]
        %v433 = vld [vmem:[%s2 + $0x8] sm:$0xff]
        %v434 = vld [vmem:[%s2 + $0x10] sm:$0xff]
        %v435 = vld [vmem:[%s2 + $0x18] sm:$0xff]
        %v436 = vld [vmem:[%s2 + $0x20] sm:$0xff]
        %v437 = vld [vmem:[%s2 + $0x28] sm:$0xff]
        %v438 = vld [vmem:[%s2 + $0x30] sm:$0xff]
        %v439 = vld [vmem:[%s2 + $0x38] sm:$0xff]
        %v440 = vld [vmem:[%s2 + $0x40] sm:$0xff]
        %v441 = vld [vmem:[%s2 + $0x48] sm:$0xff]
        %v442 = vld [vmem:[%s2 + $0x50] sm:$0xff]
        %v443 = vld [vmem:[%s2 + $0x58] sm:$0xff]
        %v444 = vld [vmem:[%s2 + $0x60] sm:$0xff]
        %v445 = vld [vmem:[%s2 + $0x68] sm:$0xff]
        %v446 = vld [vmem:[%s2 + $0x70] sm:$0xff]
        %v447 = vld [vmem:[%s2 + $0x78] sm:$0xff]
        %448 = vmatprep.subr.mxu0 0.0
        %449 = vmatpush1.msra.mxu0 %v447
        %450 = vmatprep.subr.mxu0 0.0
        %451 = vmatpush1.msra.mxu0 %v446
        %452 = vmatprep.subr.mxu0 0.0
        %453 = vmatpush1.msra.mxu0 %v445
        %454 = vmatprep.subr.mxu0 0.0
        %455 = vmatpush1.msra.mxu0 %v444
        %456 = vmatprep.subr.mxu0 0.0
        %457 = vmatpush1.msra.mxu0 %v443
        %458 = vmatprep.subr.mxu0 0.0
        %459 = vmatpush1.msra.mxu0 %v442
        %460 = vmatprep.subr.mxu0 0.0
        %461 = vmatpush1.msra.mxu0 %v441
        %462 = vmatprep.subr.mxu0 0.0
        %463 = vmatpush1.msra.mxu0 %v440
        %464 = vmatprep.subr.mxu0 0.0
        %465 = vmatpush1.msra.mxu0 %v439
        %466 = vmatprep.subr.mxu0 0.0
        %467 = vmatpush1.msra.mxu0 %v438
        %468 = vmatprep.subr.mxu0 0.0
        %469 = vmatpush1.msra.mxu0 %v437
        %470 = vmatprep.subr.mxu0 0.0
        %471 = vmatpush1.msra.mxu0 %v436
        %472 = vmatprep.subr.mxu0 0.0
        %473 = vmatpush1.msra.mxu0 %v435
        %474 = vmatprep.subr.mxu0 0.0
        %475 = vmatpush1.msra.mxu0 %v434
        %476 = vmatprep.subr.mxu0 0.0
        %477 = vmatpush1.msra.mxu0 %v433
        %478 = vmatprep.subr.mxu0 0.0
        %479 = vmatpush1.msra.mxu0 %v432
        %480 = vmatprep.subr.mxu0 0.0
        %481 = vmatpush2.msra.mxu0 0.0
        %482 = vmatprep.subr.mxu0 0.0
        %483 = vmatpush2.msra.mxu0 0.0
        %484 = vmatprep.subr.mxu0 0.0
        %485 = vmatpush2.msra.mxu0 0.0
        %486 = vmatprep.subr.mxu0 0.0
        %487 = vmatpush2.msra.mxu0 0.0
        %488 = vmatprep.subr.mxu0 0.0
        %489 = vmatpush2.msra.mxu0 0.0
        %490 = vmatprep.subr.mxu0 0.0
        %491 = vmatpush2.msra.mxu0 0.0
        %492 = vmatprep.subr.mxu0 0.0
        %493 = vmatpush2.msra.mxu0 0.0
        %494 = vmatprep.subr.mxu0 0.0
        %495 = vmatpush2.msra.mxu0 0.0
        %496 = vmatprep.subr.mxu0 0.0
        %497 = vmatpush2.msra.mxu0 0.0
        %498 = vmatprep.subr.mxu0 0.0
        %499 = vmatpush2.msra.mxu0 0.0
        %500 = vmatprep.subr.mxu0 0.0
        %501 = vmatpush2.msra.mxu0 0.0
        %502 = vmatprep.subr.mxu0 0.0
        %503 = vmatpush2.msra.mxu0 0.0
        %504 = vmatprep.subr.mxu0 0.0
        %505 = vmatpush2.msra.mxu0 0.0
        %506 = vmatprep.subr.mxu0 0.0
        %507 = vmatpush2.msra.mxu0 0.0
        %508 = vmatprep.subr.mxu0 0.0
        %509 = vmatpush2.msra.mxu0 0.0
        %510 = vmatprep.subr.mxu0 0.0
        %511 = vmatpush2.msra.mxu0 0.0
        %512 = vmatprep.mubr.f32.mxu0 0.0
        %513 = vmatmul.mubr.f32.gmra.mxu0 %v431
        %v514 = vpop.f32.mrf.mxu0
        %v515 = vadd.f32 0.0, %v514
        %v516 = vpop.f32.mrf.mxu0
        %517 = vdwg.mxu0
        %v518 = vmul.f32 %v515, 5.656854
        %v519 = vld [vmem:[%s3] sm:$0xff]
        %v520 = vadd.f32 %v518, %v519
        %v521 = vld [vmem:[%s422] sm:$0x1]
        %vm522 = vcmp.ne.s32.totalorder %v521, 0
        %v523 = vsel %vm522, -1e+09, 0.0
        %v524 = vld [vmem:[%s10] sm:$0xff]
        %vm525 = vcmask 261120
        %v526 = vsel %vm525, %v520, 0.0
        %527 = vadd.xlane.f32.xlu0 %v526
        %v528 = vpop.xlane.xlu0 %527
        %v529 = vrcp.pop 32.0
        %v530 = vmul.f32 %v528, %v529
        %v531 = vsub.f32 %v520, %v530
        %v532 = vmul.f32 %v531, %v531
        %v533 = vsel %vm525, %v532, 0.0
        %534 = vadd.xlane.f32.xlu0 %v533
        %v535 = vpop.xlane.xlu0 %534
        %v536 = vmul.f32 %v535, %v529
        %v537 = vadd.f32 %v536, 1e-06
        %v538 = vrsqrt.pop %v537
        %v539 = vmul.f32 %v531, %v538
        %v540 = vlaneseq
        %v541 = vshrl.u32 %v540, 7
        %v542 = vsub.s32 0, %v541
        %v543 = vrot.slane %v524, %v542
        %v544 = vmul.f32 %v539, %v543
        %v545 = vlaneseq
        %v546 = vshrl.u32 %v545, 7
        %v547 = vsub.s32 1, %v546
        %v548 = vrot.slane %v524, %v547
        %v549 = vadd.f32 %v544, %v548
        %v550 = vld [vmem:[%s4] sm:$0xff]
        %v551 = vld [vmem:[%s4 + $0x8] sm:$0xff]
        %v552 = vld [vmem:[%s4 + $0x10] sm:$0xff]
        %v553 = vld [vmem:[%s4 + $0x18] sm:$0xff]
        %v554 = vld [vmem:[%s4 + $0x20] sm:$0xff]
        %v555 = vld [vmem:[%s4 + $0x28] sm:$0xff]
        %v556 = vld [vmem:[%s4 + $0x30] sm:$0xff]
        %v557 = vld [vmem:[%s4 + $0x38] sm:$0xff]
        %v558 = vld [vmem:[%s4 + $0x40] sm:$0xff]
        %v559 = vld [vmem:[%s4 + $0x48] sm:$0xff]
        %v560 = vld [vmem:[%s4 + $0x50] sm:$0xff]
        %v561 = vld [vmem:[%s4 + $0x58] sm:$0xff]
        %v562 = vld [vmem:[%s5] sm:$0xff]
        %v563 = vld [vmem:[%s5 + $0x8] sm:$0xff]
        %v564 = vld [vmem:[%s5 + $0x10] sm:$0xff]
        %v565 = vld [vmem:[%s5 + $0x18] sm:$0xff]
        %v566 = vld [vmem:[%s5 + $0x20] sm:$0xff]
        %v567 = vld [vmem:[%s5 + $0x28] sm:$0xff]
        %v568 = vld [vmem:[%s5 + $0x30] sm:$0xff]
        %v569 = vld [vmem:[%s5 + $0x38] sm:$0xff]
        %v570 = vld [vmem:[%s5 + $0x40] sm:$0xff]
        %v571 = vld [vmem:[%s5 + $0x48] sm:$0xff]
        %v572 = vld [vmem:[%s5 + $0x50] sm:$0xff]
        %v573 = vld [vmem:[%s5 + $0x58] sm:$0xff]
        %575 = vset.pattern.permute.xlu0 0
        %576 = vperm.xlu0 %575, %v562
        %v577 = vpop.permute.xlu0 %576
        %580 = vset.pattern.permute.xlu0 0
        %581 = vperm.xlu0 %580, %v563
        %v582 = vpop.permute.xlu0 %581
        %585 = vset.pattern.permute.xlu0 0
        %586 = vperm.xlu0 %585, %v564
        %v587 = vpop.permute.xlu0 %586
        %590 = vset.pattern.permute.xlu0 0
        %591 = vperm.xlu0 %590, %v565
        %v592 = vpop.permute.xlu0 %591
        %595 = vset.pattern.permute.xlu0 0
        %596 = vperm.xlu0 %595, %v566
        %v597 = vpop.permute.xlu0 %596
        %600 = vset.pattern.permute.xlu0 0
        %601 = vperm.xlu0 %600, %v567
        %v602 = vpop.permute.xlu0 %601
        %605 = vset.pattern.permute.xlu0 0
        %606 = vperm.xlu0 %605, %v568
        %v607 = vpop.permute.xlu0 %606
        %610 = vset.pattern.permute.xlu0 0
        %611 = vperm.xlu0 %610, %v569
        %v612 = vpop.permute.xlu0 %611
        %615 = vset.pattern.permute.xlu0 0
        %616 = vperm.xlu0 %615, %v570
        %v617 = vpop.permute.xlu0 %616
        %620 = vset.pattern.permute.xlu0 0
        %621 = vperm.xlu0 %620, %v571
        %v622 = vpop.permute.xlu0 %621
        %625 = vset.pattern.permute.xlu0 0
        %626 = vperm.xlu0 %625, %v572
        %v627 = vpop.permute.xlu0 %626
        %630 = vset.pattern.permute.xlu0 0
        %631 = vperm.xlu0 %630, %v573
        %v632 = vpop.permute.xlu0 %631
        %v635 = vsel %vm525, %v550, 0
        %v638 = vsel %vm525, %v551, 0
        %v641 = vsel %vm525, %v552, 0
        %v644 = vsel %vm525, %v553, 0
        %v647 = vsel %vm525, %v554, 0
        %v650 = vsel %vm525, %v555, 0
        %v653 = vsel %vm525, %v556, 0
        %v656 = vsel %vm525, %v557, 0
        %v659 = vsel %vm525, %v558, 0
        %v662 = vsel %vm525, %v559, 0
        %v665 = vsel %vm525, %v560, 0
        %v668 = vsel %vm525, %v561, 0
        %v671 = vsel %vm525, %v549, 0
        %673 = vmatprep.subr.mxu0 0.0
        %674 = vmatpush1.xpose.msra.mxu0 0.0
        %675 = vmatprep.subr.mxu0 0.0
        %676 = vmatpush1.xpose.msra.mxu0 0.0
        %677 = vmatprep.subr.mxu0 0.0
        %678 = vmatpush1.xpose.msra.mxu0 0.0
        %679 = vmatprep.subr.mxu0 0.0
        %680 = vmatpush1.xpose.msra.mxu0 0.0
        %681 = vmatprep.subr.mxu0 0.0
        %682 = vmatpush1.xpose.msra.mxu0 0.0
        %683 = vmatprep.subr.mxu0 0.0
        %684 = vmatpush1.xpose.msra.mxu0 0.0
        %685 = vmatprep.subr.mxu0 0.0
        %686 = vmatpush1.xpose.msra.mxu0 0.0
        %687 = vmatprep.subr.mxu0 0.0
        %688 = vmatpush1.xpose.msra.mxu0 0.0
        %689 = vmatprep.subr.mxu0 0.0
        %690 = vmatpush1.xpose.msra.mxu0 0.0
        %691 = vmatprep.subr.mxu0 0.0
        %692 = vmatpush1.xpose.msra.mxu0 0.0
        %693 = vmatprep.subr.mxu0 0.0
        %694 = vmatpush1.xpose.msra.mxu0 0.0
        %695 = vmatprep.subr.mxu0 0.0
        %696 = vmatpush1.xpose.msra.mxu0 0.0
        %697 = vmatprep.subr.mxu0 0.0
        %698 = vmatpush1.xpose.msra.mxu0 0.0
        %699 = vmatprep.subr.mxu0 0.0
        %700 = vmatpush1.xpose.msra.mxu0 0.0
        %701 = vmatprep.subr.mxu0 0.0
        %702 = vmatpush1.xpose.msra.mxu0 0.0
        %703 = vmatprep.subr.mxu0 0.0
        %704 = vmatpush1.xpose.msra.mxu0 %v671
        %705 = vmatprep.subr.mxu0 0.0
        %706 = vmatpush2.xpose.msra.mxu0 0.0
        %707 = vmatprep.subr.mxu0 0.0
        %708 = vmatpush2.xpose.msra.mxu0 0.0
        %709 = vmatprep.subr.mxu0 0.0
        %710 = vmatpush2.xpose.msra.mxu0 0.0
        %711 = vmatprep.subr.mxu0 0.0
        %712 = vmatpush2.xpose.msra.mxu0 0.0
        %713 = vmatprep.subr.mxu0 0.0
        %714 = vmatpush2.xpose.msra.mxu0 0.0
        %715 = vmatprep.subr.mxu0 0.0
        %716 = vmatpush2.xpose.msra.mxu0 0.0
        %717 = vmatprep.subr.mxu0 0.0
        %718 = vmatpush2.xpose.msra.mxu0 0.0
        %719 = vmatprep.subr.mxu0 0.0
        %720 = vmatpush2.xpose.msra.mxu0 0.0
        %721 = vmatprep.subr.mxu0 0.0
        %722 = vmatpush2.xpose.msra.mxu0 0.0
        %723 = vmatprep.subr.mxu0 0.0
        %724 = vmatpush2.xpose.msra.mxu0 0.0
        %725 = vmatprep.subr.mxu0 0.0
        %726 = vmatpush2.xpose.msra.mxu0 0.0
        %727 = vmatprep.subr.mxu0 0.0
        %728 = vmatpush2.xpose.msra.mxu0 0.0
        %729 = vmatprep.subr.mxu0 0.0
        %730 = vmatpush2.xpose.msra.mxu0 0.0
        %731 = vmatprep.subr.mxu0 0.0
        %732 = vmatpush2.xpose.msra.mxu0 0.0
        %733 = vmatprep.subr.mxu0 0.0
        %734 = vmatpush2.xpose.msra.mxu0 0.0
        %735 = vmatprep.subr.mxu0 0.0
        %736 = vmatpush2.xpose.msra.mxu0 0.0
        %737 = vmatprep.mubr.f32.mxu0 0.0
        %738 = vmatmul.mubr.f32.gmra.mxu0 %v635
        %v739 = vpop.f32.mrf.mxu0
        %v740 = vadd.f32 %v577, %v739
        %v741 = vpop.f32.mrf.mxu0
        %742 = vmatprep.mubr.f32.mxu0 0.0
        %743 = vmatmul.mubr.f32.gmra.mxu0 %v638
        %v744 = vpop.f32.mrf.mxu0
        %v745 = vadd.f32 %v582, %v744
        %v746 = vpop.f32.mrf.mxu0
        %747 = vmatprep.mubr.f32.mxu0 0.0
        %748 = vmatmul.mubr.f32.gmra.mxu0 %v641
        %v749 = vpop.f32.mrf.mxu0
        %v750 = vadd.f32 %v587, %v749
        %v751 = vpop.f32.mrf.mxu0
        %752 = vmatprep.mubr.f32.mxu0 0.0
        %753 = vmatmul.mubr.f32.gmra.mxu0 %v644
        %v754 = vpop.f32.mrf.mxu0
        %v755 = vadd.f32 %v592, %v754
        %v756 = vpop.f32.mrf.mxu0
        %757 = vmatprep.mubr.f32.mxu0 0.0
        %758 = vmatmul.mubr.f32.gmra.mxu0 %v647
        %v759 = vpop.f32.mrf.mxu0
        %v760 = vadd.f32 %v597, %v759
        %v761 = vpop.f32.mrf.mxu0
        %762 = vmatprep.mubr.f32.mxu0 0.0
        %763 = vmatmul.mubr.f32.gmra.mxu0 %v650
        %v764 = vpop.f32.mrf.mxu0
        %v765 = vadd.f32 %v602, %v764
        %v766 = vpop.f32.mrf.mxu0
        %767 = vmatprep.mubr.f32.mxu0 0.0
        %768 = vmatmul.mubr.f32.gmra.mxu0 %v653
        %v769 = vpop.f32.mrf.mxu0
        %v770 = vadd.f32 %v607, %v769
        %v771 = vpop.f32.mrf.mxu0
        %772 = vmatprep.mubr.f32.mxu0 0.0
        %773 = vmatmul.mubr.f32.gmra.mxu0 %v656
        %v774 = vpop.f32.mrf.mxu0
        %v775 = vadd.f32 %v612, %v774
        %v776 = vpop.f32.mrf.mxu0
        %777 = vmatprep.mubr.f32.mxu0 0.0
        %778 = vmatmul.mubr.f32.gmra.mxu0 %v659
        %v779 = vpop.f32.mrf.mxu0
        %v780 = vadd.f32 %v617, %v779
        %v781 = vpop.f32.mrf.mxu0
        %782 = vmatprep.mubr.f32.mxu0 0.0
        %783 = vmatmul.mubr.f32.gmra.mxu0 %v662
        %v784 = vpop.f32.mrf.mxu0
        %v785 = vadd.f32 %v622, %v784
        %v786 = vpop.f32.mrf.mxu0
        %787 = vmatprep.mubr.f32.mxu0 0.0
        %788 = vmatmul.mubr.f32.gmra.mxu0 %v665
        %v789 = vpop.f32.mrf.mxu0
        %v790 = vadd.f32 %v627, %v789
        %v791 = vpop.f32.mrf.mxu0
        %792 = vmatprep.mubr.f32.mxu0 0.0
        %793 = vmatmul.mubr.f32.gmra.mxu0 %v668
        %v794 = vpop.f32.mrf.mxu0
        %v795 = vadd.f32 %v632, %v794
        %v796 = vpop.f32.mrf.mxu0
        %797 = vdwg.mxu0
        %798 = vxpose.xlu0.b32.start [1/16] %v740, 128
        %799 = vxpose.xlu0.b32.cont [2/16] 0.0, 128
        %800 = vxpose.xlu0.b32.cont [3/16] 0.0, 128
        %801 = vxpose.xlu0.b32.cont [4/16] 0.0, 128
        %802 = vxpose.xlu0.b32.cont [5/16] 0.0, 128
        %803 = vxpose.xlu0.b32.cont [6/16] 0.0, 128
        %804 = vxpose.xlu0.b32.cont [7/16] 0.0, 128
        %805 = vxpose.xlu0.b32.cont [8/16] 0.0, 128
        %806 = vxpose.xlu0.b32.cont [9/16] 0.0, 128
        %807 = vxpose.xlu0.b32.cont [10/16] 0.0, 128
        %808 = vxpose.xlu0.b32.cont [11/16] 0.0, 128
        %809 = vxpose.xlu0.b32.cont [12/16] 0.0, 128
        %810 = vxpose.xlu0.b32.cont [13/16] 0.0, 128
        %811 = vxpose.xlu0.b32.cont [14/16] 0.0, 128
        %812 = vxpose.xlu0.b32.cont [15/16] 0.0, 128
        %813 = vxpose.xlu0.b32.end [16/16] 0.0, 128
        %v814 = vpop.trf.xlu0
        %v815 = vpop.trf.xlu0
        %v816 = vpop.trf.xlu0
        %v817 = vpop.trf.xlu0
        %v818 = vpop.trf.xlu0
        %v819 = vpop.trf.xlu0
        %v820 = vpop.trf.xlu0
        %v821 = vpop.trf.xlu0
        %v822 = vpop.trf.xlu0
        %v823 = vpop.trf.xlu0
        %v824 = vpop.trf.xlu0
        %v825 = vpop.trf.xlu0
        %v826 = vpop.trf.xlu0
        %v827 = vpop.trf.xlu0
        %v828 = vpop.trf.xlu0
        %v829 = vpop.trf.xlu0
        %vm830 = vcmask 64512
        %v832 = vsel %vm830, %v814, 0
        %834 = vmatprep.subr.mxu0 0.0
        %835 = vmatpush1.msra.mxu0 0.0
        %836 = vmatprep.subr.mxu0 0.0
        %837 = vmatpush1.msra.mxu0 0.0
        %838 = vmatprep.subr.mxu0 0.0
        %839 = vmatpush1.msra.mxu0 0.0
        %840 = vmatprep.subr.mxu0 0.0
        %841 = vmatpush1.msra.mxu0 0.0
        %842 = vmatprep.subr.mxu0 0.0
        %843 = vmatpush1.msra.mxu0 0.0
        %844 = vmatprep.subr.mxu0 0.0
        %845 = vmatpush1.msra.mxu0 0.0
        %846 = vmatprep.subr.mxu0 0.0
        %847 = vmatpush1.msra.mxu0 0.0
        %848 = vmatprep.subr.mxu0 0.0
        %849 = vmatpush1.msra.mxu0 0.0
        %850 = vmatprep.subr.mxu0 0.0
        %851 = vmatpush1.msra.mxu0 0.0
        %852 = vmatprep.subr.mxu0 0.0
        %853 = vmatpush1.msra.mxu0 0.0
        %854 = vmatprep.subr.mxu0 0.0
        %855 = vmatpush1.msra.mxu0 0.0
        %856 = vmatprep.subr.mxu0 0.0
        %857 = vmatpush1.msra.mxu0 0.0
        %858 = vmatprep.subr.mxu0 0.0
        %859 = vmatpush1.msra.mxu0 0.0
        %860 = vmatprep.subr.mxu0 0.0
        %861 = vmatpush1.msra.mxu0 0.0
        %862 = vmatprep.subr.mxu0 0.0
        %863 = vmatpush1.msra.mxu0 0.0
        %864 = vmatprep.subr.mxu0 0.0
        %865 = vmatpush1.msra.mxu0 %v760
        %866 = vmatprep.subr.mxu0 0.0
        %867 = vmatpush2.msra.mxu0 0.0
        %868 = vmatprep.subr.mxu0 0.0
        %869 = vmatpush2.msra.mxu0 0.0
        %870 = vmatprep.subr.mxu0 0.0
        %871 = vmatpush2.msra.mxu0 0.0
        %872 = vmatprep.subr.mxu0 0.0
        %873 = vmatpush2.msra.mxu0 0.0
        %874 = vmatprep.subr.mxu0 0.0
        %875 = vmatpush2.msra.mxu0 0.0
        %876 = vmatprep.subr.mxu0 0.0
        %877 = vmatpush2.msra.mxu0 0.0
        %878 = vmatprep.subr.mxu0 0.0
        %879 = vmatpush2.msra.mxu0 0.0
        %880 = vmatprep.subr.mxu0 0.0
        %881 = vmatpush2.msra.mxu0 0.0
        %882 = vmatprep.subr.mxu0 0.0
        %883 = vmatpush2.msra.mxu0 0.0
        %884 = vmatprep.subr.mxu0 0.0
        %885 = vmatpush2.msra.mxu0 0.0
        %886 = vmatprep.subr.mxu0 0.0
        %887 = vmatpush2.msra.mxu0 0.0
        %888 = vmatprep.subr.mxu0 0.0
        %889 = vmatpush2.msra.mxu0 0.0
        %890 = vmatprep.subr.mxu0 0.0
        %891 = vmatpush2.msra.mxu0 0.0
        %892 = vmatprep.subr.mxu0 0.0
        %893 = vmatpush2.msra.mxu0 0.0
        %894 = vmatprep.subr.mxu0 0.0
        %895 = vmatpush2.msra.mxu0 0.0
        %896 = vmatprep.subr.mxu0 0.0
        %897 = vmatpush2.msra.mxu0 0.0
        %898 = vmatprep.mubr.f32.mxu0 0.0
        %899 = vmatmul.mubr.f32.gmra.mxu0 %v832
        %v900 = vpop.f32.mrf.mxu0
        %v901 = vadd.f32 0.0, %v900
        %v902 = vpop.f32.mrf.mxu0
        %903 = vdwg.mxu0
        %904 = vxpose.xlu0.b32.start [1/16] %v745, 128
        %905 = vxpose.xlu0.b32.cont [2/16] 0.0, 128
        %906 = vxpose.xlu0.b32.cont [3/16] 0.0, 128
        %907 = vxpose.xlu0.b32.cont [4/16] 0.0, 128
        %908 = vxpose.xlu0.b32.cont [5/16] 0.0, 128
        %909 = vxpose.xlu0.b32.cont [6/16] 0.0, 128
        %910 = vxpose.xlu0.b32.cont [7/16] 0.0, 128
        %911 = vxpose.xlu0.b32.cont [8/16] 0.0, 128
        %912 = vxpose.xlu0.b32.cont [9/16] 0.0, 128
        %913 = vxpose.xlu0.b32.cont [10/16] 0.0, 128
        %914 = vxpose.xlu0.b32.cont [11/16] 0.0, 128
        %915 = vxpose.xlu0.b32.cont [12/16] 0.0, 128
        %916 = vxpose.xlu0.b32.cont [13/16] 0.0, 128
        %917 = vxpose.xlu0.b32.cont [14/16] 0.0, 128
        %918 = vxpose.xlu0.b32.cont [15/16] 0.0, 128
        %919 = vxpose.xlu0.b32.end [16/16] 0.0, 128
        %v920 = vpop.trf.xlu0
        %v921 = vpop.trf.xlu0
        %v922 = vpop.trf.xlu0
        %v923 = vpop.trf.xlu0
        %v924 = vpop.trf.xlu0
        %v925 = vpop.trf.xlu0
        %v926 = vpop.trf.xlu0
        %v927 = vpop.trf.xlu0
        %v928 = vpop.trf.xlu0
        %v929 = vpop.trf.xlu0
        %v930 = vpop.trf.xlu0
        %v931 = vpop.trf.xlu0
        %v932 = vpop.trf.xlu0
        %v933 = vpop.trf.xlu0
        %v934 = vpop.trf.xlu0
        %v935 = vpop.trf.xlu0
        %v937 = vsel %vm830, %v920, 0
        %939 = vmatprep.subr.mxu0 0.0
        %940 = vmatpush1.msra.mxu0 0.0
        %941 = vmatprep.subr.mxu0 0.0
        %942 = vmatpush1.msra.mxu0 0.0
        %943 = vmatprep.subr.mxu0 0.0
        %944 = vmatpush1.msra.mxu0 0.0
        %945 = vmatprep.subr.mxu0 0.0
        %946 = vmatpush1.msra.mxu0 0.0
        %947 = vmatprep.subr.mxu0 0.0
        %948 = vmatpush1.msra.mxu0 0.0
        %949 = vmatprep.subr.mxu0 0.0
        %950 = vmatpush1.msra.mxu0 0.0
        %951 = vmatprep.subr.mxu0 0.0
        %952 = vmatpush1.msra.mxu0 0.0
        %953 = vmatprep.subr.mxu0 0.0
        %954 = vmatpush1.msra.mxu0 0.0
        %955 = vmatprep.subr.mxu0 0.0
        %956 = vmatpush1.msra.mxu0 0.0
        %957 = vmatprep.subr.mxu0 0.0
        %958 = vmatpush1.msra.mxu0 0.0
        %959 = vmatprep.subr.mxu0 0.0
        %960 = vmatpush1.msra.mxu0 0.0
        %961 = vmatprep.subr.mxu0 0.0
        %962 = vmatpush1.msra.mxu0 0.0
        %963 = vmatprep.subr.mxu0 0.0
        %964 = vmatpush1.msra.mxu0 0.0
        %965 = vmatprep.subr.mxu0 0.0
        %966 = vmatpush1.msra.mxu0 0.0
        %967 = vmatprep.subr.mxu0 0.0
        %968 = vmatpush1.msra.mxu0 0.0
        %969 = vmatprep.subr.mxu0 0.0
        %970 = vmatpush1.msra.mxu0 %v765
        %971 = vmatprep.subr.mxu0 0.0
        %972 = vmatpush2.msra.mxu0 0.0
        %973 = vmatprep.subr.mxu0 0.0
        %974 = vmatpush2.msra.mxu0 0.0
        %975 = vmatprep.subr.mxu0 0.0
        %976 = vmatpush2.msra.mxu0 0.0
        %977 = vmatprep.subr.mxu0 0.0
        %978 = vmatpush2.msra.mxu0 0.0
        %979 = vmatprep.subr.mxu0 0.0
        %980 = vmatpush2.msra.mxu0 0.0
        %981 = vmatprep.subr.mxu0 0.0
        %982 = vmatpush2.msra.mxu0 0.0
        %983 = vmatprep.subr.mxu0 0.0
        %984 = vmatpush2.msra.mxu0 0.0
        %985 = vmatprep.subr.mxu0 0.0
        %986 = vmatpush2.msra.mxu0 0.0
        %987 = vmatprep.subr.mxu0 0.0
        %988 = vmatpush2.msra.mxu0 0.0
        %989 = vmatprep.subr.mxu0 0.0
        %990 = vmatpush2.msra.mxu0 0.0
        %991 = vmatprep.subr.mxu0 0.0
        %992 = vmatpush2.msra.mxu0 0.0
        %993 = vmatprep.subr.mxu0 0.0
        %994 = vmatpush2.msra.mxu0 0.0
        %995 = vmatprep.subr.mxu0 0.0
        %996 = vmatpush2.msra.mxu0 0.0
        %997 = vmatprep.subr.mxu0 0.0
        %998 = vmatpush2.msra.mxu0 0.0
        %999 = vmatprep.subr.mxu0 0.0
        %1000 = vmatpush2.msra.mxu0 0.0
        %1001 = vmatprep.subr.mxu0 0.0
        %1002 = vmatpush2.msra.mxu0 0.0
        %1003 = vmatprep.mubr.f32.mxu0 0.0
        %1004 = vmatmul.mubr.f32.gmra.mxu0 %v937
        %v1005 = vpop.f32.mrf.mxu0
        %v1006 = vadd.f32 0.0, %v1005
        %v1007 = vpop.f32.mrf.mxu0
        %1008 = vdwg.mxu0
        %1009 = vxpose.xlu0.b32.start [1/16] %v750, 128
        %1010 = vxpose.xlu0.b32.cont [2/16] 0.0, 128
        %1011 = vxpose.xlu0.b32.cont [3/16] 0.0, 128
        %1012 = vxpose.xlu0.b32.cont [4/16] 0.0, 128
        %1013 = vxpose.xlu0.b32.cont [5/16] 0.0, 128
        %1014 = vxpose.xlu0.b32.cont [6/16] 0.0, 128
        %1015 = vxpose.xlu0.b32.cont [7/16] 0.0, 128
        %1016 = vxpose.xlu0.b32.cont [8/16] 0.0, 128
        %1017 = vxpose.xlu0.b32.cont [9/16] 0.0, 128
        %1018 = vxpose.xlu0.b32.cont [10/16] 0.0, 128
        %1019 = vxpose.xlu0.b32.cont [11/16] 0.0, 128
        %1020 = vxpose.xlu0.b32.cont [12/16] 0.0, 128
        %1021 = vxpose.xlu0.b32.cont [13/16] 0.0, 128
        %1022 = vxpose.xlu0.b32.cont [14/16] 0.0, 128
        %1023 = vxpose.xlu0.b32.cont [15/16] 0.0, 128
        %1024 = vxpose.xlu0.b32.end [16/16] 0.0, 128
        %v1025 = vpop.trf.xlu0
        %v1026 = vpop.trf.xlu0
        %v1027 = vpop.trf.xlu0
        %v1028 = vpop.trf.xlu0
        %v1029 = vpop.trf.xlu0
        %v1030 = vpop.trf.xlu0
        %v1031 = vpop.trf.xlu0
        %v1032 = vpop.trf.xlu0
        %v1033 = vpop.trf.xlu0
        %v1034 = vpop.trf.xlu0
        %v1035 = vpop.trf.xlu0
        %v1036 = vpop.trf.xlu0
        %v1037 = vpop.trf.xlu0
        %v1038 = vpop.trf.xlu0
        %v1039 = vpop.trf.xlu0
        %v1040 = vpop.trf.xlu0
        %v1042 = vsel %vm830, %v1025, 0
        %1044 = vmatprep.subr.mxu0 0.0
        %1045 = vmatpush1.msra.mxu0 0.0
        %1046 = vmatprep.subr.mxu0 0.0
        %1047 = vmatpush1.msra.mxu0 0.0
        %1048 = vmatprep.subr.mxu0 0.0
        %1049 = vmatpush1.msra.mxu0 0.0
        %1050 = vmatprep.subr.mxu0 0.0
        %1051 = vmatpush1.msra.mxu0 0.0
        %1052 = vmatprep.subr.mxu0 0.0
        %1053 = vmatpush1.msra.mxu0 0.0
        %1054 = vmatprep.subr.mxu0 0.0
        %1055 = vmatpush1.msra.mxu0 0.0
        %1056 = vmatprep.subr.mxu0 0.0
        %1057 = vmatpush1.msra.mxu0 0.0
        %1058 = vmatprep.subr.mxu0 0.0
        %1059 = vmatpush1.msra.mxu0 0.0
        %1060 = vmatprep.subr.mxu0 0.0
        %1061 = vmatpush1.msra.mxu0 0.0
        %1062 = vmatprep.subr.mxu0 0.0
        %1063 = vmatpush1.msra.mxu0 0.0
        %1064 = vmatprep.subr.mxu0 0.0
        %1065 = vmatpush1.msra.mxu0 0.0
        %1066 = vmatprep.subr.mxu0 0.0
        %1067 = vmatpush1.msra.mxu0 0.0
        %1068 = vmatprep.subr.mxu0 0.0
        %1069 = vmatpush1.msra.mxu0 0.0
        %1070 = vmatprep.subr.mxu0 0.0
        %1071 = vmatpush1.msra.mxu0 0.0
        %1072 = vmatprep.subr.mxu0 0.0
        %1073 = vmatpush1.msra.mxu0 0.0
        %1074 = vmatprep.subr.mxu0 0.0
        %1075 = vmatpush1.msra.mxu0 %v770
        %1076 = vmatprep.subr.mxu0 0.0
        %1077 = vmatpush2.msra.mxu0 0.0
        %1078 = vmatprep.subr.mxu0 0.0
        %1079 = vmatpush2.msra.mxu0 0.0
        %1080 = vmatprep.subr.mxu0 0.0
        %1081 = vmatpush2.msra.mxu0 0.0
        %1082 = vmatprep.subr.mxu0 0.0
        %1083 = vmatpush2.msra.mxu0 0.0
        %1084 = vmatprep.subr.mxu0 0.0
        %1085 = vmatpush2.msra.mxu0 0.0
        %1086 = vmatprep.subr.mxu0 0.0
        %1087 = vmatpush2.msra.mxu0 0.0
        %1088 = vmatprep.subr.mxu0 0.0
        %1089 = vmatpush2.msra.mxu0 0.0
        %1090 = vmatprep.subr.mxu0 0.0
        %1091 = vmatpush2.msra.mxu0 0.0
        %1092 = vmatprep.subr.mxu0 0.0
        %1093 = vmatpush2.msra.mxu0 0.0
        %1094 = vmatprep.subr.mxu0 0.0
        %1095 = vmatpush2.msra.mxu0 0.0
        %1096 = vmatprep.subr.mxu0 0.0
        %1097 = vmatpush2.msra.mxu0 0.0
        %1098 = vmatprep.subr.mxu0 0.0
        %1099 = vmatpush2.msra.mxu0 0.0
        %1100 = vmatprep.subr.mxu0 0.0
        %1101 = vmatpush2.msra.mxu0 0.0
        %1102 = vmatprep.subr.mxu0 0.0
        %1103 = vmatpush2.msra.mxu0 0.0
        %1104 = vmatprep.subr.mxu0 0.0
        %1105 = vmatpush2.msra.mxu0 0.0
        %1106 = vmatprep.subr.mxu0 0.0
        %1107 = vmatpush2.msra.mxu0 0.0
        %1108 = vmatprep.mubr.f32.mxu0 0.0
        %1109 = vmatmul.mubr.f32.gmra.mxu0 %v1042
        %v1110 = vpop.f32.mrf.mxu0
        %v1111 = vadd.f32 0.0, %v1110
        %v1112 = vpop.f32.mrf.mxu0
        %1113 = vdwg.mxu0
        %1114 = vxpose.xlu0.b32.start [1/16] %v755, 128
        %1115 = vxpose.xlu0.b32.cont [2/16] 0.0, 128
        %1116 = vxpose.xlu0.b32.cont [3/16] 0.0, 128
        %1117 = vxpose.xlu0.b32.cont [4/16] 0.0, 128
        %1118 = vxpose.xlu0.b32.cont [5/16] 0.0, 128
        %1119 = vxpose.xlu0.b32.cont [6/16] 0.0, 128
        %1120 = vxpose.xlu0.b32.cont [7/16] 0.0, 128
        %1121 = vxpose.xlu0.b32.cont [8/16] 0.0, 128
        %1122 = vxpose.xlu0.b32.cont [9/16] 0.0, 128
        %1123 = vxpose.xlu0.b32.cont [10/16] 0.0, 128
        %1124 = vxpose.xlu0.b32.cont [11/16] 0.0, 128
        %1125 = vxpose.xlu0.b32.cont [12/16] 0.0, 128
        %1126 = vxpose.xlu0.b32.cont [13/16] 0.0, 128
        %1127 = vxpose.xlu0.b32.cont [14/16] 0.0, 128
        %1128 = vxpose.xlu0.b32.cont [15/16] 0.0, 128
        %1129 = vxpose.xlu0.b32.end [16/16] 0.0, 128
        %v1130 = vpop.trf.xlu0
        %v1131 = vpop.trf.xlu0
        %v1132 = vpop.trf.xlu0
        %v1133 = vpop.trf.xlu0
        %v1134 = vpop.trf.xlu0
        %v1135 = vpop.trf.xlu0
        %v1136 = vpop.trf.xlu0
        %v1137 = vpop.trf.xlu0
        %v1138 = vpop.trf.xlu0
        %v1139 = vpop.trf.xlu0
        %v1140 = vpop.trf.xlu0
        %v1141 = vpop.trf.xlu0
        %v1142 = vpop.trf.xlu0
        %v1143 = vpop.trf.xlu0
        %v1144 = vpop.trf.xlu0
        %v1145 = vpop.trf.xlu0
        %v1147 = vsel %vm830, %v1130, 0
        %1149 = vmatprep.subr.mxu0 0.0
        %1150 = vmatpush1.msra.mxu0 0.0
        %1151 = vmatprep.subr.mxu0 0.0
        %1152 = vmatpush1.msra.mxu0 0.0
        %1153 = vmatprep.subr.mxu0 0.0
        %1154 = vmatpush1.msra.mxu0 0.0
        %1155 = vmatprep.subr.mxu0 0.0
        %1156 = vmatpush1.msra.mxu0 0.0
        %1157 = vmatprep.subr.mxu0 0.0
        %1158 = vmatpush1.msra.mxu0 0.0
        %1159 = vmatprep.subr.mxu0 0.0
        %1160 = vmatpush1.msra.mxu0 0.0
        %1161 = vmatprep.subr.mxu0 0.0
        %1162 = vmatpush1.msra.mxu0 0.0
        %1163 = vmatprep.subr.mxu0 0.0
        %1164 = vmatpush1.msra.mxu0 0.0
        %1165 = vmatprep.subr.mxu0 0.0
        %1166 = vmatpush1.msra.mxu0 0.0
        %1167 = vmatprep.subr.mxu0 0.0
        %1168 = vmatpush1.msra.mxu0 0.0
        %1169 = vmatprep.subr.mxu0 0.0
        %1170 = vmatpush1.msra.mxu0 0.0
        %1171 = vmatprep.subr.mxu0 0.0
        %1172 = vmatpush1.msra.mxu0 0.0
        %1173 = vmatprep.subr.mxu0 0.0
        %1174 = vmatpush1.msra.mxu0 0.0
        %1175 = vmatprep.subr.mxu0 0.0
        %1176 = vmatpush1.msra.mxu0 0.0
        %1177 = vmatprep.subr.mxu0 0.0
        %1178 = vmatpush1.msra.mxu0 0.0
        %1179 = vmatprep.subr.mxu0 0.0
        %1180 = vmatpush1.msra.mxu0 %v775
        %1181 = vmatprep.subr.mxu0 0.0
        %1182 = vmatpush2.msra.mxu0 0.0
        %1183 = vmatprep.subr.mxu0 0.0
        %1184 = vmatpush2.msra.mxu0 0.0
        %1185 = vmatprep.subr.mxu0 0.0
        %1186 = vmatpush2.msra.mxu0 0.0
        %1187 = vmatprep.subr.mxu0 0.0
        %1188 = vmatpush2.msra.mxu0 0.0
        %1189 = vmatprep.subr.mxu0 0.0
        %1190 = vmatpush2.msra.mxu0 0.0
        %1191 = vmatprep.subr.mxu0 0.0
        %1192 = vmatpush2.msra.mxu0 0.0
        %1193 = vmatprep.subr.mxu0 0.0
        %1194 = vmatpush2.msra.mxu0 0.0
        %1195 = vmatprep.subr.mxu0 0.0
        %1196 = vmatpush2.msra.mxu0 0.0
        %1197 = vmatprep.subr.mxu0 0.0
        %1198 = vmatpush2.msra.mxu0 0.0
        %1199 = vmatprep.subr.mxu0 0.0
        %1200 = vmatpush2.msra.mxu0 0.0
        %1201 = vmatprep.subr.mxu0 0.0
        %1202 = vmatpush2.msra.mxu0 0.0
        %1203 = vmatprep.subr.mxu0 0.0
        %1204 = vmatpush2.msra.mxu0 0.0
        %1205 = vmatprep.subr.mxu0 0.0
        %1206 = vmatpush2.msra.mxu0 0.0
        %1207 = vmatprep.subr.mxu0 0.0
        %1208 = vmatpush2.msra.mxu0 0.0
        %1209 = vmatprep.subr.mxu0 0.0
        %1210 = vmatpush2.msra.mxu0 0.0
        %1211 = vmatprep.subr.mxu0 0.0
        %1212 = vmatpush2.msra.mxu0 0.0
        %1213 = vmatprep.mubr.f32.mxu0 0.0
        %1214 = vmatmul.mubr.f32.gmra.mxu0 %v1147
        %v1215 = vpop.f32.mrf.mxu0
        %v1216 = vadd.f32 0.0, %v1215
        %v1217 = vpop.f32.mrf.mxu0
        %1218 = vdwg.mxu0
        %v1219 = vmul.f32 %v901, 0.35355338
        %v1220 = vmul.f32 %v1006, 0.35355338
        %v1221 = vmul.f32 %v1111, 0.35355338
        %v1222 = vmul.f32 %v1216, 0.35355338
        %v1224 = vlaneseq
        %v1225 = vshrl.u32 %v1224, 7
        %v1226 = vsub.s32 0, %v1225
        %v1227 = vrot.slane %v523, %v1226
        %v1229 = vadd.f32 %v1219, %v1227
        %v1230 = vadd.f32 %v1220, %v1227
        %v1231 = vadd.f32 %v1221, %v1227
        %v1232 = vadd.f32 %v1222, %v1227
        %v1233 = vsel %vm830, %v1229, -inf
        %1234 = vmax.xlane.f32.xlu0 %v1233
        %v1235 = vpop.xlane.xlu0 %1234
        %v1236 = vsel %vm830, %v1230, -inf
        %1237 = vmax.xlane.f32.xlu0 %v1236
        %v1238 = vpop.xlane.xlu0 %1237
        %v1239 = vsel %vm830, %v1231, -inf
        %1240 = vmax.xlane.f32.xlu0 %v1239
        %v1241 = vpop.xlane.xlu0 %1240
        %v1242 = vsel %vm830, %v1232, -inf
        %1243 = vmax.xlane.f32.xlu0 %v1242
        %v1244 = vpop.xlane.xlu0 %1243
        %v1245 = vsub.f32 %v1229, %v1235
        %v1246 = vsub.f32 %v1230, %v1238
        %v1247 = vsub.f32 %v1231, %v1241
        %v1248 = vsub.f32 %v1232, %v1244
        %v1249 = vmul.f32 %v1245, 1.442695
        %v1250 = vpow.pop %v1249
        %v1251 = vmul.f32 %v1246, 1.442695
        %v1252 = vpow.pop %v1251
        %v1253 = vmul.f32 %v1247, 1.442695
        %v1254 = vpow.pop %v1253
        %v1255 = vmul.f32 %v1248, 1.442695
        %v1256 = vpow.pop %v1255
        %v1257 = vsel %vm830, %v1250, 0.0
        %1258 = vadd.xlane.f32.xlu0 %v1257
        %v1259 = vpop.xlane.xlu0 %1258
        %v1260 = vsel %vm830, %v1252, 0.0
        %1261 = vadd.xlane.f32.xlu0 %v1260
        %v1262 = vpop.xlane.xlu0 %1261
        %v1263 = vsel %vm830, %v1254, 0.0
        %1264 = vadd.xlane.f32.xlu0 %v1263
        %v1265 = vpop.xlane.xlu0 %1264
        %v1266 = vsel %vm830, %v1256, 0.0
        %1267 = vadd.xlane.f32.xlu0 %v1266
        %v1268 = vpop.xlane.xlu0 %1267
        %v1269 = vrcp.pop %v1259
        %v1270 = vmul.f32 %v1250, %v1269
        %v1271 = vrcp.pop %v1262
        %v1272 = vmul.f32 %v1252, %v1271
        %v1273 = vrcp.pop %v1265
        %v1274 = vmul.f32 %v1254, %v1273
        %v1275 = vrcp.pop %v1268
        %v1276 = vmul.f32 %v1256, %v1275
        %v1278 = vsel %vm830, %v780, 0
        %v1281 = vsel %vm830, %v1270, 0
        %1283 = vmatprep.subr.mxu0 0.0
        %1284 = vmatpush1.xpose.msra.mxu0 0.0
        %1285 = vmatprep.subr.mxu0 0.0
        %1286 = vmatpush1.xpose.msra.mxu0 0.0
        %1287 = vmatprep.subr.mxu0 0.0
        %1288 = vmatpush1.xpose.msra.mxu0 0.0
        %1289 = vmatprep.subr.mxu0 0.0
        %1290 = vmatpush1.xpose.msra.mxu0 0.0
        %1291 = vmatprep.subr.mxu0 0.0
        %1292 = vmatpush1.xpose.msra.mxu0 0.0
        %1293 = vmatprep.subr.mxu0 0.0
        %1294 = vmatpush1.xpose.msra.mxu0 0.0
        %1295 = vmatprep.subr.mxu0 0.0
        %1296 = vmatpush1.xpose.msra.mxu0 0.0
        %1297 = vmatprep.subr.mxu0 0.0
        %1298 = vmatpush1.xpose.msra.mxu0 0.0
        %1299 = vmatprep.subr.mxu0 0.0
        %1300 = vmatpush1.xpose.msra.mxu0 0.0
        %1301 = vmatprep.subr.mxu0 0.0
        %1302 = vmatpush1.xpose.msra.mxu0 0.0
        %1303 = vmatprep.subr.mxu0 0.0
        %1304 = vmatpush1.xpose.msra.mxu0 0.0
        %1305 = vmatprep.subr.mxu0 0.0
        %1306 = vmatpush1.xpose.msra.mxu0 0.0
        %1307 = vmatprep.subr.mxu0 0.0
        %1308 = vmatpush1.xpose.msra.mxu0 0.0
        %1309 = vmatprep.subr.mxu0 0.0
        %1310 = vmatpush1.xpose.msra.mxu0 0.0
        %1311 = vmatprep.subr.mxu0 0.0
        %1312 = vmatpush1.xpose.msra.mxu0 0.0
        %1313 = vmatprep.subr.mxu0 0.0
        %1314 = vmatpush1.xpose.msra.mxu0 %v1281
        %1315 = vmatprep.subr.mxu0 0.0
        %1316 = vmatpush2.xpose.msra.mxu0 0.0
        %1317 = vmatprep.subr.mxu0 0.0
        %1318 = vmatpush2.xpose.msra.mxu0 0.0
        %1319 = vmatprep.subr.mxu0 0.0
        %1320 = vmatpush2.xpose.msra.mxu0 0.0
        %1321 = vmatprep.subr.mxu0 0.0
        %1322 = vmatpush2.xpose.msra.mxu0 0.0
        %1323 = vmatprep.subr.mxu0 0.0
        %1324 = vmatpush2.xpose.msra.mxu0 0.0
        %1325 = vmatprep.subr.mxu0 0.0
        %1326 = vmatpush2.xpose.msra.mxu0 0.0
        %1327 = vmatprep.subr.mxu0 0.0
        %1328 = vmatpush2.xpose.msra.mxu0 0.0
        %1329 = vmatprep.subr.mxu0 0.0
        %1330 = vmatpush2.xpose.msra.mxu0 0.0
        %1331 = vmatprep.subr.mxu0 0.0
        %1332 = vmatpush2.xpose.msra.mxu0 0.0
        %1333 = vmatprep.subr.mxu0 0.0
        %1334 = vmatpush2.xpose.msra.mxu0 0.0
        %1335 = vmatprep.subr.mxu0 0.0
        %1336 = vmatpush2.xpose.msra.mxu0 0.0
        %1337 = vmatprep.subr.mxu0 0.0
        %1338 = vmatpush2.xpose.msra.mxu0 0.0
        %1339 = vmatprep.subr.mxu0 0.0
        %1340 = vmatpush2.xpose.msra.mxu0 0.0
        %1341 = vmatprep.subr.mxu0 0.0
        %1342 = vmatpush2.xpose.msra.mxu0 0.0
        %1343 = vmatprep.subr.mxu0 0.0
        %1344 = vmatpush2.xpose.msra.mxu0 0.0
        %1345 = vmatprep.subr.mxu0 0.0
        %1346 = vmatpush2.xpose.msra.mxu0 0.0
        %1347 = vmatprep.mubr.f32.mxu0 0.0
        %1348 = vmatmul.mubr.f32.gmra.mxu0 %v1278
        %v1349 = vpop.f32.mrf.mxu0
        %v1350 = vadd.f32 0.0, %v1349
        %v1351 = vpop.f32.mrf.mxu0
        %1352 = vdwg.mxu0
        %v1354 = vsel %vm830, %v785, 0
        %v1357 = vsel %vm830, %v1272, 0
        %1359 = vmatprep.subr.mxu0 0.0
        %1360 = vmatpush1.xpose.msra.mxu0 0.0
        %1361 = vmatprep.subr.mxu0 0.0
        %1362 = vmatpush1.xpose.msra.mxu0 0.0
        %1363 = vmatprep.subr.mxu0 0.0
        %1364 = vmatpush1.xpose.msra.mxu0 0.0
        %1365 = vmatprep.subr.mxu0 0.0
        %1366 = vmatpush1.xpose.msra.mxu0 0.0
        %1367 = vmatprep.subr.mxu0 0.0
        %1368 = vmatpush1.xpose.msra.mxu0 0.0
        %1369 = vmatprep.subr.mxu0 0.0
        %1370 = vmatpush1.xpose.msra.mxu0 0.0
        %1371 = vmatprep.subr.mxu0 0.0
        %1372 = vmatpush1.xpose.msra.mxu0 0.0
        %1373 = vmatprep.subr.mxu0 0.0
        %1374 = vmatpush1.xpose.msra.mxu0 0.0
        %1375 = vmatprep.subr.mxu0 0.0
        %1376 = vmatpush1.xpose.msra.mxu0 0.0
        %1377 = vmatprep.subr.mxu0 0.0
        %1378 = vmatpush1.xpose.msra.mxu0 0.0
        %1379 = vmatprep.subr.mxu0 0.0
        %1380 = vmatpush1.xpose.msra.mxu0 0.0
        %1381 = vmatprep.subr.mxu0 0.0
        %1382 = vmatpush1.xpose.msra.mxu0 0.0
        %1383 = vmatprep.subr.mxu0 0.0
        %1384 = vmatpush1.xpose.msra.mxu0 0.0
        %1385 = vmatprep.subr.mxu0 0.0
        %1386 = vmatpush1.xpose.msra.mxu0 0.0
        %1387 = vmatprep.subr.mxu0 0.0
        %1388 = vmatpush1.xpose.msra.mxu0 0.0
        %1389 = vmatprep.subr.mxu0 0.0
        %1390 = vmatpush1.xpose.msra.mxu0 %v1357
        %1391 = vmatprep.subr.mxu0 0.0
        %1392 = vmatpush2.xpose.msra.mxu0 0.0
        %1393 = vmatprep.subr.mxu0 0.0
        %1394 = vmatpush2.xpose.msra.mxu0 0.0
        %1395 = vmatprep.subr.mxu0 0.0
        %1396 = vmatpush2.xpose.msra.mxu0 0.0
        %1397 = vmatprep.subr.mxu0 0.0
        %1398 = vmatpush2.xpose.msra.mxu0 0.0
        %1399 = vmatprep.subr.mxu0 0.0
        %1400 = vmatpush2.xpose.msra.mxu0 0.0
        %1401 = vmatprep.subr.mxu0 0.0
        %1402 = vmatpush2.xpose.msra.mxu0 0.0
        %1403 = vmatprep.subr.mxu0 0.0
        %1404 = vmatpush2.xpose.msra.mxu0 0.0
        %1405 = vmatprep.subr.mxu0 0.0
        %1406 = vmatpush2.xpose.msra.mxu0 0.0
        %1407 = vmatprep.subr.mxu0 0.0
        %1408 = vmatpush2.xpose.msra.mxu0 0.0
        %1409 = vmatprep.subr.mxu0 0.0
        %1410 = vmatpush2.xpose.msra.mxu0 0.0
        %1411 = vmatprep.subr.mxu0 0.0
        %1412 = vmatpush2.xpose.msra.mxu0 0.0
        %1413 = vmatprep.subr.mxu0 0.0
        %1414 = vmatpush2.xpose.msra.mxu0 0.0
        %1415 = vmatprep.subr.mxu0 0.0
        %1416 = vmatpush2.xpose.msra.mxu0 0.0
        %1417 = vmatprep.subr.mxu0 0.0
        %1418 = vmatpush2.xpose.msra.mxu0 0.0
        %1419 = vmatprep.subr.mxu0 0.0
        %1420 = vmatpush2.xpose.msra.mxu0 0.0
        %1421 = vmatprep.subr.mxu0 0.0
        %1422 = vmatpush2.xpose.msra.mxu0 0.0
        %1423 = vmatprep.mubr.f32.mxu0 0.0
        %1424 = vmatmul.mubr.f32.gmra.mxu0 %v1354
        %v1425 = vpop.f32.mrf.mxu0
        %v1426 = vadd.f32 0.0, %v1425
        %v1427 = vpop.f32.mrf.mxu0
        %1428 = vdwg.mxu0
        %v1430 = vsel %vm830, %v790, 0
        %v1433 = vsel %vm830, %v1274, 0
        %1435 = vmatprep.subr.mxu0 0.0
        %1436 = vmatpush1.xpose.msra.mxu0 0.0
        %1437 = vmatprep.subr.mxu0 0.0
        %1438 = vmatpush1.xpose.msra.mxu0 0.0
        %1439 = vmatprep.subr.mxu0 0.0
        %1440 = vmatpush1.xpose.msra.mxu0 0.0
        %1441 = vmatprep.subr.mxu0 0.0
        %1442 = vmatpush1.xpose.msra.mxu0 0.0
        %1443 = vmatprep.subr.mxu0 0.0
        %1444 = vmatpush1.xpose.msra.mxu0 0.0
        %1445 = vmatprep.subr.mxu0 0.0
        %1446 = vmatpush1.xpose.msra.mxu0 0.0
        %1447 = vmatprep.subr.mxu0 0.0
        %1448 = vmatpush1.xpose.msra.mxu0 0.0
        %1449 = vmatprep.subr.mxu0 0.0
        %1450 = vmatpush1.xpose.msra.mxu0 0.0
        %1451 = vmatprep.subr.mxu0 0.0
        %1452 = vmatpush1.xpose.msra.mxu0 0.0
        %1453 = vmatprep.subr.mxu0 0.0
        %1454 = vmatpush1.xpose.msra.mxu0 0.0
        %1455 = vmatprep.subr.mxu0 0.0
        %1456 = vmatpush1.xpose.msra.mxu0 0.0
        %1457 = vmatprep.subr.mxu0 0.0
        %1458 = vmatpush1.xpose.msra.mxu0 0.0
        %1459 = vmatprep.subr.mxu0 0.0
        %1460 = vmatpush1.xpose.msra.mxu0 0.0
        %1461 = vmatprep.subr.mxu0 0.0
        %1462 = vmatpush1.xpose.msra.mxu0 0.0
        %1463 = vmatprep.subr.mxu0 0.0
        %1464 = vmatpush1.xpose.msra.mxu0 0.0
        %1465 = vmatprep.subr.mxu0 0.0
        %1466 = vmatpush1.xpose.msra.mxu0 %v1433
        %1467 = vmatprep.subr.mxu0 0.0
        %1468 = vmatpush2.xpose.msra.mxu0 0.0
        %1469 = vmatprep.subr.mxu0 0.0
        %1470 = vmatpush2.xpose.msra.mxu0 0.0
        %1471 = vmatprep.subr.mxu0 0.0
        %1472 = vmatpush2.xpose.msra.mxu0 0.0
        %1473 = vmatprep.subr.mxu0 0.0
        %1474 = vmatpush2.xpose.msra.mxu0 0.0
        %1475 = vmatprep.subr.mxu0 0.0
        %1476 = vmatpush2.xpose.msra.mxu0 0.0
        %1477 = vmatprep.subr.mxu0 0.0
        %1478 = vmatpush2.xpose.msra.mxu0 0.0
        %1479 = vmatprep.subr.mxu0 0.0
        %1480 = vmatpush2.xpose.msra.mxu0 0.0
        %1481 = vmatprep.subr.mxu0 0.0
        %1482 = vmatpush2.xpose.msra.mxu0 0.0
        %1483 = vmatprep.subr.mxu0 0.0
        %1484 = vmatpush2.xpose.msra.mxu0 0.0
        %1485 = vmatprep.subr.mxu0 0.0
        %1486 = vmatpush2.xpose.msra.mxu0 0.0
        %1487 = vmatprep.subr.mxu0 0.0
        %1488 = vmatpush2.xpose.msra.mxu0 0.0
        %1489 = vmatprep.subr.mxu0 0.0
        %1490 = vmatpush2.xpose.msra.mxu0 0.0
        %1491 = vmatprep.subr.mxu0 0.0
        %1492 = vmatpush2.xpose.msra.mxu0 0.0
        %1493 = vmatprep.subr.mxu0 0.0
        %1494 = vmatpush2.xpose.msra.mxu0 0.0
        %1495 = vmatprep.subr.mxu0 0.0
        %1496 = vmatpush2.xpose.msra.mxu0 0.0
        %1497 = vmatprep.subr.mxu0 0.0
        %1498 = vmatpush2.xpose.msra.mxu0 0.0
        %1499 = vmatprep.mubr.f32.mxu0 0.0
        %1500 = vmatmul.mubr.f32.gmra.mxu0 %v1430
        %v1501 = vpop.f32.mrf.mxu0
        %v1502 = vadd.f32 0.0, %v1501
        %v1503 = vpop.f32.mrf.mxu0
        %1504 = vdwg.mxu0
        %v1506 = vsel %vm830, %v795, 0
        %v1509 = vsel %vm830, %v1276, 0
        %1511 = vmatprep.subr.mxu0 0.0
        %1512 = vmatpush1.xpose.msra.mxu0 0.0
        %1513 = vmatprep.subr.mxu0 0.0
        %1514 = vmatpush1.xpose.msra.mxu0 0.0
        %1515 = vmatprep.subr.mxu0 0.0
        %1516 = vmatpush1.xpose.msra.mxu0 0.0
        %1517 = vmatprep.subr.mxu0 0.0
        %1518 = vmatpush1.xpose.msra.mxu0 0.0
        %1519 = vmatprep.subr.mxu0 0.0
        %1520 = vmatpush1.xpose.msra.mxu0 0.0
        %1521 = vmatprep.subr.mxu0 0.0
        %1522 = vmatpush1.xpose.msra.mxu0 0.0
        %1523 = vmatprep.subr.mxu0 0.0
        %1524 = vmatpush1.xpose.msra.mxu0 0.0
        %1525 = vmatprep.subr.mxu0 0.0
        %1526 = vmatpush1.xpose.msra.mxu0 0.0
        %1527 = vmatprep.subr.mxu0 0.0
        %1528 = vmatpush1.xpose.msra.mxu0 0.0
        %1529 = vmatprep.subr.mxu0 0.0
        %1530 = vmatpush1.xpose.msra.mxu0 0.0
        %1531 = vmatprep.subr.mxu0 0.0
        %1532 = vmatpush1.xpose.msra.mxu0 0.0
        %1533 = vmatprep.subr.mxu0 0.0
        %1534 = vmatpush1.xpose.msra.mxu0 0.0
        %1535 = vmatprep.subr.mxu0 0.0
        %1536 = vmatpush1.xpose.msra.mxu0 0.0
        %1537 = vmatprep.subr.mxu0 0.0
        %1538 = vmatpush1.xpose.msra.mxu0 0.0
        %1539 = vmatprep.subr.mxu0 0.0
        %1540 = vmatpush1.xpose.msra.mxu0 0.0
        %1541 = vmatprep.subr.mxu0 0.0
        %1542 = vmatpush1.xpose.msra.mxu0 %v1509
        %1543 = vmatprep.subr.mxu0 0.0
        %1544 = vmatpush2.xpose.msra.mxu0 0.0
        %1545 = vmatprep.subr.mxu0 0.0
        %1546 = vmatpush2.xpose.msra.mxu0 0.0
        %1547 = vmatprep.subr.mxu0 0.0
        %1548 = vmatpush2.xpose.msra.mxu0 0.0
        %1549 = vmatprep.subr.mxu0 0.0
        %1550 = vmatpush2.xpose.msra.mxu0 0.0
        %1551 = vmatprep.subr.mxu0 0.0
        %1552 = vmatpush2.xpose.msra.mxu0 0.0
        %1553 = vmatprep.subr.mxu0 0.0
        %1554 = vmatpush2.xpose.msra.mxu0 0.0
        %1555 = vmatprep.subr.mxu0 0.0
        %1556 = vmatpush2.xpose.msra.mxu0 0.0
        %1557 = vmatprep.subr.mxu0 0.0
        %1558 = vmatpush2.xpose.msra.mxu0 0.0
        %1559 = vmatprep.subr.mxu0 0.0
        %1560 = vmatpush2.xpose.msra.mxu0 0.0
        %1561 = vmatprep.subr.mxu0 0.0
        %1562 = vmatpush2.xpose.msra.mxu0 0.0
        %1563 = vmatprep.subr.mxu0 0.0
        %1564 = vmatpush2.xpose.msra.mxu0 0.0
        %1565 = vmatprep.subr.mxu0 0.0
        %1566 = vmatpush2.xpose.msra.mxu0 0.0
        %1567 = vmatprep.subr.mxu0 0.0
        %1568 = vmatpush2.xpose.msra.mxu0 0.0
        %1569 = vmatprep.subr.mxu0 0.0
        %1570 = vmatpush2.xpose.msra.mxu0 0.0
        %1571 = vmatprep.subr.mxu0 0.0
        %1572 = vmatpush2.xpose.msra.mxu0 0.0
        %1573 = vmatprep.subr.mxu0 0.0
        %1574 = vmatpush2.xpose.msra.mxu0 0.0
        %1575 = vmatprep.mubr.f32.mxu0 0.0
        %1576 = vmatmul.mubr.f32.gmra.mxu0 %v1506
        %v1577 = vpop.f32.mrf.mxu0
        %v1578 = vadd.f32 0.0, %v1577
        %v1579 = vpop.f32.mrf.mxu0
        %1580 = vdwg.mxu0
        %v1581 = vld [vmem:[%s6] sm:$0xff]
        %v1582 = vld [vmem:[%s6 + $0x8] sm:$0xff]
        %v1583 = vld [vmem:[%s6 + $0x10] sm:$0xff]
        %v1584 = vld [vmem:[%s6 + $0x18] sm:$0xff]
        %1585 = vxpose.xlu0.b32.start [1/16] %v1350, 128
        %1586 = vxpose.xlu0.b32.cont [2/16] %v1426, 128
        %1587 = vxpose.xlu0.b32.cont [3/16] %v1502, 128
        %1588 = vxpose.xlu0.b32.cont [4/16] %v1578, 128
        %1589 = vxpose.xlu0.b32.cont [5/16] 0.0, 128
        %1590 = vxpose.xlu0.b32.cont [6/16] 0.0, 128
        %1591 = vxpose.xlu0.b32.cont [7/16] 0.0, 128
        %1592 = vxpose.xlu0.b32.cont [8/16] 0.0, 128
        %1593 = vxpose.xlu0.b32.cont [9/16] 0.0, 128
        %1594 = vxpose.xlu0.b32.cont [10/16] 0.0, 128
        %1595 = vxpose.xlu0.b32.cont [11/16] 0.0, 128
        %1596 = vxpose.xlu0.b32.cont [12/16] 0.0, 128
        %1597 = vxpose.xlu0.b32.cont [13/16] 0.0, 128
        %1598 = vxpose.xlu0.b32.cont [14/16] 0.0, 128
        %1599 = vxpose.xlu0.b32.cont [15/16] 0.0, 128
        %1600 = vxpose.xlu0.b32.end [16/16] 0.0, 128
        %v1601 = vpop.trf.xlu0
        %v1602 = vpop.trf.xlu0
        %v1603 = vpop.trf.xlu0
        %v1604 = vpop.trf.xlu0
        %v1605 = vpop.trf.xlu0
        %v1606 = vpop.trf.xlu0
        %v1607 = vpop.trf.xlu0
        %v1608 = vpop.trf.xlu0
        %v1609 = vpop.trf.xlu0
        %v1610 = vpop.trf.xlu0
        %v1611 = vpop.trf.xlu0
        %v1612 = vpop.trf.xlu0
        %v1613 = vpop.trf.xlu0
        %v1614 = vpop.trf.xlu0
        %v1615 = vpop.trf.xlu0
        %v1616 = vpop.trf.xlu0
        %v1618 = vsel %vm525, %v1601, 0
        %1620 = vmatprep.subr.mxu0 0.0
        %1621 = vmatpush1.msra.mxu0 0.0
        %1622 = vmatprep.subr.mxu0 0.0
        %1623 = vmatpush1.msra.mxu0 0.0
        %1624 = vmatprep.subr.mxu0 0.0
        %1625 = vmatpush1.msra.mxu0 0.0
        %1626 = vmatprep.subr.mxu0 0.0
        %1627 = vmatpush1.msra.mxu0 0.0
        %1628 = vmatprep.subr.mxu0 0.0
        %1629 = vmatpush1.msra.mxu0 0.0
        %1630 = vmatprep.subr.mxu0 0.0
        %1631 = vmatpush1.msra.mxu0 0.0
        %1632 = vmatprep.subr.mxu0 0.0
        %1633 = vmatpush1.msra.mxu0 0.0
        %1634 = vmatprep.subr.mxu0 0.0
        %1635 = vmatpush1.msra.mxu0 0.0
        %1636 = vmatprep.subr.mxu0 0.0
        %1637 = vmatpush1.msra.mxu0 0.0
        %1638 = vmatprep.subr.mxu0 0.0
        %1639 = vmatpush1.msra.mxu0 0.0
        %1640 = vmatprep.subr.mxu0 0.0
        %1641 = vmatpush1.msra.mxu0 0.0
        %1642 = vmatprep.subr.mxu0 0.0
        %1643 = vmatpush1.msra.mxu0 0.0
        %1644 = vmatprep.subr.mxu0 0.0
        %1645 = vmatpush1.msra.mxu0 %v1584
        %1646 = vmatprep.subr.mxu0 0.0
        %1647 = vmatpush1.msra.mxu0 %v1583
        %1648 = vmatprep.subr.mxu0 0.0
        %1649 = vmatpush1.msra.mxu0 %v1582
        %1650 = vmatprep.subr.mxu0 0.0
        %1651 = vmatpush1.msra.mxu0 %v1581
        %1652 = vmatprep.subr.mxu0 0.0
        %1653 = vmatpush2.msra.mxu0 0.0
        %1654 = vmatprep.subr.mxu0 0.0
        %1655 = vmatpush2.msra.mxu0 0.0
        %1656 = vmatprep.subr.mxu0 0.0
        %1657 = vmatpush2.msra.mxu0 0.0
        %1658 = vmatprep.subr.mxu0 0.0
        %1659 = vmatpush2.msra.mxu0 0.0
        %1660 = vmatprep.subr.mxu0 0.0
        %1661 = vmatpush2.msra.mxu0 0.0
        %1662 = vmatprep.subr.mxu0 0.0
        %1663 = vmatpush2.msra.mxu0 0.0
        %1664 = vmatprep.subr.mxu0 0.0
        %1665 = vmatpush2.msra.mxu0 0.0
        %1666 = vmatprep.subr.mxu0 0.0
        %1667 = vmatpush2.msra.mxu0 0.0
        %1668 = vmatprep.subr.mxu0 0.0
        %1669 = vmatpush2.msra.mxu0 0.0
        %1670 = vmatprep.subr.mxu0 0.0
        %1671 = vmatpush2.msra.mxu0 0.0
        %1672 = vmatprep.subr.mxu0 0.0
        %1673 = vmatpush2.msra.mxu0 0.0
        %1674 = vmatprep.subr.mxu0 0.0
        %1675 = vmatpush2.msra.mxu0 0.0
        %1676 = vmatprep.subr.mxu0 0.0
        %1677 = vmatpush2.msra.mxu0 0.0
        %1678 = vmatprep.subr.mxu0 0.0
        %1679 = vmatpush2.msra.mxu0 0.0
        %1680 = vmatprep.subr.mxu0 0.0
        %1681 = vmatpush2.msra.mxu0 0.0
        %1682 = vmatprep.subr.mxu0 0.0
        %1683 = vmatpush2.msra.mxu0 0.0
        %1684 = vmatprep.mubr.f32.mxu0 0.0
        %1685 = vmatmul.mubr.f32.gmra.mxu0 %v1618
        %v1686 = vpop.f32.mrf.mxu0
        %v1687 = vadd.f32 0.0, %v1686
        %v1688 = vpop.f32.mrf.mxu0
        %1689 = vdwg.mxu0
        %v1690 = vadd.f32 %v520, %v1687
        %v1691 = vlaneseq
        %v1692 = vshrl.u32 %v1691, 7
        %v1693 = vsub.s32 4, %v1692
        %v1694 = vrot.slane %v524, %v1693
        %v1695 = vadd.f32 %v1690, %v1694
        %v1696 = vsel %vm525, %v1695, 0.0
        %1697 = vadd.xlane.f32.xlu0 %v1696
        %v1698 = vpop.xlane.xlu0 %1697
        %v1699 = vmul.f32 %v1698, %v529
        %v1700 = vsub.f32 %v1695, %v1699
        %v1701 = vmul.f32 %v1700, %v1700
        %v1702 = vsel %vm525, %v1701, 0.0
        %1703 = vadd.xlane.f32.xlu0 %v1702
        %v1704 = vpop.xlane.xlu0 %1703
        %v1705 = vmul.f32 %v1704, %v529
        %v1706 = vadd.f32 %v1705, 1e-06
        %v1707 = vrsqrt.pop %v1706
        %v1708 = vmul.f32 %v1700, %v1707
        %v1709 = vlaneseq
        %v1710 = vshrl.u32 %v1709, 7
        %v1711 = vsub.s32 2, %v1710
        %v1712 = vrot.slane %v524, %v1711
        %v1713 = vmul.f32 %v1708, %v1712
        %v1714 = vlaneseq
        %v1715 = vshrl.u32 %v1714, 7
        %v1716 = vsub.s32 3, %v1715
        %v1717 = vrot.slane %v524, %v1716
        %v1718 = vadd.f32 %v1713, %v1717
        %v1719 = vld [vmem:[%s7] sm:$0xff]
        %v1720 = vld [vmem:[%s7 + $0x8] sm:$0xff]
        %v1721 = vld [vmem:[%s7 + $0x10] sm:$0xff]
        %v1722 = vld [vmem:[%s7 + $0x18] sm:$0xff]
        %v1723 = vld [vmem:[%s8] sm:$0x1]
        %v1725 = vlaneseq
        %v1726 = vshrl.u32 %v1725, 7
        %v1727 = vsub.s32 0, %v1726
        %v1728 = vrot.slane %v1723, %v1727
        %v1731 = vsel %vm525, %v1718, 0
        %1733 = vmatprep.subr.mxu0 0.0
        %1734 = vmatpush1.msra.mxu0 0.0
        %1735 = vmatprep.subr.mxu0 0.0
        %1736 = vmatpush1.msra.mxu0 0.0
        %1737 = vmatprep.subr.mxu0 0.0
        %1738 = vmatpush1.msra.mxu0 0.0
        %1739 = vmatprep.subr.mxu0 0.0
        %1740 = vmatpush1.msra.mxu0 0.0
        %1741 = vmatprep.subr.mxu0 0.0
        %1742 = vmatpush1.msra.mxu0 0.0
        %1743 = vmatprep.subr.mxu0 0.0
        %1744 = vmatpush1.msra.mxu0 0.0
        %1745 = vmatprep.subr.mxu0 0.0
        %1746 = vmatpush1.msra.mxu0 0.0
        %1747 = vmatprep.subr.mxu0 0.0
        %1748 = vmatpush1.msra.mxu0 0.0
        %1749 = vmatprep.subr.mxu0 0.0
        %1750 = vmatpush1.msra.mxu0 0.0
        %1751 = vmatprep.subr.mxu0 0.0
        %1752 = vmatpush1.msra.mxu0 0.0
        %1753 = vmatprep.subr.mxu0 0.0
        %1754 = vmatpush1.msra.mxu0 0.0
        %1755 = vmatprep.subr.mxu0 0.0
        %1756 = vmatpush1.msra.mxu0 0.0
        %1757 = vmatprep.subr.mxu0 0.0
        %1758 = vmatpush1.msra.mxu0 %v1722
        %1759 = vmatprep.subr.mxu0 0.0
        %1760 = vmatpush1.msra.mxu0 %v1721
        %1761 = vmatprep.subr.mxu0 0.0
        %1762 = vmatpush1.msra.mxu0 %v1720
        %1763 = vmatprep.subr.mxu0 0.0
        %1764 = vmatpush1.msra.mxu0 %v1719
        %1765 = vmatprep.subr.mxu0 0.0
        %1766 = vmatpush2.msra.mxu0 0.0
        %1767 = vmatprep.subr.mxu0 0.0
        %1768 = vmatpush2.msra.mxu0 0.0
        %1769 = vmatprep.subr.mxu0 0.0
        %1770 = vmatpush2.msra.mxu0 0.0
        %1771 = vmatprep.subr.mxu0 0.0
        %1772 = vmatpush2.msra.mxu0 0.0
        %1773 = vmatprep.subr.mxu0 0.0
        %1774 = vmatpush2.msra.mxu0 0.0
        %1775 = vmatprep.subr.mxu0 0.0
        %1776 = vmatpush2.msra.mxu0 0.0
        %1777 = vmatprep.subr.mxu0 0.0
        %1778 = vmatpush2.msra.mxu0 0.0
        %1779 = vmatprep.subr.mxu0 0.0
        %1780 = vmatpush2.msra.mxu0 0.0
        %1781 = vmatprep.subr.mxu0 0.0
        %1782 = vmatpush2.msra.mxu0 0.0
        %1783 = vmatprep.subr.mxu0 0.0
        %1784 = vmatpush2.msra.mxu0 0.0
        %1785 = vmatprep.subr.mxu0 0.0
        %1786 = vmatpush2.msra.mxu0 0.0
        %1787 = vmatprep.subr.mxu0 0.0
        %1788 = vmatpush2.msra.mxu0 0.0
        %1789 = vmatprep.subr.mxu0 0.0
        %1790 = vmatpush2.msra.mxu0 0.0
        %1791 = vmatprep.subr.mxu0 0.0
        %1792 = vmatpush2.msra.mxu0 0.0
        %1793 = vmatprep.subr.mxu0 0.0
        %1794 = vmatpush2.msra.mxu0 0.0
        %1795 = vmatprep.subr.mxu0 0.0
        %1796 = vmatpush2.msra.mxu0 0.0
        %1797 = vmatprep.mubr.f32.mxu0 0.0
        %1798 = vmatmul.mubr.f32.gmra.mxu0 %v1731
        %v1799 = vpop.f32.mrf.mxu0
        %v1800 = vadd.f32 %v1728, %v1799
        %v1801 = vpop.f32.mrf.mxu0
        %1802 = vdwg.mxu0
        %v1803 = vmax.f32 %v1800, 0.0
        %v1804 = vld [vmem:[%s9] sm:$0xff]
        %v1805 = vld [vmem:[%s9 + $0x8] sm:$0xff]
        %v1806 = vld [vmem:[%s9 + $0x10] sm:$0xff]
        %v1807 = vld [vmem:[%s9 + $0x18] sm:$0xff]
        %v1808 = vld [vmem:[%s9 + $0x20] sm:$0xff]
        %v1809 = vld [vmem:[%s9 + $0x28] sm:$0xff]
        %v1810 = vld [vmem:[%s9 + $0x30] sm:$0xff]
        %v1811 = vld [vmem:[%s9 + $0x38] sm:$0xff]
        %v1812 = vlaneseq
        %v1813 = vshrl.u32 %v1812, 7
        %v1814 = vsub.s32 5, %v1813
        %v1815 = vrot.slane %v524, %v1814
        %vm1816 = vcmask 523264
        %v1818 = vsel %vm1816, %v1803, 0
        %1820 = vmatprep.subr.mxu0 0.0
        %1821 = vmatpush1.msra.mxu0 0.0
        %1822 = vmatprep.subr.mxu0 0.0
        %1823 = vmatpush1.msra.mxu0 0.0
        %1824 = vmatprep.subr.mxu0 0.0
        %1825 = vmatpush1.msra.mxu0 0.0
        %1826 = vmatprep.subr.mxu0 0.0
        %1827 = vmatpush1.msra.mxu0 0.0
        %1828 = vmatprep.subr.mxu0 0.0
        %1829 = vmatpush1.msra.mxu0 0.0
        %1830 = vmatprep.subr.mxu0 0.0
        %1831 = vmatpush1.msra.mxu0 0.0
        %1832 = vmatprep.subr.mxu0 0.0
        %1833 = vmatpush1.msra.mxu0 0.0
        %1834 = vmatprep.subr.mxu0 0.0
        %1835 = vmatpush1.msra.mxu0 0.0
        %1836 = vmatprep.subr.mxu0 0.0
        %1837 = vmatpush1.msra.mxu0 %v1811
        %1838 = vmatprep.subr.mxu0 0.0
        %1839 = vmatpush1.msra.mxu0 %v1810
        %1840 = vmatprep.subr.mxu0 0.0
        %1841 = vmatpush1.msra.mxu0 %v1809
        %1842 = vmatprep.subr.mxu0 0.0
        %1843 = vmatpush1.msra.mxu0 %v1808
        %1844 = vmatprep.subr.mxu0 0.0
        %1845 = vmatpush1.msra.mxu0 %v1807
        %1846 = vmatprep.subr.mxu0 0.0
        %1847 = vmatpush1.msra.mxu0 %v1806
        %1848 = vmatprep.subr.mxu0 0.0
        %1849 = vmatpush1.msra.mxu0 %v1805
        %1850 = vmatprep.subr.mxu0 0.0
        %1851 = vmatpush1.msra.mxu0 %v1804
        %1852 = vmatprep.subr.mxu0 0.0
        %1853 = vmatpush2.msra.mxu0 0.0
        %1854 = vmatprep.subr.mxu0 0.0
        %1855 = vmatpush2.msra.mxu0 0.0
        %1856 = vmatprep.subr.mxu0 0.0
        %1857 = vmatpush2.msra.mxu0 0.0
        %1858 = vmatprep.subr.mxu0 0.0
        %1859 = vmatpush2.msra.mxu0 0.0
        %1860 = vmatprep.subr.mxu0 0.0
        %1861 = vmatpush2.msra.mxu0 0.0
        %1862 = vmatprep.subr.mxu0 0.0
        %1863 = vmatpush2.msra.mxu0 0.0
        %1864 = vmatprep.subr.mxu0 0.0
        %1865 = vmatpush2.msra.mxu0 0.0
        %1866 = vmatprep.subr.mxu0 0.0
        %1867 = vmatpush2.msra.mxu0 0.0
        %1868 = vmatprep.subr.mxu0 0.0
        %1869 = vmatpush2.msra.mxu0 0.0
        %1870 = vmatprep.subr.mxu0 0.0
        %1871 = vmatpush2.msra.mxu0 0.0
        %1872 = vmatprep.subr.mxu0 0.0
        %1873 = vmatpush2.msra.mxu0 0.0
        %1874 = vmatprep.subr.mxu0 0.0
        %1875 = vmatpush2.msra.mxu0 0.0
        %1876 = vmatprep.subr.mxu0 0.0
        %1877 = vmatpush2.msra.mxu0 0.0
        %1878 = vmatprep.subr.mxu0 0.0
        %1879 = vmatpush2.msra.mxu0 0.0
        %1880 = vmatprep.subr.mxu0 0.0
        %1881 = vmatpush2.msra.mxu0 0.0
        %1882 = vmatprep.subr.mxu0 0.0
        %1883 = vmatpush2.msra.mxu0 0.0
        %1884 = vmatprep.mubr.f32.mxu0 0.0
        %1885 = vmatmul.mubr.f32.gmra.mxu0 %v1818
        %v1886 = vpop.f32.mrf.mxu0
        %v1887 = vadd.f32 %v1815, %v1886
        %v1888 = vpop.f32.mrf.mxu0
        %1889 = vdwg.mxu0
        %v1890 = vadd.f32 %v1695, %v1887
        %s1891 = scalar_lea.vmem %s10, 8
        %v1892 = vld [vmem:[%s1891] sm:$0xff]
        %v1893 = vsel %vm525, %v1890, 0.0
        %1894 = vadd.xlane.f32.xlu0 %v1893
        %v1895 = vpop.xlane.xlu0 %1894
        %v1896 = vmul.f32 %v1895, %v529
        %v1897 = vsub.f32 %v1890, %v1896
        %v1898 = vmul.f32 %v1897, %v1897
        %v1899 = vsel %vm525, %v1898, 0.0
        %1900 = vadd.xlane.f32.xlu0 %v1899
        %v1901 = vpop.xlane.xlu0 %1900
        %v1902 = vmul.f32 %v1901, %v529
        %v1903 = vadd.f32 %v1902, 1e-06
        %v1904 = vrsqrt.pop %v1903
        %v1905 = vmul.f32 %v1897, %v1904
        %v1906 = vlaneseq
        %v1907 = vshrl.u32 %v1906, 7
        %v1908 = vsub.s32 0, %v1907
        %v1909 = vrot.slane %v1892, %v1908
        %v1910 = vmul.f32 %v1905, %v1909
        %v1911 = vlaneseq
        %v1912 = vshrl.u32 %v1911, 7
        %v1913 = vsub.s32 1, %v1912
        %v1914 = vrot.slane %v1892, %v1913
        %v1915 = vadd.f32 %v1910, %v1914
        %s1916 = scalar_lea.vmem %s4, 96
        %v1917 = vld [vmem:[%s1916] sm:$0xff]
        %v1918 = vld [vmem:[%s1916 + $0x8] sm:$0xff]
        %v1919 = vld [vmem:[%s1916 + $0x10] sm:$0xff]
        %v1920 = vld [vmem:[%s1916 + $0x18] sm:$0xff]
        %v1921 = vld [vmem:[%s1916 + $0x20] sm:$0xff]
        %v1922 = vld [vmem:[%s1916 + $0x28] sm:$0xff]
        %v1923 = vld [vmem:[%s1916 + $0x30] sm:$0xff]
        %v1924 = vld [vmem:[%s1916 + $0x38] sm:$0xff]
        %v1925 = vld [vmem:[%s1916 + $0x40] sm:$0xff]
        %v1926 = vld [vmem:[%s1916 + $0x48] sm:$0xff]
        %v1927 = vld [vmem:[%s1916 + $0x50] sm:$0xff]
        %v1928 = vld [vmem:[%s1916 + $0x58] sm:$0xff]
        %s1929 = scalar_lea.vmem %s5, 96
        %v1930 = vld [vmem:[%s1929] sm:$0xff]
        %v1931 = vld [vmem:[%s1929 + $0x8] sm:$0xff]
        %v1932 = vld [vmem:[%s1929 + $0x10] sm:$0xff]
        %v1933 = vld [vmem:[%s1929 + $0x18] sm:$0xff]
        %v1934 = vld [vmem:[%s1929 + $0x20] sm:$0xff]
        %v1935 = vld [vmem:[%s1929 + $0x28] sm:$0xff]
        %v1936 = vld [vmem:[%s1929 + $0x30] sm:$0xff]
        %v1937 = vld [vmem:[%s1929 + $0x38] sm:$0xff]
        %v1938 = vld [vmem:[%s1929 + $0x40] sm:$0xff]
        %v1939 = vld [vmem:[%s1929 + $0x48] sm:$0xff]
        %v1940 = vld [vmem:[%s1929 + $0x50] sm:$0xff]
        %v1941 = vld [vmem:[%s1929 + $0x58] sm:$0xff]
        %1943 = vset.pattern.permute.xlu0 0
        %1944 = vperm.xlu0 %1943, %v1930
        %v1945 = vpop.permute.xlu0 %1944
        %1948 = vset.pattern.permute.xlu0 0
        %1949 = vperm.xlu0 %1948, %v1931
        %v1950 = vpop.permute.xlu0 %1949
        %1953 = vset.pattern.permute.xlu0 0
        %1954 = vperm.xlu0 %1953, %v1932
        %v1955 = vpop.permute.xlu0 %1954
        %1958 = vset.pattern.permute.xlu0 0
        %1959 = vperm.xlu0 %1958, %v1933
        %v1960 = vpop.permute.xlu0 %1959
        %1963 = vset.pattern.permute.xlu0 0
        %1964 = vperm.xlu0 %1963, %v1934
        %v1965 = vpop.permute.xlu0 %1964
        %1968 = vset.pattern.permute.xlu0 0
        %1969 = vperm.xlu0 %1968, %v1935
        %v1970 = vpop.permute.xlu0 %1969
        %1973 = vset.pattern.permute.xlu0 0
        %1974 = vperm.xlu0 %1973, %v1936
        %v1975 = vpop.permute.xlu0 %1974
        %1978 = vset.pattern.permute.xlu0 0
        %1979 = vperm.xlu0 %1978, %v1937
        %v1980 = vpop.permute.xlu0 %1979
        %1983 = vset.pattern.permute.xlu0 0
        %1984 = vperm.xlu0 %1983, %v1938
        %v1985 = vpop.permute.xlu0 %1984
        %1988 = vset.pattern.permute.xlu0 0
        %1989 = vperm.xlu0 %1988, %v1939
        %v1990 = vpop.permute.xlu0 %1989
        %1993 = vset.pattern.permute.xlu0 0
        %1994 = vperm.xlu0 %1993, %v1940
        %v1995 = vpop.permute.xlu0 %1994
        %1998 = vset.pattern.permute.xlu0 0
        %1999 = vperm.xlu0 %1998, %v1941
        %v2000 = vpop.permute.xlu0 %1999
        %v2003 = vsel %vm525, %v1917, 0
        %v2006 = vsel %vm525, %v1918, 0
        %v2009 = vsel %vm525, %v1919, 0
        %v2012 = vsel %vm525, %v1920, 0
        %v2015 = vsel %vm525, %v1921, 0
        %v2018 = vsel %vm525, %v1922, 0
        %v2021 = vsel %vm525, %v1923, 0
        %v2024 = vsel %vm525, %v1924, 0
        %v2027 = vsel %vm525, %v1925, 0
        %v2030 = vsel %vm525, %v1926, 0
        %v2033 = vsel %vm525, %v1927, 0
        %v2036 = vsel %vm525, %v1928, 0
        %v2039 = vsel %vm525, %v1915, 0
        %2041 = vmatprep.subr.mxu0 0.0
        %2042 = vmatpush1.xpose.msra.mxu0 0.0
        %2043 = vmatprep.subr.mxu0 0.0
        %2044 = vmatpush1.xpose.msra.mxu0 0.0
        %2045 = vmatprep.subr.mxu0 0.0
        %2046 = vmatpush1.xpose.msra.mxu0 0.0
        %2047 = vmatprep.subr.mxu0 0.0
        %2048 = vmatpush1.xpose.msra.mxu0 0.0
        %2049 = vmatprep.subr.mxu0 0.0
        %2050 = vmatpush1.xpose.msra.mxu0 0.0
        %2051 = vmatprep.subr.mxu0 0.0
        %2052 = vmatpush1.xpose.msra.mxu0 0.0
        %2053 = vmatprep.subr.mxu0 0.0
        %2054 = vmatpush1.xpose.msra.mxu0 0.0
        %2055 = vmatprep.subr.mxu0 0.0
        %2056 = vmatpush1.xpose.msra.mxu0 0.0
        %2057 = vmatprep.subr.mxu0 0.0
        %2058 = vmatpush1.xpose.msra.mxu0 0.0
        %2059 = vmatprep.subr.mxu0 0.0
        %2060 = vmatpush1.xpose.msra.mxu0 0.0
        %2061 = vmatprep.subr.mxu0 0.0
        %2062 = vmatpush1.xpose.msra.mxu0 0.0
        %2063 = vmatprep.subr.mxu0 0.0
        %2064 = vmatpush1.xpose.msra.mxu0 0.0
        %2065 = vmatprep.subr.mxu0 0.0
        %2066 = vmatpush1.xpose.msra.mxu0 0.0
        %2067 = vmatprep.subr.mxu0 0.0
        %2068 = vmatpush1.xpose.msra.mxu0 0.0
        %2069 = vmatprep.subr.mxu0 0.0
        %2070 = vmatpush1.xpose.msra.mxu0 0.0
        %2071 = vmatprep.subr.mxu0 0.0
        %2072 = vmatpush1.xpose.msra.mxu0 %v2039
        %2073 = vmatprep.subr.mxu0 0.0
        %2074 = vmatpush2.xpose.msra.mxu0 0.0
        %2075 = vmatprep.subr.mxu0 0.0
        %2076 = vmatpush2.xpose.msra.mxu0 0.0
        %2077 = vmatprep.subr.mxu0 0.0
        %2078 = vmatpush2.xpose.msra.mxu0 0.0
        %2079 = vmatprep.subr.mxu0 0.0
        %2080 = vmatpush2.xpose.msra.mxu0 0.0
        %2081 = vmatprep.subr.mxu0 0.0
        %2082 = vmatpush2.xpose.msra.mxu0 0.0
        %2083 = vmatprep.subr.mxu0 0.0
        %2084 = vmatpush2.xpose.msra.mxu0 0.0
        %2085 = vmatprep.subr.mxu0 0.0
        %2086 = vmatpush2.xpose.msra.mxu0 0.0
        %2087 = vmatprep.subr.mxu0 0.0
        %2088 = vmatpush2.xpose.msra.mxu0 0.0
        %2089 = vmatprep.subr.mxu0 0.0
        %2090 = vmatpush2.xpose.msra.mxu0 0.0
        %2091 = vmatprep.subr.mxu0 0.0
        %2092 = vmatpush2.xpose.msra.mxu0 0.0
        %2093 = vmatprep.subr.mxu0 0.0
        %2094 = vmatpush2.xpose.msra.mxu0 0.0
        %2095 = vmatprep.subr.mxu0 0.0
        %2096 = vmatpush2.xpose.msra.mxu0 0.0
        %2097 = vmatprep.subr.mxu0 0.0
        %2098 = vmatpush2.xpose.msra.mxu0 0.0
        %2099 = vmatprep.subr.mxu0 0.0
        %2100 = vmatpush2.xpose.msra.mxu0 0.0
        %2101 = vmatprep.subr.mxu0 0.0
        %2102 = vmatpush2.xpose.msra.mxu0 0.0
        %2103 = vmatprep.subr.mxu0 0.0
        %2104 = vmatpush2.xpose.msra.mxu0 0.0
        %2105 = vmatprep.mubr.f32.mxu0 0.0
        %2106 = vmatmul.mubr.f32.gmra.mxu0 %v2003
        %v2107 = vpop.f32.mrf.mxu0
        %v2108 = vadd.f32 %v1945, %v2107
        %v2109 = vpop.f32.mrf.mxu0
        %2110 = vmatprep.mubr.f32.mxu0 0.0
        %2111 = vmatmul.mubr.f32.gmra.mxu0 %v2006
        %v2112 = vpop.f32.mrf.mxu0
        %v2113 = vadd.f32 %v1950, %v2112
        %v2114 = vpop.f32.mrf.mxu0
        %2115 = vmatprep.mubr.f32.mxu0 0.0
        %2116 = vmatmul.mubr.f32.gmra.mxu0 %v2009
        %v2117 = vpop.f32.mrf.mxu0
        %v2118 = vadd.f32 %v1955, %v2117
        %v2119 = vpop.f32.mrf.mxu0
        %2120 = vmatprep.mubr.f32.mxu0 0.0
        %2121 = vmatmul.mubr.f32.gmra.mxu0 %v2012
        %v2122 = vpop.f32.mrf.mxu0
        %v2123 = vadd.f32 %v1960, %v2122
        %v2124 = vpop.f32.mrf.mxu0
        %2125 = vmatprep.mubr.f32.mxu0 0.0
        %2126 = vmatmul.mubr.f32.gmra.mxu0 %v2015
        %v2127 = vpop.f32.mrf.mxu0
        %v2128 = vadd.f32 %v1965, %v2127
        %v2129 = vpop.f32.mrf.mxu0
        %2130 = vmatprep.mubr.f32.mxu0 0.0
        %2131 = vmatmul.mubr.f32.gmra.mxu0 %v2018
        %v2132 = vpop.f32.mrf.mxu0
        %v2133 = vadd.f32 %v1970, %v2132
        %v2134 = vpop.f32.mrf.mxu0
        %2135 = vmatprep.mubr.f32.mxu0 0.0
        %2136 = vmatmul.mubr.f32.gmra.mxu0 %v2021
        %v2137 = vpop.f32.mrf.mxu0
        %v2138 = vadd.f32 %v1975, %v2137
        %v2139 = vpop.f32.mrf.mxu0
        %2140 = vmatprep.mubr.f32.mxu0 0.0
        %2141 = vmatmul.mubr.f32.gmra.mxu0 %v2024
        %v2142 = vpop.f32.mrf.mxu0
        %v2143 = vadd.f32 %v1980, %v2142
        %v2144 = vpop.f32.mrf.mxu0
        %2145 = vmatprep.mubr.f32.mxu0 0.0
        %2146 = vmatmul.mubr.f32.gmra.mxu0 %v2027
        %v2147 = vpop.f32.mrf.mxu0
        %v2148 = vadd.f32 %v1985, %v2147
        %v2149 = vpop.f32.mrf.mxu0
        %2150 = vmatprep.mubr.f32.mxu0 0.0
        %2151 = vmatmul.mubr.f32.gmra.mxu0 %v2030
        %v2152 = vpop.f32.mrf.mxu0
        %v2153 = vadd.f32 %v1990, %v2152
        %v2154 = vpop.f32.mrf.mxu0
        %2155 = vmatprep.mubr.f32.mxu0 0.0
        %2156 = vmatmul.mubr.f32.gmra.mxu0 %v2033
        %v2157 = vpop.f32.mrf.mxu0
        %v2158 = vadd.f32 %v1995, %v2157
        %v2159 = vpop.f32.mrf.mxu0
        %2160 = vmatprep.mubr.f32.mxu0 0.0
        %2161 = vmatmul.mubr.f32.gmra.mxu0 %v2036
        %v2162 = vpop.f32.mrf.mxu0
        %v2163 = vadd.f32 %v2000, %v2162
        %v2164 = vpop.f32.mrf.mxu0
        %2165 = vdwg.mxu0
        %2166 = vxpose.xlu0.b32.start [1/16] %v2108, 128
        %2167 = vxpose.xlu0.b32.cont [2/16] 0.0, 128
        %2168 = vxpose.xlu0.b32.cont [3/16] 0.0, 128
        %2169 = vxpose.xlu0.b32.cont [4/16] 0.0, 128
        %2170 = vxpose.xlu0.b32.cont [5/16] 0.0, 128
        %2171 = vxpose.xlu0.b32.cont [6/16] 0.0, 128
        %2172 = vxpose.xlu0.b32.cont [7/16] 0.0, 128
        %2173 = vxpose.xlu0.b32.cont [8/16] 0.0, 128
        %2174 = vxpose.xlu0.b32.cont [9/16] 0.0, 128
        %2175 = vxpose.xlu0.b32.cont [10/16] 0.0, 128
        %2176 = vxpose.xlu0.b32.cont [11/16] 0.0, 128
        %2177 = vxpose.xlu0.b32.cont [12/16] 0.0, 128
        %2178 = vxpose.xlu0.b32.cont [13/16] 0.0, 128
        %2179 = vxpose.xlu0.b32.cont [14/16] 0.0, 128
        %2180 = vxpose.xlu0.b32.cont [15/16] 0.0, 128
        %2181 = vxpose.xlu0.b32.end [16/16] 0.0, 128
        %v2182 = vpop.trf.xlu0
        %v2183 = vpop.trf.xlu0
        %v2184 = vpop.trf.xlu0
        %v2185 = vpop.trf.xlu0
        %v2186 = vpop.trf.xlu0
        %v2187 = vpop.trf.xlu0
        %v2188 = vpop.trf.xlu0
        %v2189 = vpop.trf.xlu0
        %v2190 = vpop.trf.xlu0
        %v2191 = vpop.trf.xlu0
        %v2192 = vpop.trf.xlu0
        %v2193 = vpop.trf.xlu0
        %v2194 = vpop.trf.xlu0
        %v2195 = vpop.trf.xlu0
        %v2196 = vpop.trf.xlu0
        %v2197 = vpop.trf.xlu0
        %v2199 = vsel %vm830, %v2182, 0
        %2201 = vmatprep.subr.mxu0 0.0
        %2202 = vmatpush1.msra.mxu0 0.0
        %2203 = vmatprep.subr.mxu0 0.0
        %2204 = vmatpush1.msra.mxu0 0.0
        %2205 = vmatprep.subr.mxu0 0.0
        %2206 = vmatpush1.msra.mxu0 0.0
        %2207 = vmatprep.subr.mxu0 0.0
        %2208 = vmatpush1.msra.mxu0 0.0
        %2209 = vmatprep.subr.mxu0 0.0
        %2210 = vmatpush1.msra.mxu0 0.0
        %2211 = vmatprep.subr.mxu0 0.0
        %2212 = vmatpush1.msra.mxu0 0.0
        %2213 = vmatprep.subr.mxu0 0.0
        %2214 = vmatpush1.msra.mxu0 0.0
        %2215 = vmatprep.subr.mxu0 0.0
        %2216 = vmatpush1.msra.mxu0 0.0
        %2217 = vmatprep.subr.mxu0 0.0
        %2218 = vmatpush1.msra.mxu0 0.0
        %2219 = vmatprep.subr.mxu0 0.0
        %2220 = vmatpush1.msra.mxu0 0.0
        %2221 = vmatprep.subr.mxu0 0.0
        %2222 = vmatpush1.msra.mxu0 0.0
        %2223 = vmatprep.subr.mxu0 0.0
        %2224 = vmatpush1.msra.mxu0 0.0
        %2225 = vmatprep.subr.mxu0 0.0
        %2226 = vmatpush1.msra.mxu0 0.0
        %2227 = vmatprep.subr.mxu0 0.0
        %2228 = vmatpush1.msra.mxu0 0.0
        %2229 = vmatprep.subr.mxu0 0.0
        %2230 = vmatpush1.msra.mxu0 0.0
        %2231 = vmatprep.subr.mxu0 0.0
        %2232 = vmatpush1.msra.mxu0 %v2128
        %2233 = vmatprep.subr.mxu0 0.0
        %2234 = vmatpush2.msra.mxu0 0.0
        %2235 = vmatprep.subr.mxu0 0.0
        %2236 = vmatpush2.msra.mxu0 0.0
        %2237 = vmatprep.subr.mxu0 0.0
        %2238 = vmatpush2.msra.mxu0 0.0
        %2239 = vmatprep.subr.mxu0 0.0
        %2240 = vmatpush2.msra.mxu0 0.0
        %2241 = vmatprep.subr.mxu0 0.0
        %2242 = vmatpush2.msra.mxu0 0.0
        %2243 = vmatprep.subr.mxu0 0.0
        %2244 = vmatpush2.msra.mxu0 0.0
        %2245 = vmatprep.subr.mxu0 0.0
        %2246 = vmatpush2.msra.mxu0 0.0
        %2247 = vmatprep.subr.mxu0 0.0
        %2248 = vmatpush2.msra.mxu0 0.0
        %2249 = vmatprep.subr.mxu0 0.0
        %2250 = vmatpush2.msra.mxu0 0.0
        %2251 = vmatprep.subr.mxu0 0.0
        %2252 = vmatpush2.msra.mxu0 0.0
        %2253 = vmatprep.subr.mxu0 0.0
        %2254 = vmatpush2.msra.mxu0 0.0
        %2255 = vmatprep.subr.mxu0 0.0
        %2256 = vmatpush2.msra.mxu0 0.0
        %2257 = vmatprep.subr.mxu0 0.0
        %2258 = vmatpush2.msra.mxu0 0.0
        %2259 = vmatprep.subr.mxu0 0.0
        %2260 = vmatpush2.msra.mxu0 0.0
        %2261 = vmatprep.subr.mxu0 0.0
        %2262 = vmatpush2.msra.mxu0 0.0
        %2263 = vmatprep.subr.mxu0 0.0
        %2264 = vmatpush2.msra.mxu0 0.0
        %2265 = vmatprep.mubr.f32.mxu0 0.0
        %2266 = vmatmul.mubr.f32.gmra.mxu0 %v2199
        %v2267 = vpop.f32.mrf.mxu0
        %v2268 = vadd.f32 0.0, %v2267
        %v2269 = vpop.f32.mrf.mxu0
        %2270 = vdwg.mxu0
        %2271 = vxpose.xlu0.b32.start [1/16] %v2113, 128
        %2272 = vxpose.xlu0.b32.cont [2/16] 0.0, 128
        %2273 = vxpose.xlu0.b32.cont [3/16] 0.0, 128
        %2274 = vxpose.xlu0.b32.cont [4/16] 0.0, 128
        %2275 = vxpose.xlu0.b32.cont [5/16] 0.0, 128
        %2276 = vxpose.xlu0.b32.cont [6/16] 0.0, 128
        %2277 = vxpose.xlu0.b32.cont [7/16] 0.0, 128
        %2278 = vxpose.xlu0.b32.cont [8/16] 0.0, 128
        %2279 = vxpose.xlu0.b32.cont [9/16] 0.0, 128
        %2280 = vxpose.xlu0.b32.cont [10/16] 0.0, 128
        %2281 = vxpose.xlu0.b32.cont [11/16] 0.0, 128
        %2282 = vxpose.xlu0.b32.cont [12/16] 0.0, 128
        %2283 = vxpose.xlu0.b32.cont [13/16] 0.0, 128
        %2284 = vxpose.xlu0.b32.cont [14/16] 0.0, 128
        %2285 = vxpose.xlu0.b32.cont [15/16] 0.0, 128
        %2286 = vxpose.xlu0.b32.end [16/16] 0.0, 128
        %v2287 = vpop.trf.xlu0
        %v2288 = vpop.trf.xlu0
        %v2289 = vpop.trf.xlu0
        %v2290 = vpop.trf.xlu0
        %v2291 = vpop.trf.xlu0
        %v2292 = vpop.trf.xlu0
        %v2293 = vpop.trf.xlu0
        %v2294 = vpop.trf.xlu0
        %v2295 = vpop.trf.xlu0
        %v2296 = vpop.trf.xlu0
        %v2297 = vpop.trf.xlu0
        %v2298 = vpop.trf.xlu0
        %v2299 = vpop.trf.xlu0
        %v2300 = vpop.trf.xlu0
        %v2301 = vpop.trf.xlu0
        %v2302 = vpop.trf.xlu0
        %v2304 = vsel %vm830, %v2287, 0
        %2306 = vmatprep.subr.mxu0 0.0
        %2307 = vmatpush1.msra.mxu0 0.0
        %2308 = vmatprep.subr.mxu0 0.0
        %2309 = vmatpush1.msra.mxu0 0.0
        %2310 = vmatprep.subr.mxu0 0.0
        %2311 = vmatpush1.msra.mxu0 0.0
        %2312 = vmatprep.subr.mxu0 0.0
        %2313 = vmatpush1.msra.mxu0 0.0
        %2314 = vmatprep.subr.mxu0 0.0
        %2315 = vmatpush1.msra.mxu0 0.0
        %2316 = vmatprep.subr.mxu0 0.0
        %2317 = vmatpush1.msra.mxu0 0.0
        %2318 = vmatprep.subr.mxu0 0.0
        %2319 = vmatpush1.msra.mxu0 0.0
        %2320 = vmatprep.subr.mxu0 0.0
        %2321 = vmatpush1.msra.mxu0 0.0
        %2322 = vmatprep.subr.mxu0 0.0
        %2323 = vmatpush1.msra.mxu0 0.0
        %2324 = vmatprep.subr.mxu0 0.0
        %2325 = vmatpush1.msra.mxu0 0.0
        %2326 = vmatprep.subr.mxu0 0.0
        %2327 = vmatpush1.msra.mxu0 0.0
        %2328 = vmatprep.subr.mxu0 0.0
        %2329 = vmatpush1.msra.mxu0 0.0
        %2330 = vmatprep.subr.mxu0 0.0
        %2331 = vmatpush1.msra.mxu0 0.0
        %2332 = vmatprep.subr.mxu0 0.0
        %2333 = vmatpush1.msra.mxu0 0.0
        %2334 = vmatprep.subr.mxu0 0.0
        %2335 = vmatpush1.msra.mxu0 0.0
        %2336 = vmatprep.subr.mxu0 0.0
        %2337 = vmatpush1.msra.mxu0 %v2133
        %2338 = vmatprep.subr.mxu0 0.0
        %2339 = vmatpush2.msra.mxu0 0.0
        %2340 = vmatprep.subr.mxu0 0.0
        %2341 = vmatpush2.msra.mxu0 0.0
        %2342 = vmatprep.subr.mxu0 0.0
        %2343 = vmatpush2.msra.mxu0 0.0
        %2344 = vmatprep.subr.mxu0 0.0
        %2345 = vmatpush2.msra.mxu0 0.0
        %2346 = vmatprep.subr.mxu0 0.0
        %2347 = vmatpush2.msra.mxu0 0.0
        %2348 = vmatprep.subr.mxu0 0.0
        %2349 = vmatpush2.msra.mxu0 0.0
        %2350 = vmatprep.subr.mxu0 0.0
        %2351 = vmatpush2.msra.mxu0 0.0
        %2352 = vmatprep.subr.mxu0 0.0
        %2353 = vmatpush2.msra.mxu0 0.0
        %2354 = vmatprep.subr.mxu0 0.0
        %2355 = vmatpush2.msra.mxu0 0.0
        %2356 = vmatprep.subr.mxu0 0.0
        %2357 = vmatpush2.msra.mxu0 0.0
        %2358 = vmatprep.subr.mxu0 0.0
        %2359 = vmatpush2.msra.mxu0 0.0
        %2360 = vmatprep.subr.mxu0 0.0
        %2361 = vmatpush2.msra.mxu0 0.0
        %2362 = vmatprep.subr.mxu0 0.0
        %2363 = vmatpush2.msra.mxu0 0.0
        %2364 = vmatprep.subr.mxu0 0.0
        %2365 = vmatpush2.msra.mxu0 0.0
        %2366 = vmatprep.subr.mxu0 0.0
        %2367 = vmatpush2.msra.mxu0 0.0
        %2368 = vmatprep.subr.mxu0 0.0
        %2369 = vmatpush2.msra.mxu0 0.0
        %2370 = vmatprep.mubr.f32.mxu0 0.0
        %2371 = vmatmul.mubr.f32.gmra.mxu0 %v2304
        %v2372 = vpop.f32.mrf.mxu0
        %v2373 = vadd.f32 0.0, %v2372
        %v2374 = vpop.f32.mrf.mxu0
        %2375 = vdwg.mxu0
        %2376 = vxpose.xlu0.b32.start [1/16] %v2118, 128
        %2377 = vxpose.xlu0.b32.cont [2/16] 0.0, 128
        %2378 = vxpose.xlu0.b32.cont [3/16] 0.0, 128
        %2379 = vxpose.xlu0.b32.cont [4/16] 0.0, 128
        %2380 = vxpose.xlu0.b32.cont [5/16] 0.0, 128
        %2381 = vxpose.xlu0.b32.cont [6/16] 0.0, 128
        %2382 = vxpose.xlu0.b32.cont [7/16] 0.0, 128
        %2383 = vxpose.xlu0.b32.cont [8/16] 0.0, 128
        %2384 = vxpose.xlu0.b32.cont [9/16] 0.0, 128
        %2385 = vxpose.xlu0.b32.cont [10/16] 0.0, 128
        %2386 = vxpose.xlu0.b32.cont [11/16] 0.0, 128
        %2387 = vxpose.xlu0.b32.cont [12/16] 0.0, 128
        %2388 = vxpose.xlu0.b32.cont [13/16] 0.0, 128
        %2389 = vxpose.xlu0.b32.cont [14/16] 0.0, 128
        %2390 = vxpose.xlu0.b32.cont [15/16] 0.0, 128
        %2391 = vxpose.xlu0.b32.end [16/16] 0.0, 128
        %v2392 = vpop.trf.xlu0
        %v2393 = vpop.trf.xlu0
        %v2394 = vpop.trf.xlu0
        %v2395 = vpop.trf.xlu0
        %v2396 = vpop.trf.xlu0
        %v2397 = vpop.trf.xlu0
        %v2398 = vpop.trf.xlu0
        %v2399 = vpop.trf.xlu0
        %v2400 = vpop.trf.xlu0
        %v2401 = vpop.trf.xlu0
        %v2402 = vpop.trf.xlu0
        %v2403 = vpop.trf.xlu0
        %v2404 = vpop.trf.xlu0
        %v2405 = vpop.trf.xlu0
        %v2406 = vpop.trf.xlu0
        %v2407 = vpop.trf.xlu0
        %v2409 = vsel %vm830, %v2392, 0
        %2411 = vmatprep.subr.mxu0 0.0
        %2412 = vmatpush1.msra.mxu0 0.0
        %2413 = vmatprep.subr.mxu0 0.0
        %2414 = vmatpush1.msra.mxu0 0.0
        %2415 = vmatprep.subr.mxu0 0.0
        %2416 = vmatpush1.msra.mxu0 0.0
        %2417 = vmatprep.subr.mxu0 0.0
        %2418 = vmatpush1.msra.mxu0 0.0
        %2419 = vmatprep.subr.mxu0 0.0
        %2420 = vmatpush1.msra.mxu0 0.0
        %2421 = vmatprep.subr.mxu0 0.0
        %2422 = vmatpush1.msra.mxu0 0.0
        %2423 = vmatprep.subr.mxu0 0.0
        %2424 = vmatpush1.msra.mxu0 0.0
        %2425 = vmatprep.subr.mxu0 0.0
        %2426 = vmatpush1.msra.mxu0 0.0
        %2427 = vmatprep.subr.mxu0 0.0
        %2428 = vmatpush1.msra.mxu0 0.0
        %2429 = vmatprep.subr.mxu0 0.0
        %2430 = vmatpush1.msra.mxu0 0.0
        %2431 = vmatprep.subr.mxu0 0.0
        %2432 = vmatpush1.msra.mxu0 0.0
        %2433 = vmatprep.subr.mxu0 0.0
        %2434 = vmatpush1.msra.mxu0 0.0
        %2435 = vmatprep.subr.mxu0 0.0
        %2436 = vmatpush1.msra.mxu0 0.0
        %2437 = vmatprep.subr.mxu0 0.0
        %2438 = vmatpush1.msra.mxu0 0.0
        %2439 = vmatprep.subr.mxu0 0.0
        %2440 = vmatpush1.msra.mxu0 0.0
        %2441 = vmatprep.subr.mxu0 0.0
        %2442 = vmatpush1.msra.mxu0 %v2138
        %2443 = vmatprep.subr.mxu0 0.0
        %2444 = vmatpush2.msra.mxu0 0.0
        %2445 = vmatprep.subr.mxu0 0.0
        %2446 = vmatpush2.msra.mxu0 0.0
        %2447 = vmatprep.subr.mxu0 0.0
        %2448 = vmatpush2.msra.mxu0 0.0
        %2449 = vmatprep.subr.mxu0 0.0
        %2450 = vmatpush2.msra.mxu0 0.0
        %2451 = vmatprep.subr.mxu0 0.0
        %2452 = vmatpush2.msra.mxu0 0.0
        %2453 = vmatprep.subr.mxu0 0.0
        %2454 = vmatpush2.msra.mxu0 0.0
        %2455 = vmatprep.subr.mxu0 0.0
        %2456 = vmatpush2.msra.mxu0 0.0
        %2457 = vmatprep.subr.mxu0 0.0
        %2458 = vmatpush2.msra.mxu0 0.0
        %2459 = vmatprep.subr.mxu0 0.0
        %2460 = vmatpush2.msra.mxu0 0.0
        %2461 = vmatprep.subr.mxu0 0.0
        %2462 = vmatpush2.msra.mxu0 0.0
        %2463 = vmatprep.subr.mxu0 0.0
        %2464 = vmatpush2.msra.mxu0 0.0
        %2465 = vmatprep.subr.mxu0 0.0
        %2466 = vmatpush2.msra.mxu0 0.0
        %2467 = vmatprep.subr.mxu0 0.0
        %2468 = vmatpush2.msra.mxu0 0.0
        %2469 = vmatprep.subr.mxu0 0.0
        %2470 = vmatpush2.msra.mxu0 0.0
        %2471 = vmatprep.subr.mxu0 0.0
        %2472 = vmatpush2.msra.mxu0 0.0
        %2473 = vmatprep.subr.mxu0 0.0
        %2474 = vmatpush2.msra.mxu0 0.0
        %2475 = vmatprep.mubr.f32.mxu0 0.0
        %2476 = vmatmul.mubr.f32.gmra.mxu0 %v2409
        %v2477 = vpop.f32.mrf.mxu0
        %v2478 = vadd.f32 0.0, %v2477
        %v2479 = vpop.f32.mrf.mxu0
        %2480 = vdwg.mxu0
        %2481 = vxpose.xlu0.b32.start [1/16] %v2123, 128
        %2482 = vxpose.xlu0.b32.cont [2/16] 0.0, 128
        %2483 = vxpose.xlu0.b32.cont [3/16] 0.0, 128
        %2484 = vxpose.xlu0.b32.cont [4/16] 0.0, 128
        %2485 = vxpose.xlu0.b32.cont [5/16] 0.0, 128
        %2486 = vxpose.xlu0.b32.cont [6/16] 0.0, 128
        %2487 = vxpose.xlu0.b32.cont [7/16] 0.0, 128
        %2488 = vxpose.xlu0.b32.cont [8/16] 0.0, 128
        %2489 = vxpose.xlu0.b32.cont [9/16] 0.0, 128
        %2490 = vxpose.xlu0.b32.cont [10/16] 0.0, 128
        %2491 = vxpose.xlu0.b32.cont [11/16] 0.0, 128
        %2492 = vxpose.xlu0.b32.cont [12/16] 0.0, 128
        %2493 = vxpose.xlu0.b32.cont [13/16] 0.0, 128
        %2494 = vxpose.xlu0.b32.cont [14/16] 0.0, 128
        %2495 = vxpose.xlu0.b32.cont [15/16] 0.0, 128
        %2496 = vxpose.xlu0.b32.end [16/16] 0.0, 128
        %v2497 = vpop.trf.xlu0
        %v2498 = vpop.trf.xlu0
        %v2499 = vpop.trf.xlu0
        %v2500 = vpop.trf.xlu0
        %v2501 = vpop.trf.xlu0
        %v2502 = vpop.trf.xlu0
        %v2503 = vpop.trf.xlu0
        %v2504 = vpop.trf.xlu0
        %v2505 = vpop.trf.xlu0
        %v2506 = vpop.trf.xlu0
        %v2507 = vpop.trf.xlu0
        %v2508 = vpop.trf.xlu0
        %v2509 = vpop.trf.xlu0
        %v2510 = vpop.trf.xlu0
        %v2511 = vpop.trf.xlu0
        %v2512 = vpop.trf.xlu0
        %v2514 = vsel %vm830, %v2497, 0
        %2516 = vmatprep.subr.mxu0 0.0
        %2517 = vmatpush1.msra.mxu0 0.0
        %2518 = vmatprep.subr.mxu0 0.0
        %2519 = vmatpush1.msra.mxu0 0.0
        %2520 = vmatprep.subr.mxu0 0.0
        %2521 = vmatpush1.msra.mxu0 0.0
        %2522 = vmatprep.subr.mxu0 0.0
        %2523 = vmatpush1.msra.mxu0 0.0
        %2524 = vmatprep.subr.mxu0 0.0
        %2525 = vmatpush1.msra.mxu0 0.0
        %2526 = vmatprep.subr.mxu0 0.0
        %2527 = vmatpush1.msra.mxu0 0.0
        %2528 = vmatprep.subr.mxu0 0.0
        %2529 = vmatpush1.msra.mxu0 0.0
        %2530 = vmatprep.subr.mxu0 0.0
        %2531 = vmatpush1.msra.mxu0 0.0
        %2532 = vmatprep.subr.mxu0 0.0
        %2533 = vmatpush1.msra.mxu0 0.0
        %2534 = vmatprep.subr.mxu0 0.0
        %2535 = vmatpush1.msra.mxu0 0.0
        %2536 = vmatprep.subr.mxu0 0.0
        %2537 = vmatpush1.msra.mxu0 0.0
        %2538 = vmatprep.subr.mxu0 0.0
        %2539 = vmatpush1.msra.mxu0 0.0
        %2540 = vmatprep.subr.mxu0 0.0
        %2541 = vmatpush1.msra.mxu0 0.0
        %2542 = vmatprep.subr.mxu0 0.0
        %2543 = vmatpush1.msra.mxu0 0.0
        %2544 = vmatprep.subr.mxu0 0.0
        %2545 = vmatpush1.msra.mxu0 0.0
        %2546 = vmatprep.subr.mxu0 0.0
        %2547 = vmatpush1.msra.mxu0 %v2143
        %2548 = vmatprep.subr.mxu0 0.0
        %2549 = vmatpush2.msra.mxu0 0.0
        %2550 = vmatprep.subr.mxu0 0.0
        %2551 = vmatpush2.msra.mxu0 0.0
        %2552 = vmatprep.subr.mxu0 0.0
        %2553 = vmatpush2.msra.mxu0 0.0
        %2554 = vmatprep.subr.mxu0 0.0
        %2555 = vmatpush2.msra.mxu0 0.0
        %2556 = vmatprep.subr.mxu0 0.0
        %2557 = vmatpush2.msra.mxu0 0.0
        %2558 = vmatprep.subr.mxu0 0.0
        %2559 = vmatpush2.msra.mxu0 0.0
        %2560 = vmatprep.subr.mxu0 0.0
        %2561 = vmatpush2.msra.mxu0 0.0
        %2562 = vmatprep.subr.mxu0 0.0
        %2563 = vmatpush2.msra.mxu0 0.0
        %2564 = vmatprep.subr.mxu0 0.0
        %2565 = vmatpush2.msra.mxu0 0.0
        %2566 = vmatprep.subr.mxu0 0.0
        %2567 = vmatpush2.msra.mxu0 0.0
        %2568 = vmatprep.subr.mxu0 0.0
        %2569 = vmatpush2.msra.mxu0 0.0
        %2570 = vmatprep.subr.mxu0 0.0
        %2571 = vmatpush2.msra.mxu0 0.0
        %2572 = vmatprep.subr.mxu0 0.0
        %2573 = vmatpush2.msra.mxu0 0.0
        %2574 = vmatprep.subr.mxu0 0.0
        %2575 = vmatpush2.msra.mxu0 0.0
        %2576 = vmatprep.subr.mxu0 0.0
        %2577 = vmatpush2.msra.mxu0 0.0
        %2578 = vmatprep.subr.mxu0 0.0
        %2579 = vmatpush2.msra.mxu0 0.0
        %2580 = vmatprep.mubr.f32.mxu0 0.0
        %2581 = vmatmul.mubr.f32.gmra.mxu0 %v2514
        %v2582 = vpop.f32.mrf.mxu0
        %v2583 = vadd.f32 0.0, %v2582
        %v2584 = vpop.f32.mrf.mxu0
        %2585 = vdwg.mxu0
        %v2586 = vmul.f32 %v2268, 0.35355338
        %v2587 = vmul.f32 %v2373, 0.35355338
        %v2588 = vmul.f32 %v2478, 0.35355338
        %v2589 = vmul.f32 %v2583, 0.35355338
        %v2590 = vadd.f32 %v2586, %v1227
        %v2591 = vadd.f32 %v2587, %v1227
        %v2592 = vadd.f32 %v2588, %v1227
        %v2593 = vadd.f32 %v2589, %v1227
        %v2594 = vsel %vm830, %v2590, -inf
        %2595 = vmax.xlane.f32.xlu0 %v2594
        %v2596 = vpop.xlane.xlu0 %2595
        %v2597 = vsel %vm830, %v2591, -inf
        %2598 = vmax.xlane.f32.xlu0 %v2597
        %v2599 = vpop.xlane.xlu0 %2598
        %v2600 = vsel %vm830, %v2592, -inf
        %2601 = vmax.xlane.f32.xlu0 %v2600
        %v2602 = vpop.xlane.xlu0 %2601
        %v2603 = vsel %vm830, %v2593, -inf
        %2604 = vmax.xlane.f32.xlu0 %v2603
        %v2605 = vpop.xlane.xlu0 %2604
        %v2606 = vsub.f32 %v2590, %v2596
        %v2607 = vsub.f32 %v2591, %v2599
        %v2608 = vsub.f32 %v2592, %v2602
        %v2609 = vsub.f32 %v2593, %v2605
        %v2610 = vmul.f32 %v2606, 1.442695
        %v2611 = vpow.pop %v2610
        %v2612 = vmul.f32 %v2607, 1.442695
        %v2613 = vpow.pop %v2612
        %v2614 = vmul.f32 %v2608, 1.442695
        %v2615 = vpow.pop %v2614
        %v2616 = vmul.f32 %v2609, 1.442695
        %v2617 = vpow.pop %v2616
        %v2618 = vsel %vm830, %v2611, 0.0
        %2619 = vadd.xlane.f32.xlu0 %v2618
        %v2620 = vpop.xlane.xlu0 %2619
        %v2621 = vsel %vm830, %v2613, 0.0
        %2622 = vadd.xlane.f32.xlu0 %v2621
        %v2623 = vpop.xlane.xlu0 %2622
        %v2624 = vsel %vm830, %v2615, 0.0
        %2625 = vadd.xlane.f32.xlu0 %v2624
        %v2626 = vpop.xlane.xlu0 %2625
        %v2627 = vsel %vm830, %v2617, 0.0
        %2628 = vadd.xlane.f32.xlu0 %v2627
        %v2629 = vpop.xlane.xlu0 %2628
        %v2630 = vrcp.pop %v2620
        %v2631 = vmul.f32 %v2611, %v2630
        %v2632 = vrcp.pop %v2623
        %v2633 = vmul.f32 %v2613, %v2632
        %v2634 = vrcp.pop %v2626
        %v2635 = vmul.f32 %v2615, %v2634
        %v2636 = vrcp.pop %v2629
        %v2637 = vmul.f32 %v2617, %v2636
        %v2639 = vsel %vm830, %v2148, 0
        %v2642 = vsel %vm830, %v2631, 0
        %2644 = vmatprep.subr.mxu0 0.0
        %2645 = vmatpush1.xpose.msra.mxu0 0.0
        %2646 = vmatprep.subr.mxu0 0.0
        %2647 = vmatpush1.xpose.msra.mxu0 0.0
        %2648 = vmatprep.subr.mxu0 0.0
        %2649 = vmatpush1.xpose.msra.mxu0 0.0
        %2650 = vmatprep.subr.mxu0 0.0
        %2651 = vmatpush1.xpose.msra.mxu0 0.0
        %2652 = vmatprep.subr.mxu0 0.0
        %2653 = vmatpush1.xpose.msra.mxu0 0.0
        %2654 = vmatprep.subr.mxu0 0.0
        %2655 = vmatpush1.xpose.msra.mxu0 0.0
        %2656 = vmatprep.subr.mxu0 0.0
        %2657 = vmatpush1.xpose.msra.mxu0 0.0
        %2658 = vmatprep.subr.mxu0 0.0
        %2659 = vmatpush1.xpose.msra.mxu0 0.0
        %2660 = vmatprep.subr.mxu0 0.0
        %2661 = vmatpush1.xpose.msra.mxu0 0.0
        %2662 = vmatprep.subr.mxu0 0.0
        %2663 = vmatpush1.xpose.msra.mxu0 0.0
        %2664 = vmatprep.subr.mxu0 0.0
        %2665 = vmatpush1.xpose.msra.mxu0 0.0
        %2666 = vmatprep.subr.mxu0 0.0
        %2667 = vmatpush1.xpose.msra.mxu0 0.0
        %2668 = vmatprep.subr.mxu0 0.0
        %2669 = vmatpush1.xpose.msra.mxu0 0.0
        %2670 = vmatprep.subr.mxu0 0.0
        %2671 = vmatpush1.xpose.msra.mxu0 0.0
        %2672 = vmatprep.subr.mxu0 0.0
        %2673 = vmatpush1.xpose.msra.mxu0 0.0
        %2674 = vmatprep.subr.mxu0 0.0
        %2675 = vmatpush1.xpose.msra.mxu0 %v2642
        %2676 = vmatprep.subr.mxu0 0.0
        %2677 = vmatpush2.xpose.msra.mxu0 0.0
        %2678 = vmatprep.subr.mxu0 0.0
        %2679 = vmatpush2.xpose.msra.mxu0 0.0
        %2680 = vmatprep.subr.mxu0 0.0
        %2681 = vmatpush2.xpose.msra.mxu0 0.0
        %2682 = vmatprep.subr.mxu0 0.0
        %2683 = vmatpush2.xpose.msra.mxu0 0.0
        %2684 = vmatprep.subr.mxu0 0.0
        %2685 = vmatpush2.xpose.msra.mxu0 0.0
        %2686 = vmatprep.subr.mxu0 0.0
        %2687 = vmatpush2.xpose.msra.mxu0 0.0
        %2688 = vmatprep.subr.mxu0 0.0
        %2689 = vmatpush2.xpose.msra.mxu0 0.0
        %2690 = vmatprep.subr.mxu0 0.0
        %2691 = vmatpush2.xpose.msra.mxu0 0.0
        %2692 = vmatprep.subr.mxu0 0.0
        %2693 = vmatpush2.xpose.msra.mxu0 0.0
        %2694 = vmatprep.subr.mxu0 0.0
        %2695 = vmatpush2.xpose.msra.mxu0 0.0
        %2696 = vmatprep.subr.mxu0 0.0
        %2697 = vmatpush2.xpose.msra.mxu0 0.0
        %2698 = vmatprep.subr.mxu0 0.0
        %2699 = vmatpush2.xpose.msra.mxu0 0.0
        %2700 = vmatprep.subr.mxu0 0.0
        %2701 = vmatpush2.xpose.msra.mxu0 0.0
        %2702 = vmatprep.subr.mxu0 0.0
        %2703 = vmatpush2.xpose.msra.mxu0 0.0
        %2704 = vmatprep.subr.mxu0 0.0
        %2705 = vmatpush2.xpose.msra.mxu0 0.0
        %2706 = vmatprep.subr.mxu0 0.0
        %2707 = vmatpush2.xpose.msra.mxu0 0.0
        %2708 = vmatprep.mubr.f32.mxu0 0.0
        %2709 = vmatmul.mubr.f32.gmra.mxu0 %v2639
        %v2710 = vpop.f32.mrf.mxu0
        %v2711 = vadd.f32 0.0, %v2710
        %v2712 = vpop.f32.mrf.mxu0
        %2713 = vdwg.mxu0
        %v2715 = vsel %vm830, %v2153, 0
        %v2718 = vsel %vm830, %v2633, 0
        %2720 = vmatprep.subr.mxu0 0.0
        %2721 = vmatpush1.xpose.msra.mxu0 0.0
        %2722 = vmatprep.subr.mxu0 0.0
        %2723 = vmatpush1.xpose.msra.mxu0 0.0
        %2724 = vmatprep.subr.mxu0 0.0
        %2725 = vmatpush1.xpose.msra.mxu0 0.0
        %2726 = vmatprep.subr.mxu0 0.0
        %2727 = vmatpush1.xpose.msra.mxu0 0.0
        %2728 = vmatprep.subr.mxu0 0.0
        %2729 = vmatpush1.xpose.msra.mxu0 0.0
        %2730 = vmatprep.subr.mxu0 0.0
        %2731 = vmatpush1.xpose.msra.mxu0 0.0
        %2732 = vmatprep.subr.mxu0 0.0
        %2733 = vmatpush1.xpose.msra.mxu0 0.0
        %2734 = vmatprep.subr.mxu0 0.0
        %2735 = vmatpush1.xpose.msra.mxu0 0.0
        %2736 = vmatprep.subr.mxu0 0.0
        %2737 = vmatpush1.xpose.msra.mxu0 0.0
        %2738 = vmatprep.subr.mxu0 0.0
        %2739 = vmatpush1.xpose.msra.mxu0 0.0
        %2740 = vmatprep.subr.mxu0 0.0
        %2741 = vmatpush1.xpose.msra.mxu0 0.0
        %2742 = vmatprep.subr.mxu0 0.0
        %2743 = vmatpush1.xpose.msra.mxu0 0.0
        %2744 = vmatprep.subr.mxu0 0.0
        %2745 = vmatpush1.xpose.msra.mxu0 0.0
        %2746 = vmatprep.subr.mxu0 0.0
        %2747 = vmatpush1.xpose.msra.mxu0 0.0
        %2748 = vmatprep.subr.mxu0 0.0
        %2749 = vmatpush1.xpose.msra.mxu0 0.0
        %2750 = vmatprep.subr.mxu0 0.0
        %2751 = vmatpush1.xpose.msra.mxu0 %v2718
        %2752 = vmatprep.subr.mxu0 0.0
        %2753 = vmatpush2.xpose.msra.mxu0 0.0
        %2754 = vmatprep.subr.mxu0 0.0
        %2755 = vmatpush2.xpose.msra.mxu0 0.0
        %2756 = vmatprep.subr.mxu0 0.0
        %2757 = vmatpush2.xpose.msra.mxu0 0.0
        %2758 = vmatprep.subr.mxu0 0.0
        %2759 = vmatpush2.xpose.msra.mxu0 0.0
        %2760 = vmatprep.subr.mxu0 0.0
        %2761 = vmatpush2.xpose.msra.mxu0 0.0
        %2762 = vmatprep.subr.mxu0 0.0
        %2763 = vmatpush2.xpose.msra.mxu0 0.0
        %2764 = vmatprep.subr.mxu0 0.0
        %2765 = vmatpush2.xpose.msra.mxu0 0.0
        %2766 = vmatprep.subr.mxu0 0.0
        %2767 = vmatpush2.xpose.msra.mxu0 0.0
        %2768 = vmatprep.subr.mxu0 0.0
        %2769 = vmatpush2.xpose.msra.mxu0 0.0
        %2770 = vmatprep.subr.mxu0 0.0
        %2771 = vmatpush2.xpose.msra.mxu0 0.0
        %2772 = vmatprep.subr.mxu0 0.0
        %2773 = vmatpush2.xpose.msra.mxu0 0.0
        %2774 = vmatprep.subr.mxu0 0.0
        %2775 = vmatpush2.xpose.msra.mxu0 0.0
        %2776 = vmatprep.subr.mxu0 0.0
        %2777 = vmatpush2.xpose.msra.mxu0 0.0
        %2778 = vmatprep.subr.mxu0 0.0
        %2779 = vmatpush2.xpose.msra.mxu0 0.0
        %2780 = vmatprep.subr.mxu0 0.0
        %2781 = vmatpush2.xpose.msra.mxu0 0.0
        %2782 = vmatprep.subr.mxu0 0.0
        %2783 = vmatpush2.xpose.msra.mxu0 0.0
        %2784 = vmatprep.mubr.f32.mxu0 0.0
        %2785 = vmatmul.mubr.f32.gmra.mxu0 %v2715
        %v2786 = vpop.f32.mrf.mxu0
        %v2787 = vadd.f32 0.0, %v2786
        %v2788 = vpop.f32.mrf.mxu0
        %2789 = vdwg.mxu0
        %v2791 = vsel %vm830, %v2158, 0
        %v2794 = vsel %vm830, %v2635, 0
        %2796 = vmatprep.subr.mxu0 0.0
        %2797 = vmatpush1.xpose.msra.mxu0 0.0
        %2798 = vmatprep.subr.mxu0 0.0
        %2799 = vmatpush1.xpose.msra.mxu0 0.0
        %2800 = vmatprep.subr.mxu0 0.0
        %2801 = vmatpush1.xpose.msra.mxu0 0.0
        %2802 = vmatprep.subr.mxu0 0.0
        %2803 = vmatpush1.xpose.msra.mxu0 0.0
        %2804 = vmatprep.subr.mxu0 0.0
        %2805 = vmatpush1.xpose.msra.mxu0 0.0
        %2806 = vmatprep.subr.mxu0 0.0
        %2807 = vmatpush1.xpose.msra.mxu0 0.0
        %2808 = vmatprep.subr.mxu0 0.0
        %2809 = vmatpush1.xpose.msra.mxu0 0.0
        %2810 = vmatprep.subr.mxu0 0.0
        %2811 = vmatpush1.xpose.msra.mxu0 0.0
        %2812 = vmatprep.subr.mxu0 0.0
        %2813 = vmatpush1.xpose.msra.mxu0 0.0
        %2814 = vmatprep.subr.mxu0 0.0
        %2815 = vmatpush1.xpose.msra.mxu0 0.0
        %2816 = vmatprep.subr.mxu0 0.0
        %2817 = vmatpush1.xpose.msra.mxu0 0.0
        %2818 = vmatprep.subr.mxu0 0.0
        %2819 = vmatpush1.xpose.msra.mxu0 0.0
        %2820 = vmatprep.subr.mxu0 0.0
        %2821 = vmatpush1.xpose.msra.mxu0 0.0
        %2822 = vmatprep.subr.mxu0 0.0
        %2823 = vmatpush1.xpose.msra.mxu0 0.0
        %2824 = vmatprep.subr.mxu0 0.0
        %2825 = vmatpush1.xpose.msra.mxu0 0.0
        %2826 = vmatprep.subr.mxu0 0.0
        %2827 = vmatpush1.xpose.msra.mxu0 %v2794
        %2828 = vmatprep.subr.mxu0 0.0
        %2829 = vmatpush2.xpose.msra.mxu0 0.0
        %2830 = vmatprep.subr.mxu0 0.0
        %2831 = vmatpush2.xpose.msra.mxu0 0.0
        %2832 = vmatprep.subr.mxu0 0.0
        %2833 = vmatpush2.xpose.msra.mxu0 0.0
        %2834 = vmatprep.subr.mxu0 0.0
        %2835 = vmatpush2.xpose.msra.mxu0 0.0
        %2836 = vmatprep.subr.mxu0 0.0
        %2837 = vmatpush2.xpose.msra.mxu0 0.0
        %2838 = vmatprep.subr.mxu0 0.0
        %2839 = vmatpush2.xpose.msra.mxu0 0.0
        %2840 = vmatprep.subr.mxu0 0.0
        %2841 = vmatpush2.xpose.msra.mxu0 0.0
        %2842 = vmatprep.subr.mxu0 0.0
        %2843 = vmatpush2.xpose.msra.mxu0 0.0
        %2844 = vmatprep.subr.mxu0 0.0
        %2845 = vmatpush2.xpose.msra.mxu0 0.0
        %2846 = vmatprep.subr.mxu0 0.0
        %2847 = vmatpush2.xpose.msra.mxu0 0.0
        %2848 = vmatprep.subr.mxu0 0.0
        %2849 = vmatpush2.xpose.msra.mxu0 0.0
        %2850 = vmatprep.subr.mxu0 0.0
        %2851 = vmatpush2.xpose.msra.mxu0 0.0
        %2852 = vmatprep.subr.mxu0 0.0
        %2853 = vmatpush2.xpose.msra.mxu0 0.0
        %2854 = vmatprep.subr.mxu0 0.0
        %2855 = vmatpush2.xpose.msra.mxu0 0.0
        %2856 = vmatprep.subr.mxu0 0.0
        %2857 = vmatpush2.xpose.msra.mxu0 0.0
        %2858 = vmatprep.subr.mxu0 0.0
        %2859 = vmatpush2.xpose.msra.mxu0 0.0
        %2860 = vmatprep.mubr.f32.mxu0 0.0
        %2861 = vmatmul.mubr.f32.gmra.mxu0 %v2791
        %v2862 = vpop.f32.mrf.mxu0
        %v2863 = vadd.f32 0.0, %v2862
        %v2864 = vpop.f32.mrf.mxu0
        %2865 = vdwg.mxu0
        %v2867 = vsel %vm830, %v2163, 0
        %v2870 = vsel %vm830, %v2637, 0
        %2872 = vmatprep.subr.mxu0 0.0
        %2873 = vmatpush1.xpose.msra.mxu0 0.0
        %2874 = vmatprep.subr.mxu0 0.0
        %2875 = vmatpush1.xpose.msra.mxu0 0.0
        %2876 = vmatprep.subr.mxu0 0.0
        %2877 = vmatpush1.xpose.msra.mxu0 0.0
        %2878 = vmatprep.subr.mxu0 0.0
        %2879 = vmatpush1.xpose.msra.mxu0 0.0
        %2880 = vmatprep.subr.mxu0 0.0
        %2881 = vmatpush1.xpose.msra.mxu0 0.0
        %2882 = vmatprep.subr.mxu0 0.0
        %2883 = vmatpush1.xpose.msra.mxu0 0.0
        %2884 = vmatprep.subr.mxu0 0.0
        %2885 = vmatpush1.xpose.msra.mxu0 0.0
        %2886 = vmatprep.subr.mxu0 0.0
        %2887 = vmatpush1.xpose.msra.mxu0 0.0
        %2888 = vmatprep.subr.mxu0 0.0
        %2889 = vmatpush1.xpose.msra.mxu0 0.0
        %2890 = vmatprep.subr.mxu0 0.0
        %2891 = vmatpush1.xpose.msra.mxu0 0.0
        %2892 = vmatprep.subr.mxu0 0.0
        %2893 = vmatpush1.xpose.msra.mxu0 0.0
        %2894 = vmatprep.subr.mxu0 0.0
        %2895 = vmatpush1.xpose.msra.mxu0 0.0
        %2896 = vmatprep.subr.mxu0 0.0
        %2897 = vmatpush1.xpose.msra.mxu0 0.0
        %2898 = vmatprep.subr.mxu0 0.0
        %2899 = vmatpush1.xpose.msra.mxu0 0.0
        %2900 = vmatprep.subr.mxu0 0.0
        %2901 = vmatpush1.xpose.msra.mxu0 0.0
        %2902 = vmatprep.subr.mxu0 0.0
        %2903 = vmatpush1.xpose.msra.mxu0 %v2870
        %2904 = vmatprep.subr.mxu0 0.0
        %2905 = vmatpush2.xpose.msra.mxu0 0.0
        %2906 = vmatprep.subr.mxu0 0.0
        %2907 = vmatpush2.xpose.msra.mxu0 0.0
        %2908 = vmatprep.subr.mxu0 0.0
        %2909 = vmatpush2.xpose.msra.mxu0 0.0
        %2910 = vmatprep.subr.mxu0 0.0
        %2911 = vmatpush2.xpose.msra.mxu0 0.0
        %2912 = vmatprep.subr.mxu0 0.0
        %2913 = vmatpush2.xpose.msra.mxu0 0.0
        %2914 = vmatprep.subr.mxu0 0.0
        %2915 = vmatpush2.xpose.msra.mxu0 0.0
        %2916 = vmatprep.subr.mxu0 0.0
        %2917 = vmatpush2.xpose.msra.mxu0 0.0
        %2918 = vmatprep.subr.mxu0 0.0
        %2919 = vmatpush2.xpose.msra.mxu0 0.0
        %2920 = vmatprep.subr.mxu0 0.0
        %2921 = vmatpush2.xpose.msra.mxu0 0.0
        %2922 = vmatprep.subr.mxu0 0.0
        %2923 = vmatpush2.xpose.msra.mxu0 0.0
        %2924 = vmatprep.subr.mxu0 0.0
        %2925 = vmatpush2.xpose.msra.mxu0 0.0
        %2926 = vmatprep.subr.mxu0 0.0
        %2927 = vmatpush2.xpose.msra.mxu0 0.0
        %2928 = vmatprep.subr.mxu0 0.0
        %2929 = vmatpush2.xpose.msra.mxu0 0.0
        %2930 = vmatprep.subr.mxu0 0.0
        %2931 = vmatpush2.xpose.msra.mxu0 0.0
        %2932 = vmatprep.subr.mxu0 0.0
        %2933 = vmatpush2.xpose.msra.mxu0 0.0
        %2934 = vmatprep.subr.mxu0 0.0
        %2935 = vmatpush2.xpose.msra.mxu0 0.0
        %2936 = vmatprep.mubr.f32.mxu0 0.0
        %2937 = vmatmul.mubr.f32.gmra.mxu0 %v2867
        %v2938 = vpop.f32.mrf.mxu0
        %v2939 = vadd.f32 0.0, %v2938
        %v2940 = vpop.f32.mrf.mxu0
        %2941 = vdwg.mxu0
        %s2942 = scalar_lea.vmem %s6, 32
        %v2943 = vld [vmem:[%s2942] sm:$0xff]
        %v2944 = vld [vmem:[%s2942 + $0x8] sm:$0xff]
        %v2945 = vld [vmem:[%s2942 + $0x10] sm:$0xff]
        %v2946 = vld [vmem:[%s2942 + $0x18] sm:$0xff]
        %2947 = vxpose.xlu0.b32.start [1/16] %v2711, 128
        %2948 = vxpose.xlu0.b32.cont [2/16] %v2787, 128
        %2949 = vxpose.xlu0.b32.cont [3/16] %v2863, 128
        %2950 = vxpose.xlu0.b32.cont [4/16] %v2939, 128
        %2951 = vxpose.xlu0.b32.cont [5/16] 0.0, 128
        %2952 = vxpose.xlu0.b32.cont [6/16] 0.0, 128
        %2953 = vxpose.xlu0.b32.cont [7/16] 0.0, 128
        %2954 = vxpose.xlu0.b32.cont [8/16] 0.0, 128
        %2955 = vxpose.xlu0.b32.cont [9/16] 0.0, 128
        %2956 = vxpose.xlu0.b32.cont [10/16] 0.0, 128
        %2957 = vxpose.xlu0.b32.cont [11/16] 0.0, 128
        %2958 = vxpose.xlu0.b32.cont [12/16] 0.0, 128
        %2959 = vxpose.xlu0.b32.cont [13/16] 0.0, 128
        %2960 = vxpose.xlu0.b32.cont [14/16] 0.0, 128
        %2961 = vxpose.xlu0.b32.cont [15/16] 0.0, 128
        %2962 = vxpose.xlu0.b32.end [16/16] 0.0, 128
        %v2963 = vpop.trf.xlu0
        %v2964 = vpop.trf.xlu0
        %v2965 = vpop.trf.xlu0
        %v2966 = vpop.trf.xlu0
        %v2967 = vpop.trf.xlu0
        %v2968 = vpop.trf.xlu0
        %v2969 = vpop.trf.xlu0
        %v2970 = vpop.trf.xlu0
        %v2971 = vpop.trf.xlu0
        %v2972 = vpop.trf.xlu0
        %v2973 = vpop.trf.xlu0
        %v2974 = vpop.trf.xlu0
        %v2975 = vpop.trf.xlu0
        %v2976 = vpop.trf.xlu0
        %v2977 = vpop.trf.xlu0
        %v2978 = vpop.trf.xlu0
        %v2980 = vsel %vm525, %v2963, 0
        %2982 = vmatprep.subr.mxu0 0.0
        %2983 = vmatpush1.msra.mxu0 0.0
        %2984 = vmatprep.subr.mxu0 0.0
        %2985 = vmatpush1.msra.mxu0 0.0
        %2986 = vmatprep.subr.mxu0 0.0
        %2987 = vmatpush1.msra.mxu0 0.0
        %2988 = vmatprep.subr.mxu0 0.0
        %2989 = vmatpush1.msra.mxu0 0.0
        %2990 = vmatprep.subr.mxu0 0.0
        %2991 = vmatpush1.msra.mxu0 0.0
        %2992 = vmatprep.subr.mxu0 0.0
        %2993 = vmatpush1.msra.mxu0 0.0
        %2994 = vmatprep.subr.mxu0 0.0
        %2995 = vmatpush1.msra.mxu0 0.0
        %2996 = vmatprep.subr.mxu0 0.0
        %2997 = vmatpush1.msra.mxu0 0.0
        %2998 = vmatprep.subr.mxu0 0.0
        %2999 = vmatpush1.msra.mxu0 0.0
        %3000 = vmatprep.subr.mxu0 0.0
        %3001 = vmatpush1.msra.mxu0 0.0
        %3002 = vmatprep.subr.mxu0 0.0
        %3003 = vmatpush1.msra.mxu0 0.0
        %3004 = vmatprep.subr.mxu0 0.0
        %3005 = vmatpush1.msra.mxu0 0.0
        %3006 = vmatprep.subr.mxu0 0.0
        %3007 = vmatpush1.msra.mxu0 %v2946
        %3008 = vmatprep.subr.mxu0 0.0
        %3009 = vmatpush1.msra.mxu0 %v2945
        %3010 = vmatprep.subr.mxu0 0.0
        %3011 = vmatpush1.msra.mxu0 %v2944
        %3012 = vmatprep.subr.mxu0 0.0
        %3013 = vmatpush1.msra.mxu0 %v2943
        %3014 = vmatprep.subr.mxu0 0.0
        %3015 = vmatpush2.msra.mxu0 0.0
        %3016 = vmatprep.subr.mxu0 0.0
        %3017 = vmatpush2.msra.mxu0 0.0
        %3018 = vmatprep.subr.mxu0 0.0
        %3019 = vmatpush2.msra.mxu0 0.0
        %3020 = vmatprep.subr.mxu0 0.0
        %3021 = vmatpush2.msra.mxu0 0.0
        %3022 = vmatprep.subr.mxu0 0.0
        %3023 = vmatpush2.msra.mxu0 0.0
        %3024 = vmatprep.subr.mxu0 0.0
        %3025 = vmatpush2.msra.mxu0 0.0
        %3026 = vmatprep.subr.mxu0 0.0
        %3027 = vmatpush2.msra.mxu0 0.0
        %3028 = vmatprep.subr.mxu0 0.0
        %3029 = vmatpush2.msra.mxu0 0.0
        %3030 = vmatprep.subr.mxu0 0.0
        %3031 = vmatpush2.msra.mxu0 0.0
        %3032 = vmatprep.subr.mxu0 0.0
        %3033 = vmatpush2.msra.mxu0 0.0
        %3034 = vmatprep.subr.mxu0 0.0
        %3035 = vmatpush2.msra.mxu0 0.0
        %3036 = vmatprep.subr.mxu0 0.0
        %3037 = vmatpush2.msra.mxu0 0.0
        %3038 = vmatprep.subr.mxu0 0.0
        %3039 = vmatpush2.msra.mxu0 0.0
        %3040 = vmatprep.subr.mxu0 0.0
        %3041 = vmatpush2.msra.mxu0 0.0
        %3042 = vmatprep.subr.mxu0 0.0
        %3043 = vmatpush2.msra.mxu0 0.0
        %3044 = vmatprep.subr.mxu0 0.0
        %3045 = vmatpush2.msra.mxu0 0.0
        %3046 = vmatprep.mubr.f32.mxu0 0.0
        %3047 = vmatmul.mubr.f32.gmra.mxu0 %v2980
        %v3048 = vpop.f32.mrf.mxu0
        %v3049 = vadd.f32 0.0, %v3048
        %v3050 = vpop.f32.mrf.mxu0
        %3051 = vdwg.mxu0
        %v3052 = vadd.f32 %v1890, %v3049
        %v3053 = vlaneseq
        %v3054 = vshrl.u32 %v3053, 7
        %v3055 = vsub.s32 4, %v3054
        %v3056 = vrot.slane %v1892, %v3055
        %v3057 = vadd.f32 %v3052, %v3056
        %v3058 = vsel %vm525, %v3057, 0.0
        %3059 = vadd.xlane.f32.xlu0 %v3058
        %v3060 = vpop.xlane.xlu0 %3059
        %v3061 = vmul.f32 %v3060, %v529
        %v3062 = vsub.f32 %v3057, %v3061
        %v3063 = vmul.f32 %v3062, %v3062
        %v3064 = vsel %vm525, %v3063, 0.0
        %3065 = vadd.xlane.f32.xlu0 %v3064
        %v3066 = vpop.xlane.xlu0 %3065
        %v3067 = vmul.f32 %v3066, %v529
        %v3068 = vadd.f32 %v3067, 1e-06
        %v3069 = vrsqrt.pop %v3068
        %v3070 = vmul.f32 %v3062, %v3069
        %v3071 = vlaneseq
        %v3072 = vshrl.u32 %v3071, 7
        %v3073 = vsub.s32 2, %v3072
        %v3074 = vrot.slane %v1892, %v3073
        %v3075 = vmul.f32 %v3070, %v3074
        %v3076 = vlaneseq
        %v3077 = vshrl.u32 %v3076, 7
        %v3078 = vsub.s32 3, %v3077
        %v3079 = vrot.slane %v1892, %v3078
        %v3080 = vadd.f32 %v3075, %v3079
        %s3081 = scalar_lea.vmem %s7, 32
        %v3082 = vld [vmem:[%s3081] sm:$0xff]
        %v3083 = vld [vmem:[%s3081 + $0x8] sm:$0xff]
        %v3084 = vld [vmem:[%s3081 + $0x10] sm:$0xff]
        %v3085 = vld [vmem:[%s3081 + $0x18] sm:$0xff]
        %s3086 = scalar_lea.vmem %s8, 1
        %v3087 = vld [vmem:[%s3086] sm:$0x1]
        %v3089 = vlaneseq
        %v3090 = vshrl.u32 %v3089, 7
        %v3091 = vsub.s32 0, %v3090
        %v3092 = vrot.slane %v3087, %v3091
        %v3095 = vsel %vm525, %v3080, 0
        %3097 = vmatprep.subr.mxu0 0.0
        %3098 = vmatpush1.msra.mxu0 0.0
        %3099 = vmatprep.subr.mxu0 0.0
        %3100 = vmatpush1.msra.mxu0 0.0
        %3101 = vmatprep.subr.mxu0 0.0
        %3102 = vmatpush1.msra.mxu0 0.0
        %3103 = vmatprep.subr.mxu0 0.0
        %3104 = vmatpush1.msra.mxu0 0.0
        %3105 = vmatprep.subr.mxu0 0.0
        %3106 = vmatpush1.msra.mxu0 0.0
        %3107 = vmatprep.subr.mxu0 0.0
        %3108 = vmatpush1.msra.mxu0 0.0
        %3109 = vmatprep.subr.mxu0 0.0
        %3110 = vmatpush1.msra.mxu0 0.0
        %3111 = vmatprep.subr.mxu0 0.0
        %3112 = vmatpush1.msra.mxu0 0.0
        %3113 = vmatprep.subr.mxu0 0.0
        %3114 = vmatpush1.msra.mxu0 0.0
        %3115 = vmatprep.subr.mxu0 0.0
        %3116 = vmatpush1.msra.mxu0 0.0
        %3117 = vmatprep.subr.mxu0 0.0
        %3118 = vmatpush1.msra.mxu0 0.0
        %3119 = vmatprep.subr.mxu0 0.0
        %3120 = vmatpush1.msra.mxu0 0.0
        %3121 = vmatprep.subr.mxu0 0.0
        %3122 = vmatpush1.msra.mxu0 %v3085
        %3123 = vmatprep.subr.mxu0 0.0
        %3124 = vmatpush1.msra.mxu0 %v3084
        %3125 = vmatprep.subr.mxu0 0.0
        %3126 = vmatpush1.msra.mxu0 %v3083
        %3127 = vmatprep.subr.mxu0 0.0
        %3128 = vmatpush1.msra.mxu0 %v3082
        %3129 = vmatprep.subr.mxu0 0.0
        %3130 = vmatpush2.msra.mxu0 0.0
        %3131 = vmatprep.subr.mxu0 0.0
        %3132 = vmatpush2.msra.mxu0 0.0
        %3133 = vmatprep.subr.mxu0 0.0
        %3134 = vmatpush2.msra.mxu0 0.0
        %3135 = vmatprep.subr.mxu0 0.0
        %3136 = vmatpush2.msra.mxu0 0.0
        %3137 = vmatprep.subr.mxu0 0.0
        %3138 = vmatpush2.msra.mxu0 0.0
        %3139 = vmatprep.subr.mxu0 0.0
        %3140 = vmatpush2.msra.mxu0 0.0
        %3141 = vmatprep.subr.mxu0 0.0
        %3142 = vmatpush2.msra.mxu0 0.0
        %3143 = vmatprep.subr.mxu0 0.0
        %3144 = vmatpush2.msra.mxu0 0.0
        %3145 = vmatprep.subr.mxu0 0.0
        %3146 = vmatpush2.msra.mxu0 0.0
        %3147 = vmatprep.subr.mxu0 0.0
        %3148 = vmatpush2.msra.mxu0 0.0
        %3149 = vmatprep.subr.mxu0 0.0
        %3150 = vmatpush2.msra.mxu0 0.0
        %3151 = vmatprep.subr.mxu0 0.0
        %3152 = vmatpush2.msra.mxu0 0.0
        %3153 = vmatprep.subr.mxu0 0.0
        %3154 = vmatpush2.msra.mxu0 0.0
        %3155 = vmatprep.subr.mxu0 0.0
        %3156 = vmatpush2.msra.mxu0 0.0
        %3157 = vmatprep.subr.mxu0 0.0
        %3158 = vmatpush2.msra.mxu0 0.0
        %3159 = vmatprep.subr.mxu0 0.0
        %3160 = vmatpush2.msra.mxu0 0.0
        %3161 = vmatprep.mubr.f32.mxu0 0.0
        %3162 = vmatmul.mubr.f32.gmra.mxu0 %v3095
        %v3163 = vpop.f32.mrf.mxu0
        %v3164 = vadd.f32 %v3092, %v3163
        %v3165 = vpop.f32.mrf.mxu0
        %3166 = vdwg.mxu0
        %v3167 = vmax.f32 %v3164, 0.0
        %s3168 = scalar_lea.vmem %s9, 64
        %v3169 = vld [vmem:[%s3168] sm:$0xff]
        %v3170 = vld [vmem:[%s3168 + $0x8] sm:$0xff]
        %v3171 = vld [vmem:[%s3168 + $0x10] sm:$0xff]
        %v3172 = vld [vmem:[%s3168 + $0x18] sm:$0xff]
        %v3173 = vld [vmem:[%s3168 + $0x20] sm:$0xff]
        %v3174 = vld [vmem:[%s3168 + $0x28] sm:$0xff]
        %v3175 = vld [vmem:[%s3168 + $0x30] sm:$0xff]
        %v3176 = vld [vmem:[%s3168 + $0x38] sm:$0xff]
        %v3177 = vlaneseq
        %v3178 = vshrl.u32 %v3177, 7
        %v3179 = vsub.s32 5, %v3178
        %v3180 = vrot.slane %v1892, %v3179
        %v3182 = vsel %vm1816, %v3167, 0
        %3184 = vmatprep.subr.mxu0 0.0
        %3185 = vmatpush1.msra.mxu0 0.0
        %3186 = vmatprep.subr.mxu0 0.0
        %3187 = vmatpush1.msra.mxu0 0.0
        %3188 = vmatprep.subr.mxu0 0.0
        %3189 = vmatpush1.msra.mxu0 0.0
        %3190 = vmatprep.subr.mxu0 0.0
        %3191 = vmatpush1.msra.mxu0 0.0
        %3192 = vmatprep.subr.mxu0 0.0
        %3193 = vmatpush1.msra.mxu0 0.0
        %3194 = vmatprep.subr.mxu0 0.0
        %3195 = vmatpush1.msra.mxu0 0.0
        %3196 = vmatprep.subr.mxu0 0.0
        %3197 = vmatpush1.msra.mxu0 0.0
        %3198 = vmatprep.subr.mxu0 0.0
        %3199 = vmatpush1.msra.mxu0 0.0
        %3200 = vmatprep.subr.mxu0 0.0
        %3201 = vmatpush1.msra.mxu0 %v3176
        %3202 = vmatprep.subr.mxu0 0.0
        %3203 = vmatpush1.msra.mxu0 %v3175
        %3204 = vmatprep.subr.mxu0 0.0
        %3205 = vmatpush1.msra.mxu0 %v3174
        %3206 = vmatprep.subr.mxu0 0.0
        %3207 = vmatpush1.msra.mxu0 %v3173
        %3208 = vmatprep.subr.mxu0 0.0
        %3209 = vmatpush1.msra.mxu0 %v3172
        %3210 = vmatprep.subr.mxu0 0.0
        %3211 = vmatpush1.msra.mxu0 %v3171
        %3212 = vmatprep.subr.mxu0 0.0
        %3213 = vmatpush1.msra.mxu0 %v3170
        %3214 = vmatprep.subr.mxu0 0.0
        %3215 = vmatpush1.msra.mxu0 %v3169
        %3216 = vmatprep.subr.mxu0 0.0
        %3217 = vmatpush2.msra.mxu0 0.0
        %3218 = vmatprep.subr.mxu0 0.0
        %3219 = vmatpush2.msra.mxu0 0.0
        %3220 = vmatprep.subr.mxu0 0.0
        %3221 = vmatpush2.msra.mxu0 0.0
        %3222 = vmatprep.subr.mxu0 0.0
        %3223 = vmatpush2.msra.mxu0 0.0
        %3224 = vmatprep.subr.mxu0 0.0
        %3225 = vmatpush2.msra.mxu0 0.0
        %3226 = vmatprep.subr.mxu0 0.0
        %3227 = vmatpush2.msra.mxu0 0.0
        %3228 = vmatprep.subr.mxu0 0.0
        %3229 = vmatpush2.msra.mxu0 0.0
        %3230 = vmatprep.subr.mxu0 0.0
        %3231 = vmatpush2.msra.mxu0 0.0
        %3232 = vmatprep.subr.mxu0 0.0
        %3233 = vmatpush2.msra.mxu0 0.0
        %3234 = vmatprep.subr.mxu0 0.0
        %3235 = vmatpush2.msra.mxu0 0.0
        %3236 = vmatprep.subr.mxu0 0.0
        %3237 = vmatpush2.msra.mxu0 0.0
        %3238 = vmatprep.subr.mxu0 0.0
        %3239 = vmatpush2.msra.mxu0 0.0
        %3240 = vmatprep.subr.mxu0 0.0
        %3241 = vmatpush2.msra.mxu0 0.0
        %3242 = vmatprep.subr.mxu0 0.0
        %3243 = vmatpush2.msra.mxu0 0.0
        %3244 = vmatprep.subr.mxu0 0.0
        %3245 = vmatpush2.msra.mxu0 0.0
        %3246 = vmatprep.subr.mxu0 0.0
        %3247 = vmatpush2.msra.mxu0 0.0
        %3248 = vmatprep.mubr.f32.mxu0 0.0
        %3249 = vmatmul.mubr.f32.gmra.mxu0 %v3182
        %v3250 = vpop.f32.mrf.mxu0
        %v3251 = vadd.f32 %v3180, %v3250
        %v3252 = vpop.f32.mrf.mxu0
        %3253 = vdwg.mxu0
        %v3254 = vadd.f32 %v3057, %v3251
        %v3255 = vld [vmem:[%s11] sm:$0x1]
        %v3256 = vld [vmem:[%s11 + $0x1] sm:$0x1]
        %v3257 = vsel %vm525, %v3254, 0.0
        %3258 = vadd.xlane.f32.xlu0 %v3257
        %v3259 = vpop.xlane.xlu0 %3258
        %v3260 = vmul.f32 %v3259, %v529
        %v3261 = vsub.f32 %v3254, %v3260
        %v3262 = vmul.f32 %v3261, %v3261
        %v3263 = vsel %vm525, %v3262, 0.0
        %3264 = vadd.xlane.f32.xlu0 %v3263
        %v3265 = vpop.xlane.xlu0 %3264
        %v3266 = vmul.f32 %v3265, %v529
        %v3267 = vadd.f32 %v3266, 1e-06
        %v3268 = vrsqrt.pop %v3267
        %v3269 = vmul.f32 %v3261, %v3268
        %v3270 = vlaneseq
        %v3271 = vshrl.u32 %v3270, 7
        %v3272 = vsub.s32 0, %v3271
        %v3273 = vrot.slane %v3255, %v3272
        %v3274 = vmul.f32 %v3269, %v3273
        %v3275 = vlaneseq
        %v3276 = vshrl.u32 %v3275, 7
        %v3277 = vsub.s32 0, %v3276
        %v3278 = vrot.slane %v3256, %v3277
        %v3279 = vadd.f32 %v3274, %v3278
        %3280 = vst.msk [vmem:[%s415] sm:$0xff] %vm525, %v3279
        %s3281 = sand.u32 %s296, 1
        %s3282 = scalar_lea.sflag [#allocation3], %s3281
        %s3283 = sand.u32 %s296, 1
        %s3284 = smul.addr %s3283, 8
        %s3285 = scalar_lea.vmem [#allocation2], %s3284
        // Predicated region
        $region69: #{encoder_forward.1} parent=67 // pred_check
          %p3286 = pneg %p306
        $region70: #{encoder_forward.1} parent=67 // pred_check_branch
          %3288 = sbr.rel (%p3286) target = $region72
        $region71: #{encoder_forward.1} parent=67 // pred_region
          %s3290 = ssub.s32 128, 128
          %3291 = vsyncadd %s3282, %s3290
          %s3292 = smul.addr %s26, 128
          %s3293 = scalar_lea.hbm %s12, %s3292
          %s3295 = sshll.u32 %s3285, 4
          %s3296 = int_to_ptr.vmem [resolvable:$true] %s3295
          %3298 = dma.vmem_to_hbm [thread:$0]  %s3296, 128, %s3293, %s3282
        $region72: #{encoder_forward.1} parent=67 // pred_fallthru
          _
      $region68: #{encoder_forward.1} parent=5 // pred_fallthru
        _
      %p3299 = scmp.le.s32.totalorder 2, %s21
      // Predicated region
      $region73: #{encoder_forward.1} parent=5 // pred_check
        %p3300 = pneg %p3299
      $region74: #{encoder_forward.1} parent=5 // pred_check_branch
        %3302 = sbr.rel (%p3300) target = $region76
      $region75: #{encoder_forward.1} parent=5 // pred_region
        %s3303 = ssub.s32 %s21, 2
        // Predicated region
        $region77: #{encoder_forward.1} parent=75 // pred_check
          %p3304 = pneg %p312
        $region78: #{encoder_forward.1} parent=75 // pred_check_branch
          %3306 = sbr.rel (%p3304) target = $region80
        $region79: #{encoder_forward.1} parent=75 // pred_region
          %s3307 = sand.u32 %s297, 1
          %s3308 = scalar_lea.sflag [#allocation3], %s3307
          %s3309 = sand.u32 %s297, 1
          %s3310 = smul.addr %s3309, 8
          %s3311 = scalar_lea.vmem [#allocation2], %s3310
          %3312 = dma.done %s3308, 128
        $region80: #{encoder_forward.1} parent=75 // pred_fallthru
          _
      $region76: #{encoder_forward.1} parent=5 // pred_fallthru
        _
    $region6: #{encoder_forward.1} parent=1 // loop_footer
      %s25 = sadd.s32 1, %s21
    $region7: #{encoder_forward.1} parent=1 // loop_footer_branch
      %20 = sbr.rel target = $region3
    $region8: #{encoder_forward.1} parent=1 // loop_exit
      _
    %3313 = vsyncpa [#allocation3], 1
    %s3314 = scalar_lea.sflag [#allocation3], 1
    %3315 = vsyncpa %s3314, 1

</llo_original>
